<compile_context>
chip_gen: v7x
topology: tpu7x:2x2x1
jax: 0.10.0
libtpu: 0.0.40
codegen_flags: <defaults>
</compile_context>

<pallas_src>
import math
import functools

import jax
import jax.numpy as jnp
from jax.experimental import pallas as pl
from jax.experimental.pallas import tpu as pltpu

EPS = float(jnp.finfo(jnp.float32).eps)  # F.rms_norm default eps for float32


def _default_vmem_limit():
    """~80% of physical per-core VMEM, capped; safe fallback if query fails."""
    fallback = 48 * 1024 * 1024
    try:
        info = pltpu.get_tpu_info()
    except Exception:
        return fallback
    cap = getattr(info, "vmem_capacity_bytes", None) or getattr(info, "vmem_size_bytes", None)
    if not cap:
        return fallback
    return min(int(cap * 0.8), 112 * 1024 * 1024)


_VMEM_LIMIT = _default_vmem_limit()


# ----------------------------------------------------------------------------
# tile pickers (guarantee grid divisibility; fall back to full dim when small)
# ----------------------------------------------------------------------------
def _pick_row_tile(n, max_tile=256):
    """Largest row tile <= max_tile that divides n and is a multiple of 8."""
    if n <= 8:
        return n
    cap = min(max_tile, n)
    t = cap - (cap % 8)
    while t >= 8:
        if n % t == 0:
            return t
        t -= 8
    return n  # no 8-multiple divisor -> use the full dim (still a legal block)


def _pick_col_tile(n, max_tile=1024):
    """Largest column tile <= max_tile that divides n and is a multiple of 128
    (falls back to the full dim when n is small / not 128-divisible)."""
    if n <= max_tile:
        return n
    t = max_tile - (max_tile % 128)
    while t >= 128:
        if n % t == 0:
            return t
        t -= 128
    return n


# ----------------------------------------------------------------------------
# Kernel 1: fused RMSNorm + matmul      y = rmsnorm(x) @ w      (w: (D, O))
#   grid: (output-column tiles OUTER, row tiles INNER) -> weight block resident
#   across the row sweep: the full weight streams from HBM exactly once.
# ----------------------------------------------------------------------------
def _rmsnorm_matmul_kernel(x_ref, w_ref, o_ref):
    x = x_ref[...].astype(jnp.float32)
    xn = x * jax.lax.rsqrt(jnp.mean(x * x, axis=-1, keepdims=True) + EPS)
    o_ref[...] = jnp.dot(xn.astype(w_ref.dtype), w_ref[...],
                         preferred_element_type=jnp.float32).astype(o_ref.dtype)


def rmsnorm_matmul(x, w):
    B, D = x.shape
    _, O = w.shape
    tr = _pick_row_tile(B)
    tc = _pick_col_tile(O)
    assert B % tr == 0 and O % tc == 0
    return pl.pallas_call(
        _rmsnorm_matmul_kernel,
        out_shape=jax.ShapeDtypeStruct((B, O), x.dtype),
        grid=(O // tc, B // tr),                       # cols outer, rows inner
        in_specs=[pl.BlockSpec((tr, D), lambda j, i: (i, 0)),
                  pl.BlockSpec((D, tc), lambda j, i: (0, j))],   # resident over i
        out_specs=pl.BlockSpec((tr, tc), lambda j, i: (i, j)),
        compiler_params=pltpu.CompilerParams(
            dimension_semantics=("parallel", "arbitrary"),
            vmem_limit_bytes=_VMEM_LIMIT),
    )(x, w)


# ----------------------------------------------------------------------------
# Kernel 2: matmul + residual add       y = res + x @ w
#   (o_proj; its per-output-channel `scale` is folded into w in the wrapper)
#   residual input is aliased to the output buffer; same weight-resident grid
#   order as kernel 1.
# ----------------------------------------------------------------------------
def _matmul_residual_kernel(x_ref, w_ref, r_ref, o_ref):
    y = jnp.dot(x_ref[...].astype(w_ref.dtype), w_ref[...],
                preferred_element_type=jnp.float32)
    o_ref[...] = (r_ref[...].astype(jnp.float32) + y).astype(o_ref.dtype)


def matmul_residual(x, w, res):
    B, D = x.shape
    _, O = w.shape
    tr = _pick_row_tile(B)
    tc = _pick_col_tile(O)
    assert B % tr == 0 and O % tc == 0
    return pl.pallas_call(
        _matmul_residual_kernel,
        out_shape=jax.ShapeDtypeStruct((B, O), res.dtype),
        grid=(O // tc, B // tr),                       # cols outer, rows inner
        in_specs=[pl.BlockSpec((tr, D), lambda j, i: (i, 0)),
                  pl.BlockSpec((D, tc), lambda j, i: (0, j)),    # resident over i
                  pl.BlockSpec((tr, tc), lambda j, i: (i, j))],
        out_specs=pl.BlockSpec((tr, tc), lambda j, i: (i, j)),
        input_output_aliases={2: 0},
        compiler_params=pltpu.CompilerParams(
            dimension_semantics=("parallel", "arbitrary"),
            vmem_limit_bytes=_VMEM_LIMIT),
    )(x, w, res)


# ----------------------------------------------------------------------------
# Kernel 3: fused MLP block   y = x + relu(rmsnorm(x) @ w1)^2 @ w2
#   hidden (M) dim chunked over a reduction grid axis (kept INNER — required
#   for the f32 accumulator and the x<->out alias).  RMSNorm hoisted: computed
#   once per row tile at j==0 into a VMEM scratch in the MXU input dtype.
# ----------------------------------------------------------------------------
def _mlp_kernel(x_ref, w1_ref, w2_ref, o_ref, xn_ref, acc_ref):
    j = pl.program_id(1)

    @pl.when(j == 0)
    def _():
        x = x_ref[...].astype(jnp.float32)
        acc_ref[...] = x                               # residual term
        xn = x * jax.lax.rsqrt(jnp.mean(x * x, axis=-1, keepdims=True) + EPS)
        xn_ref[...] = xn.astype(xn_ref.dtype)

    h = jnp.dot(xn_ref[...], w1_ref[...], preferred_element_type=jnp.float32)
    h = jnp.maximum(h, 0.0)
    h = h * h                                          # ReLU2
    acc_ref[...] += jnp.dot(h.astype(w2_ref.dtype), w2_ref[...],
                            preferred_element_type=jnp.float32)

    @pl.when(j == pl.num_programs(1) - 1)
    def _():
        o_ref[...] = acc_ref[...].astype(o_ref.dtype)


def mlp_block(x, w1, w2):
    B, D = x.shape
    _, M = w1.shape
    tr = _pick_row_tile(B)
    mc = _pick_col_tile(M, max_tile=512)
    assert B % tr == 0 and M % mc == 0
    return pl.pallas_call(
        _mlp_kernel,
        out_shape=jax.ShapeDtypeStruct((B, D), x.dtype),
        grid=(B // tr, M // mc),                       # rows outer, M-chunks inner
        in_specs=[pl.BlockSpec((tr, D), lambda i, j: (i, 0)),
                  pl.BlockSpec((D, mc), lambda i, j: (0, j)),
                  pl.BlockSpec((mc, D), lambda i, j: (j, 0))],
        out_specs=pl.BlockSpec((tr, D), lambda i, j: (i, 0)),
        scratch_shapes=[pltpu.VMEM((tr, D), w1.dtype),       # hoisted rmsnorm(x)
                        pltpu.VMEM((tr, D), jnp.float32)],   # f32 accumulator
        input_output_aliases={0: 0},
        compiler_params=pltpu.CompilerParams(
            dimension_semantics=("parallel", "arbitrary"),
            vmem_limit_bytes=_VMEM_LIMIT),
    )(x, w1, w2)


# ----------------------------------------------------------------------------
# Kernel 4: attention.  grid = (batch, query tiles).  The KV block index is
#   constant across query tiles -> stays VMEM-resident.  Heads are sliced
#   per-head straight from the Ref (no full (T,3D) f32 materialization) and
#   each head's output is stored directly into its o_ref column range (no
#   lane concat).  qk-RMSNorm, RoPE (halves kept separate through the score
#   matmul), sliding-window-causal softmax inside.
# ----------------------------------------------------------------------------
def _attn_kernel(q_ref, kv_ref, csq_ref, csk_ref, o_ref, *, nheads, head_dim,
                 scale, window_size, use_rope, mxu_dtype, q_tile, approx_recip):
    T = kv_ref.shape[1]
    D = nheads * head_dim
    d = head_dim
    d2 = d // 2
    qt = pl.program_id(1)

    if use_rope:
        cos_q = csq_ref[:, :d2].astype(jnp.float32)    # (tq, d//2)
        sin_q = csq_ref[:, d2:].astype(jnp.float32)
        cos_k = csk_ref[:, :d2].astype(jnp.float32)    # (T, d//2)
        sin_k = csk_ref[:, d2:].astype(jnp.float32)

    q_abs = q_tile * qt + jax.lax.broadcasted_iota(jnp.int32, (q_tile, T), 0)
    k_abs = jax.lax.broadcasted_iota(jnp.int32, (q_tile, T), 1)
    mask = (k_abs <= q_abs) & (q_abs < k_abs + window_size)

    def rmsnorm(u):
        return u * jax.lax.rsqrt(jnp.mean(u * u, axis=-1, keepdims=True) + EPS)

    # TODO(synk): for realistic H replace this static unroll with a head grid
    # axis (needs head_dim % 128 == 0 for lane-dense per-head blocks) or an
    # in-kernel fori_loop.
    for h in range(nheads):
        q = rmsnorm(q_ref[0, :, h * d:(h + 1) * d].astype(jnp.float32))
        k = rmsnorm(kv_ref[0, :, D + h * d:D + (h + 1) * d].astype(jnp.float32))
        v = kv_ref[0, :, 2 * D + h * d:2 * D + (h + 1) * d]
        q1, q2 = q[:, :d2], q[:, d2:]
        k1, k2 = k[:, :d2], k[:, d2:]
        if use_rope:
            rq1 = q1 * cos_q + q2 * sin_q
            rq2 = q2 * cos_q - q1 * sin_q
            rk1 = k1 * cos_k + k2 * sin_k
            rk2 = k2 * cos_k - k1 * sin_k
        else:
            rq1, rq2, rk1, rk2 = q1, q2, k1, k2
        # halves kept separate through the score matmul -> no lane concat needed
        s = (jnp.dot(rq1.astype(mxu_dtype), rk1.astype(mxu_dtype).T,
                     preferred_element_type=jnp.float32) +
             jnp.dot(rq2.astype(mxu_dtype), rk2.astype(mxu_dtype).T,
                     preferred_element_type=jnp.float32)) * scale
        s = jnp.where(mask, s, -jnp.inf)
        m = jnp.max(s, axis=-1, keepdims=True)
        p = jnp.exp(s - m)
        l = jnp.sum(p, axis=-1, keepdims=True)
        o_h = jnp.dot(p.astype(mxu_dtype), v.astype(mxu_dtype),
                      preferred_element_type=jnp.float32)
        if approx_recip:
            o_h = o_h * pl.reciprocal(l, approx=True)   # EUP slot (bf16 path)
        else:
            o_h = o_h / l                               # exact (f32 path)
        o_ref[0, :, h * d:(h + 1) * d] = o_h.astype(o_ref.dtype)


def sliding_window_attention(qkv, rope_cs, *, nheads, head_dim, window_size,
                             use_rope, mxu_dtype):
    N, T, threeD = qkv.shape
    D = nheads * head_dim
    assert threeD == 3 * D
    assert window_size >= 1
    tq = _pick_row_tile(T, max_tile=256)
    assert T % tq == 0
    kern = functools.partial(
        _attn_kernel, nheads=nheads, head_dim=head_dim,
        scale=1.0 / math.sqrt(head_dim), window_size=window_size,
        use_rope=use_rope, mxu_dtype=mxu_dtype, q_tile=tq,
        approx_recip=(mxu_dtype != jnp.float32))
    # TODO(synk): tile the KV axis with online softmax and skip KV tiles fully
    # outside the sliding window for production T (O(T*window) compute, VMEM
    # independent of T); at demo sizes the full (tq, T) score block is tiny.
    return pl.pallas_call(
        kern,
        out_shape=jax.ShapeDtypeStruct((N, T, D), qkv.dtype),
        grid=(N, T // tq),
        in_specs=[pl.BlockSpec((1, tq, 3 * D), lambda n, qt: (n, qt, 0)),  # q rows
                  pl.BlockSpec((1, T, 3 * D), lambda n, qt: (n, 0, 0)),    # kv (resident over qt)
                  pl.BlockSpec((tq, head_dim), lambda n, qt: (qt, 0)),     # rope for q rows
                  pl.BlockSpec((T, head_dim), lambda n, qt: (0, 0))],      # rope for k rows
        out_specs=pl.BlockSpec((1, tq, D), lambda n, qt: (n, qt, 0)),
        compiler_params=pltpu.CompilerParams(
            dimension_semantics=("parallel", "arbitrary"),
            vmem_limit_bytes=_VMEM_LIMIT),
    )(qkv, qkv, rope_cs, rope_cs)


# ----------------------------------------------------------------------------
# Decoder forward (glue in plain JAX; heavy compute in the kernels above)
# ----------------------------------------------------------------------------
def build_rotary(seq_len, head_dim, base):
    n = head_dim // 4
    freqs = (1.0 / base) ** jnp.linspace(0.0, 1.0, n, dtype=jnp.float32)
    freqs_d = jnp.concatenate([freqs, jnp.zeros_like(freqs)])        # (d//2,)
    theta = jnp.arange(seq_len, dtype=jnp.float32)[:, None] * freqs_d[None, :]
    return jnp.cos(theta), jnp.sin(theta)                            # (T, d//2)


def init_params(key, dim, mlp_dim, depth):
    # NOTE: the torch module zero-initializes the `scale` of o_proj and the
    # second MLP linear; here we draw them randomly (deterministically) so the
    # residual branches are non-trivial and actually exercised.
    params = []
    for _ in range(depth):
        key, k0, k1, k2, k3, k4, k5 = jax.random.split(key, 7)
        qkv_w = jax.random.normal(k0, (3, dim, dim), jnp.float32) / math.sqrt(dim) / 2
        o_w = jax.random.normal(k1, (dim, dim), jnp.float32) / math.sqrt(dim) * 0.5
        o_scale = jax.random.normal(k2, (dim,), jnp.float32) * 0.5
        w1_w = jax.random.normal(k3, (mlp_dim, dim), jnp.float32) / math.sqrt(dim) * 0.5
        w2_w = jax.random.normal(k4, (dim, mlp_dim), jnp.float32) / math.sqrt(mlp_dim) * 0.5
        w2_scale = jax.random.normal(k5, (dim,), jnp.float32) * 0.5
        params.append(dict(
            w_qkv=qkv_w.reshape(3 * dim, dim).T,          # (D, 3D)
            w_o=(o_w * o_scale[:, None]).T,               # (D, D)   scale folded
            w1=w1_w.T,                                    # (D, M)
            w2=(w2_w * w2_scale[:, None]).T,              # (M, D)   scale folded
        ))
    return params


def decoder_forward(x, params, rope_cs, *, head_dim, window_size, use_rope,
                    mxu_dtype=jnp.float32):
    N, T, D = x.shape
    H = D // head_dim
    for p in params:
        xf = x.reshape(N * T, D)
        # --- attention layer (no HBM transposes: qkv stays (N, T, 3D)) ---
        qkv = rmsnorm_matmul(xf, p["w_qkv"]).reshape(N, T, 3 * D)
        o = sliding_window_attention(qkv, rope_cs, nheads=H, head_dim=head_dim,
                                     window_size=window_size, use_rope=use_rope,
                                     mxu_dtype=mxu_dtype)            # (N, T, D)
        x = matmul_residual(o.reshape(N * T, D), p["w_o"], xf).reshape(N, T, D)
        # --- MLP block ---
        x = mlp_block(x.reshape(N * T, D), p["w1"], p["w2"]).reshape(N, T, D)
    return x


# ----------------------------------------------------------------------------
# Pure-JAX reference (mirrors the torch module, f32) for correctness checking
# ----------------------------------------------------------------------------
def reference_forward(x, params, cos, sin, *, head_dim, window_size, use_rope):
    def rmsnorm(v):
        return v * jax.lax.rsqrt(jnp.mean(v * v, axis=-1, keepdims=True) + EPS)

    N, T, D = x.shape
    H = D // head_dim
    d = head_dim
    for p in params:
        qkv = (rmsnorm(x) @ p["w_qkv"]).reshape(N, T, 3, H, d)
        q, k, v = qkv[:, :, 0], qkv[:, :, 1], qkv[:, :, 2]      # (N, T, H, d)
        q, k = rmsnorm(q), rmsnorm(k)
        if use_rope:
            c = cos[None, :, None, :]
            s = sin[None, :, None, :]

            def rot(u):
                u1, u2 = u[..., : d // 2], u[..., d // 2:]
                return jnp.concatenate([u1 * c + u2 * s, -u1 * s + u2 * c], axis=-1)

            q, k = rot(q), rot(k)
        scores = jnp.einsum("nthd,nshd->nhts", q, k) / math.sqrt(d)
        qi = jnp.arange(T)[:, None]
        ki = jnp.arange(T)[None, :]
        mask = (ki <= qi) & (qi < ki + window_size)
        scores = jnp.where(mask, scores, -jnp.inf)
        attn = jax.nn.softmax(scores, axis=-1)
        o = jnp.einsum("nhts,nshd->nthd", attn, v).reshape(N, T, D)
        x = x + o @ p["w_o"]
        h = rmsnorm(x) @ p["w1"]
        h = jnp.maximum(h, 0.0) ** 2
        x = x + h @ p["w2"]
    return x


if __name__ == "__main__":
    # small config consistent with Decoder(__init__)
    dim, mlp_dim, head_dim, depth = 64, 128, 16, 2
    seq_len, window_size = 16, 8
    use_rope, rope_base = True, 1024.0
    N = 2

    key = jax.random.PRNGKey(0)
    kx, kp = jax.random.split(key)
    x = jax.random.normal(kx, (N, seq_len, dim), jnp.float32)
    params = init_params(kp, dim, mlp_dim, depth)
    cos, sin = build_rotary(seq_len, head_dim, rope_base)
    rope_cs = jnp.concatenate([cos, sin], axis=-1)        # lane-dense (T, head_dim)

    ref = reference_forward(x, params, cos, sin, head_dim=head_dim,
                            window_size=window_size, use_rope=use_rope)

    # ---- f32 run (faithful to the torch module in f32; exact softmax divide) ----
    fwd_f32 = jax.jit(functools.partial(decoder_forward, head_dim=head_dim,
                                        window_size=window_size, use_rope=use_rope,
                                        mxu_dtype=jnp.float32))
    out = jax.block_until_ready(fwd_f32(x, params, rope_cs))
    assert out.shape == (N, seq_len, dim) and out.dtype == jnp.float32
    assert jnp.allclose(out, ref, rtol=2e-2, atol=2e-2), "f32 kernel mismatch vs reference"

    # ---- bf16-MXU run (bf16 weights + bf16 matmul operands, f32 accumulation;
    #      the fast path on v6e/v7x). Checked loosely against the f32 reference. ----
    params_bf16 = jax.tree_util.tree_map(lambda a: a.astype(jnp.bfloat16), params)
    fwd_bf16 = jax.jit(functools.partial(decoder_forward, head_dim=head_dim,
                                         window_size=window_size, use_rope=use_rope,
                                         mxu_dtype=jnp.bfloat16))
    out_bf16 = jax.block_until_ready(fwd_bf16(x, params_bf16, rope_cs))
    assert out_bf16.shape == (N, seq_len, dim) and out_bf16.dtype == jnp.float32
    assert jnp.allclose(out_bf16, ref, rtol=6e-2, atol=6e-2), "bf16 kernel mismatch vs reference"

    print("KERNEL_OK")
</pallas_src>

<mosaic_0001>
module attributes {stable_mosaic.version = 11 : i64} {
  func.func @_attn_kernel(%arg0: i32, %arg1: i32, %arg2: memref<1x16x192xf32, #tpu.memory_space<vmem>>, %arg3: memref<1x16x192xf32, #tpu.memory_space<vmem>>, %arg4: memref<16x16xf32, #tpu.memory_space<vmem>>, %arg5: memref<16x16xf32, #tpu.memory_space<vmem>>, %arg6: memref<1x16x64xf32, #tpu.memory_space<vmem>>) attributes {dimension_semantics = [#tpu.dimension_semantics<parallel>, #tpu.dimension_semantics<arbitrary>], iteration_bounds = array<i64: 2, 1>, scalar_prefetch = 0 : i64, scratch_operands = 0 : i64, tpu.core_type = #tpu.core_type<tc>, window_params = [{transform_indices = @transform_0, window_bounds = array<i64: 1, 16, 192>}, {transform_indices = @transform_1, window_bounds = array<i64: 1, 16, 192>}, {transform_indices = @transform_2, window_bounds = array<i64: 16, 16>}, {pipeline_mode = #tpu.pipeline_mode<synchronous>, transform_indices = @transform_3, window_bounds = array<i64: 16, 16>}, {transform_indices = @transform_4, window_bounds = array<i64: 1, 16, 64>}]} {
    %c0 = arith.constant 0 : index
    %c0_0 = arith.constant 0 : index
    %0 = vector.load %arg4[%c0, %c0_0] : memref<16x16xf32, #tpu.memory_space<vmem>>, vector<16x8xf32>
    %c0_1 = arith.constant 0 : index
    %c8 = arith.constant 8 : index
    %1 = vector.load %arg4[%c0_1, %c8] : memref<16x16xf32, #tpu.memory_space<vmem>>, vector<16x8xf32>
    %c0_2 = arith.constant 0 : index
    %c0_3 = arith.constant 0 : index
    %2 = vector.load %arg5[%c0_2, %c0_3] : memref<16x16xf32, #tpu.memory_space<vmem>>, vector<16x8xf32>
    %c0_4 = arith.constant 0 : index
    %c8_5 = arith.constant 8 : index
    %3 = vector.load %arg5[%c0_4, %c8_5] : memref<16x16xf32, #tpu.memory_space<vmem>>, vector<16x8xf32>
    %c16_i32 = arith.constant 16 : i32
    %4 = arith.muli %c16_i32, %arg1 : i32
    %5 = tpu.iota {dimensions = array<i32: 0>} : vector<16x16xi32>
    %6 = vector.broadcast %4 : i32 to vector<16x16xi32>
    %7 = arith.addi %6, %5 : vector<16x16xi32>
    %8 = tpu.iota {dimensions = array<i32: 1>} : vector<16x16xi32>
    %9 = arith.cmpi sle, %8, %7 : vector<16x16xi32>
    %c8_i32 = arith.constant 8 : i32
    %10 = vector.broadcast %c8_i32 : i32 to vector<16x16xi32>
    %11 = arith.addi %8, %10 : vector<16x16xi32>
    %12 = arith.cmpi slt, %7, %11 : vector<16x16xi32>
    %13 = arith.andi %9, %12 : vector<16x16xi1>
    %c0_6 = arith.constant 0 : index
    %c0_7 = arith.constant 0 : index
    %c0_8 = arith.constant 0 : index
    %14 = vector.load %arg2[%c0_6, %c0_7, %c0_8] : memref<1x16x192xf32, #tpu.memory_space<vmem>>, vector<1x16x16xf32>
    %15 = vector.shape_cast %14 : vector<1x16x16xf32> to vector<16x16xf32>
    %16 = arith.mulf %15, %15 : vector<16x16xf32>
    %cst = arith.constant dense<0.000000e+00> : vector<16xf32>
    %17 = vector.multi_reduction <add>, %16, %cst [1] : vector<16x16xf32> to vector<16xf32>
    %18 = vector.shape_cast %17 : vector<16xf32> to vector<16x1xf32>
    %cst_9 = arith.constant 1.600000e+01 : f32
    %19 = vector.broadcast %cst_9 : f32 to vector<16x1xf32>
    %20 = arith.divf %18, %19 : vector<16x1xf32>
    %cst_10 = arith.constant 1.1920929E-7 : f32
    %21 = vector.broadcast %cst_10 : f32 to vector<16x1xf32>
    %22 = arith.addf %20, %21 : vector<16x1xf32>
    %23 = math.rsqrt %22 : vector<16x1xf32>
    %24 = vector.broadcast %23 : vector<16x1xf32> to vector<16x16xf32>
    %25 = arith.mulf %15, %24 : vector<16x16xf32>
    %c0_11 = arith.constant 0 : index
    %c0_12 = arith.constant 0 : index
    %c64 = arith.constant 64 : index
    %26 = vector.load %arg3[%c0_11, %c0_12, %c64] : memref<1x16x192xf32, #tpu.memory_space<vmem>>, vector<1x16x16xf32>
    %27 = vector.shape_cast %26 : vector<1x16x16xf32> to vector<16x16xf32>
    %28 = arith.mulf %27, %27 : vector<16x16xf32>
    %cst_13 = arith.constant dense<0.000000e+00> : vector<16xf32>
    %29 = vector.multi_reduction <add>, %28, %cst_13 [1] : vector<16x16xf32> to vector<16xf32>
    %30 = vector.shape_cast %29 : vector<16xf32> to vector<16x1xf32>
    %cst_14 = arith.constant 1.600000e+01 : f32
    %31 = vector.broadcast %cst_14 : f32 to vector<16x1xf32>
    %32 = arith.divf %30, %31 : vector<16x1xf32>
    %cst_15 = arith.constant 1.1920929E-7 : f32
    %33 = vector.broadcast %cst_15 : f32 to vector<16x1xf32>
    %34 = arith.addf %32, %33 : vector<16x1xf32>
    %35 = math.rsqrt %34 : vector<16x1xf32>
    %36 = vector.broadcast %35 : vector<16x1xf32> to vector<16x16xf32>
    %37 = arith.mulf %27, %36 : vector<16x16xf32>
    %c0_16 = arith.constant 0 : index
    %c0_17 = arith.constant 0 : index
    %c128 = arith.constant 128 : index
    %38 = vector.load %arg3[%c0_16, %c0_17, %c128] : memref<1x16x192xf32, #tpu.memory_space<vmem>>, vector<1x16x16xf32>
    %39 = vector.shape_cast %38 : vector<1x16x16xf32> to vector<16x16xf32>
    %40 = vector.extract_strided_slice %25 {offsets = [0, 0], sizes = [16, 8], strides = [1, 1]} : vector<16x16xf32> to vector<16x8xf32>
    %41 = vector.extract_strided_slice %25 {offsets = [0, 8], sizes = [16, 8], strides = [1, 1]} : vector<16x16xf32> to vector<16x8xf32>
    %42 = vector.extract_strided_slice %37 {offsets = [0, 0], sizes = [16, 8], strides = [1, 1]} : vector<16x16xf32> to vector<16x8xf32>
    %43 = vector.extract_strided_slice %37 {offsets = [0, 8], sizes = [16, 8], strides = [1, 1]} : vector<16x16xf32> to vector<16x8xf32>
    %44 = arith.mulf %40, %0 : vector<16x8xf32>
    %45 = arith.mulf %41, %1 : vector<16x8xf32>
    %46 = arith.addf %44, %45 : vector<16x8xf32>
    %47 = arith.mulf %41, %0 : vector<16x8xf32>
    %48 = arith.mulf %40, %1 : vector<16x8xf32>
    %49 = arith.subf %47, %48 : vector<16x8xf32>
    %50 = arith.mulf %42, %2 : vector<16x8xf32>
    %51 = arith.mulf %43, %3 : vector<16x8xf32>
    %52 = arith.addf %50, %51 : vector<16x8xf32>
    %53 = arith.mulf %43, %2 : vector<16x8xf32>
    %54 = arith.mulf %42, %3 : vector<16x8xf32>
    %55 = arith.subf %53, %54 : vector<16x8xf32>
    %56 = tpu.transpose %52, [1, 0] : vector<16x8xf32> -> vector<8x16xf32>
    %cst_18 = arith.constant dense<0.000000e+00> : vector<16x16xf32>
    %57 = tpu.matmul %46, %56, %cst_18 {dimension_numbers = #tpu.dot_dimension_numbers<[1], [0], [0], [1], [0, 0, 1, 1], [], []>} : vector<16x8xf32>, vector<8x16xf32>, vector<16x16xf32> -> vector<16x16xf32>
    %58 = tpu.transpose %55, [1, 0] : vector<16x8xf32> -> vector<8x16xf32>
    %cst_19 = arith.constant dense<0.000000e+00> : vector<16x16xf32>
    %59 = tpu.matmul %49, %58, %cst_19 {dimension_numbers = #tpu.dot_dimension_numbers<[1], [0], [0], [1], [0, 0, 1, 1], [], []>} : vector<16x8xf32>, vector<8x16xf32>, vector<16x16xf32> -> vector<16x16xf32>
    %60 = arith.addf %57, %59 : vector<16x16xf32>
    %cst_20 = arith.constant 2.500000e-01 : f32
    %61 = vector.broadcast %cst_20 : f32 to vector<16x16xf32>
    %62 = arith.mulf %60, %61 : vector<16x16xf32>
    %cst_21 = arith.constant 0xFF800000 : f32
    %63 = vector.broadcast %cst_21 : f32 to vector<16x16xf32>
    %64 = arith.select %13, %62, %63 : vector<16x16xi1>, vector<16x16xf32>
    %cst_22 = arith.constant dense<0xFF800000> : vector<16xf32>
    %65 = vector.multi_reduction <maximumf>, %64, %cst_22 [1] : vector<16x16xf32> to vector<16xf32>
    %66 = vector.shape_cast %65 : vector<16xf32> to vector<16x1xf32>
    %67 = vector.broadcast %66 : vector<16x1xf32> to vector<16x16xf32>
    %68 = arith.subf %64, %67 : vector<16x16xf32>
    %69 = math.exp %68 : vector<16x16xf32>
    %cst_23 = arith.constant dense<0.000000e+00> : vector<16xf32>
    %70 = vector.multi_reduction <add>, %69, %cst_23 [1] : vector<16x16xf32> to vector<16xf32>
    %71 = vector.shape_cast %70 : vector<16xf32> to vector<16x1xf32>
    %cst_24 = arith.constant dense<0.000000e+00> : vector<16x16xf32>
    %72 = tpu.matmul %69, %39, %cst_24 {dimension_numbers = #tpu.dot_dimension_numbers<[1], [0], [0], [1], [0, 0, 1, 1], [], []>} : vector<16x16xf32>, vector<16x16xf32>, vector<16x16xf32> -> vector<16x16xf32>
    %73 = vector.broadcast %71 : vector<16x1xf32> to vector<16x16xf32>
    %74 = arith.divf %72, %73 : vector<16x16xf32>
    %c0_25 = arith.constant 0 : index
    %c0_26 = arith.constant 0 : index
    %c0_27 = arith.constant 0 : index
    %75 = vector.load %arg6[%c0_25, %c0_26, %c0_27] : memref<1x16x64xf32, #tpu.memory_space<vmem>>, vector<1x16x16xf32>
    %76 = vector.shape_cast %75 : vector<1x16x16xf32> to vector<16x16xf32>
    %77 = vector.shape_cast %74 : vector<16x16xf32> to vector<1x16x16xf32>
    tpu.vector_store %arg6[%c0_25, %c0_26, %c0_27], %77 {strides = array<i32>} : memref<1x16x64xf32, #tpu.memory_space<vmem>>, vector<1x16x16xf32>,
    %c0_28 = arith.constant 0 : index
    %c0_29 = arith.constant 0 : index
    %c16 = arith.constant 16 : index
    %78 = vector.load %arg2[%c0_28, %c0_29, %c16] : memref<1x16x192xf32, #tpu.memory_space<vmem>>, vector<1x16x16xf32>
    %79 = vector.shape_cast %78 : vector<1x16x16xf32> to vector<16x16xf32>
    %80 = arith.mulf %79, %79 : vector<16x16xf32>
    %cst_30 = arith.constant dense<0.000000e+00> : vector<16xf32>
    %81 = vector.multi_reduction <add>, %80, %cst_30 [1] : vector<16x16xf32> to vector<16xf32>
    %82 = vector.shape_cast %81 : vector<16xf32> to vector<16x1xf32>
    %cst_31 = arith.constant 1.600000e+01 : f32
    %83 = vector.broadcast %cst_31 : f32 to vector<16x1xf32>
    %84 = arith.divf %82, %83 : vector<16x1xf32>
    %cst_32 = arith.constant 1.1920929E-7 : f32
    %85 = vector.broadcast %cst_32 : f32 to vector<16x1xf32>
    %86 = arith.addf %84, %85 : vector<16x1xf32>
    %87 = math.rsqrt %86 : vector<16x1xf32>
    %88 = vector.broadcast %87 : vector<16x1xf32> to vector<16x16xf32>
    %89 = arith.mulf %79, %88 : vector<16x16xf32>
    %c0_33 = arith.constant 0 : index
    %c0_34 = arith.constant 0 : index
    %c80 = arith.constant 80 : index
    %90 = vector.load %arg3[%c0_33, %c0_34, %c80] : memref<1x16x192xf32, #tpu.memory_space<vmem>>, vector<1x16x16xf32>
    %91 = vector.shape_cast %90 : vector<1x16x16xf32> to vector<16x16xf32>
    %92 = arith.mulf %91, %91 : vector<16x16xf32>
    %cst_35 = arith.constant dense<0.000000e+00> : vector<16xf32>
    %93 = vector.multi_reduction <add>, %92, %cst_35 [1] : vector<16x16xf32> to vector<16xf32>
    %94 = vector.shape_cast %93 : vector<16xf32> to vector<16x1xf32>
    %cst_36 = arith.constant 1.600000e+01 : f32
    %95 = vector.broadcast %cst_36 : f32 to vector<16x1xf32>
    %96 = arith.divf %94, %95 : vector<16x1xf32>
    %cst_37 = arith.constant 1.1920929E-7 : f32
    %97 = vector.broadcast %cst_37 : f32 to vector<16x1xf32>
    %98 = arith.addf %96, %97 : vector<16x1xf32>
    %99 = math.rsqrt %98 : vector<16x1xf32>
    %100 = vector.broadcast %99 : vector<16x1xf32> to vector<16x16xf32>
    %101 = arith.mulf %91, %100 : vector<16x16xf32>
    %c0_38 = arith.constant 0 : index
    %c0_39 = arith.constant 0 : index
    %c144 = arith.constant 144 : index
    %102 = vector.load %arg3[%c0_38, %c0_39, %c144] : memref<1x16x192xf32, #tpu.memory_space<vmem>>, vector<1x16x16xf32>
    %103 = vector.shape_cast %102 : vector<1x16x16xf32> to vector<16x16xf32>
    %104 = vector.extract_strided_slice %89 {offsets = [0, 0], sizes = [16, 8], strides = [1, 1]} : vector<16x16xf32> to vector<16x8xf32>
    %105 = vector.extract_strided_slice %89 {offsets = [0, 8], sizes = [16, 8], strides = [1, 1]} : vector<16x16xf32> to vector<16x8xf32>
    %106 = vector.extract_strided_slice %101 {offsets = [0, 0], sizes = [16, 8], strides = [1, 1]} : vector<16x16xf32> to vector<16x8xf32>
    %107 = vector.extract_strided_slice %101 {offsets = [0, 8], sizes = [16, 8], strides = [1, 1]} : vector<16x16xf32> to vector<16x8xf32>
    %108 = arith.mulf %104, %0 : vector<16x8xf32>
    %109 = arith.mulf %105, %1 : vector<16x8xf32>
    %110 = arith.addf %108, %109 : vector<16x8xf32>
    %111 = arith.mulf %105, %0 : vector<16x8xf32>
    %112 = arith.mulf %104, %1 : vector<16x8xf32>
    %113 = arith.subf %111, %112 : vector<16x8xf32>
    %114 = arith.mulf %106, %2 : vector<16x8xf32>
    %115 = arith.mulf %107, %3 : vector<16x8xf32>
    %116 = arith.addf %114, %115 : vector<16x8xf32>
    %117 = arith.mulf %107, %2 : vector<16x8xf32>
    %118 = arith.mulf %106, %3 : vector<16x8xf32>
    %119 = arith.subf %117, %118 : vector<16x8xf32>
    %120 = tpu.transpose %116, [1, 0] : vector<16x8xf32> -> vector<8x16xf32>
    %cst_40 = arith.constant dense<0.000000e+00> : vector<16x16xf32>
    %121 = tpu.matmul %110, %120, %cst_40 {dimension_numbers = #tpu.dot_dimension_numbers<[1], [0], [0], [1], [0, 0, 1, 1], [], []>} : vector<16x8xf32>, vector<8x16xf32>, vector<16x16xf32> -> vector<16x16xf32>
    %122 = tpu.transpose %119, [1, 0] : vector<16x8xf32> -> vector<8x16xf32>
    %cst_41 = arith.constant dense<0.000000e+00> : vector<16x16xf32>
    %123 = tpu.matmul %113, %122, %cst_41 {dimension_numbers = #tpu.dot_dimension_numbers<[1], [0], [0], [1], [0, 0, 1, 1], [], []>} : vector<16x8xf32>, vector<8x16xf32>, vector<16x16xf32> -> vector<16x16xf32>
    %124 = arith.addf %121, %123 : vector<16x16xf32>
    %cst_42 = arith.constant 2.500000e-01 : f32
    %125 = vector.broadcast %cst_42 : f32 to vector<16x16xf32>
    %126 = arith.mulf %124, %125 : vector<16x16xf32>
    %cst_43 = arith.constant 0xFF800000 : f32
    %127 = vector.broadcast %cst_43 : f32 to vector<16x16xf32>
    %128 = arith.select %13, %126, %127 : vector<16x16xi1>, vector<16x16xf32>
    %cst_44 = arith.constant dense<0xFF800000> : vector<16xf32>
    %129 = vector.multi_reduction <maximumf>, %128, %cst_44 [1] : vector<16x16xf32> to vector<16xf32>
    %130 = vector.shape_cast %129 : vector<16xf32> to vector<16x1xf32>
    %131 = vector.broadcast %130 : vector<16x1xf32> to vector<16x16xf32>
    %132 = arith.subf %128, %131 : vector<16x16xf32>
    %133 = math.exp %132 : vector<16x16xf32>
    %cst_45 = arith.constant dense<0.000000e+00> : vector<16xf32>
    %134 = vector.multi_reduction <add>, %133, %cst_45 [1] : vector<16x16xf32> to vector<16xf32>
    %135 = vector.shape_cast %134 : vector<16xf32> to vector<16x1xf32>
    %cst_46 = arith.constant dense<0.000000e+00> : vector<16x16xf32>
    %136 = tpu.matmul %133, %103, %cst_46 {dimension_numbers = #tpu.dot_dimension_numbers<[1], [0], [0], [1], [0, 0, 1, 1], [], []>} : vector<16x16xf32>, vector<16x16xf32>, vector<16x16xf32> -> vector<16x16xf32>
    %137 = vector.broadcast %135 : vector<16x1xf32> to vector<16x16xf32>
    %138 = arith.divf %136, %137 : vector<16x16xf32>
    %c0_47 = arith.constant 0 : index
    %c0_48 = arith.constant 0 : index
    %c16_49 = arith.constant 16 : index
    %139 = vector.load %arg6[%c0_47, %c0_48, %c16_49] : memref<1x16x64xf32, #tpu.memory_space<vmem>>, vector<1x16x16xf32>
    %140 = vector.shape_cast %139 : vector<1x16x16xf32> to vector<16x16xf32>
    %141 = vector.shape_cast %138 : vector<16x16xf32> to vector<1x16x16xf32>
    tpu.vector_store %arg6[%c0_47, %c0_48, %c16_49], %141 {strides = array<i32>} : memref<1x16x64xf32, #tpu.memory_space<vmem>>, vector<1x16x16xf32>,
    %c0_50 = arith.constant 0 : index
    %c0_51 = arith.constant 0 : index
    %c32 = arith.constant 32 : index
    %142 = vector.load %arg2[%c0_50, %c0_51, %c32] : memref<1x16x192xf32, #tpu.memory_space<vmem>>, vector<1x16x16xf32>
    %143 = vector.shape_cast %142 : vector<1x16x16xf32> to vector<16x16xf32>
    %144 = arith.mulf %143, %143 : vector<16x16xf32>
    %cst_52 = arith.constant dense<0.000000e+00> : vector<16xf32>
    %145 = vector.multi_reduction <add>, %144, %cst_52 [1] : vector<16x16xf32> to vector<16xf32>
    %146 = vector.shape_cast %145 : vector<16xf32> to vector<16x1xf32>
    %cst_53 = arith.constant 1.600000e+01 : f32
    %147 = vector.broadcast %cst_53 : f32 to vector<16x1xf32>
    %148 = arith.divf %146, %147 : vector<16x1xf32>
    %cst_54 = arith.constant 1.1920929E-7 : f32
    %149 = vector.broadcast %cst_54 : f32 to vector<16x1xf32>
    %150 = arith.addf %148, %149 : vector<16x1xf32>
    %151 = math.rsqrt %150 : vector<16x1xf32>
    %152 = vector.broadcast %151 : vector<16x1xf32> to vector<16x16xf32>
    %153 = arith.mulf %143, %152 : vector<16x16xf32>
    %c0_55 = arith.constant 0 : index
    %c0_56 = arith.constant 0 : index
    %c96 = arith.constant 96 : index
    %154 = vector.load %arg3[%c0_55, %c0_56, %c96] : memref<1x16x192xf32, #tpu.memory_space<vmem>>, vector<1x16x16xf32>
    %155 = vector.shape_cast %154 : vector<1x16x16xf32> to vector<16x16xf32>
    %156 = arith.mulf %155, %155 : vector<16x16xf32>
    %cst_57 = arith.constant dense<0.000000e+00> : vector<16xf32>
    %157 = vector.multi_reduction <add>, %156, %cst_57 [1] : vector<16x16xf32> to vector<16xf32>
    %158 = vector.shape_cast %157 : vector<16xf32> to vector<16x1xf32>
    %cst_58 = arith.constant 1.600000e+01 : f32
    %159 = vector.broadcast %cst_58 : f32 to vector<16x1xf32>
    %160 = arith.divf %158, %159 : vector<16x1xf32>
    %cst_59 = arith.constant 1.1920929E-7 : f32
    %161 = vector.broadcast %cst_59 : f32 to vector<16x1xf32>
    %162 = arith.addf %160, %161 : vector<16x1xf32>
    %163 = math.rsqrt %162 : vector<16x1xf32>
    %164 = vector.broadcast %163 : vector<16x1xf32> to vector<16x16xf32>
    %165 = arith.mulf %155, %164 : vector<16x16xf32>
    %c0_60 = arith.constant 0 : index
    %c0_61 = arith.constant 0 : index
    %c160 = arith.constant 160 : index
    %166 = vector.load %arg3[%c0_60, %c0_61, %c160] : memref<1x16x192xf32, #tpu.memory_space<vmem>>, vector<1x16x16xf32>
    %167 = vector.shape_cast %166 : vector<1x16x16xf32> to vector<16x16xf32>
    %168 = vector.extract_strided_slice %153 {offsets = [0, 0], sizes = [16, 8], strides = [1, 1]} : vector<16x16xf32> to vector<16x8xf32>
    %169 = vector.extract_strided_slice %153 {offsets = [0, 8], sizes = [16, 8], strides = [1, 1]} : vector<16x16xf32> to vector<16x8xf32>
    %170 = vector.extract_strided_slice %165 {offsets = [0, 0], sizes = [16, 8], strides = [1, 1]} : vector<16x16xf32> to vector<16x8xf32>
    %171 = vector.extract_strided_slice %165 {offsets = [0, 8], sizes = [16, 8], strides = [1, 1]} : vector<16x16xf32> to vector<16x8xf32>
    %172 = arith.mulf %168, %0 : vector<16x8xf32>
    %173 = arith.mulf %169, %1 : vector<16x8xf32>
    %174 = arith.addf %172, %173 : vector<16x8xf32>
    %175 = arith.mulf %169, %0 : vector<16x8xf32>
    %176 = arith.mulf %168, %1 : vector<16x8xf32>
    %177 = arith.subf %175, %176 : vector<16x8xf32>
    %178 = arith.mulf %170, %2 : vector<16x8xf32>
    %179 = arith.mulf %171, %3 : vector<16x8xf32>
    %180 = arith.addf %178, %179 : vector<16x8xf32>
    %181 = arith.mulf %171, %2 : vector<16x8xf32>
    %182 = arith.mulf %170, %3 : vector<16x8xf32>
    %183 = arith.subf %181, %182 : vector<16x8xf32>
    %184 = tpu.transpose %180, [1, 0] : vector<16x8xf32> -> vector<8x16xf32>
    %cst_62 = arith.constant dense<0.000000e+00> : vector<16x16xf32>
    %185 = tpu.matmul %174, %184, %cst_62 {dimension_numbers = #tpu.dot_dimension_numbers<[1], [0], [0], [1], [0, 0, 1, 1], [], []>} : vector<16x8xf32>, vector<8x16xf32>, vector<16x16xf32> -> vector<16x16xf32>
    %186 = tpu.transpose %183, [1, 0] : vector<16x8xf32> -> vector<8x16xf32>
    %cst_63 = arith.constant dense<0.000000e+00> : vector<16x16xf32>
    %187 = tpu.matmul %177, %186, %cst_63 {dimension_numbers = #tpu.dot_dimension_numbers<[1], [0], [0], [1], [0, 0, 1, 1], [], []>} : vector<16x8xf32>, vector<8x16xf32>, vector<16x16xf32> -> vector<16x16xf32>
    %188 = arith.addf %185, %187 : vector<16x16xf32>
    %cst_64 = arith.constant 2.500000e-01 : f32
    %189 = vector.broadcast %cst_64 : f32 to vector<16x16xf32>
    %190 = arith.mulf %188, %189 : vector<16x16xf32>
    %cst_65 = arith.constant 0xFF800000 : f32
    %191 = vector.broadcast %cst_65 : f32 to vector<16x16xf32>
    %192 = arith.select %13, %190, %191 : vector<16x16xi1>, vector<16x16xf32>
    %cst_66 = arith.constant dense<0xFF800000> : vector<16xf32>
    %193 = vector.multi_reduction <maximumf>, %192, %cst_66 [1] : vector<16x16xf32> to vector<16xf32>
    %194 = vector.shape_cast %193 : vector<16xf32> to vector<16x1xf32>
    %195 = vector.broadcast %194 : vector<16x1xf32> to vector<16x16xf32>
    %196 = arith.subf %192, %195 : vector<16x16xf32>
    %197 = math.exp %196 : vector<16x16xf32>
    %cst_67 = arith.constant dense<0.000000e+00> : vector<16xf32>
    %198 = vector.multi_reduction <add>, %197, %cst_67 [1] : vector<16x16xf32> to vector<16xf32>
    %199 = vector.shape_cast %198 : vector<16xf32> to vector<16x1xf32>
    %cst_68 = arith.constant dense<0.000000e+00> : vector<16x16xf32>
    %200 = tpu.matmul %197, %167, %cst_68 {dimension_numbers = #tpu.dot_dimension_numbers<[1], [0], [0], [1], [0, 0, 1, 1], [], []>} : vector<16x16xf32>, vector<16x16xf32>, vector<16x16xf32> -> vector<16x16xf32>
    %201 = vector.broadcast %199 : vector<16x1xf32> to vector<16x16xf32>
    %202 = arith.divf %200, %201 : vector<16x16xf32>
    %c0_69 = arith.constant 0 : index
    %c0_70 = arith.constant 0 : index
    %c32_71 = arith.constant 32 : index
    %203 = vector.load %arg6[%c0_69, %c0_70, %c32_71] : memref<1x16x64xf32, #tpu.memory_space<vmem>>, vector<1x16x16xf32>
    %204 = vector.shape_cast %203 : vector<1x16x16xf32> to vector<16x16xf32>
    %205 = vector.shape_cast %202 : vector<16x16xf32> to vector<1x16x16xf32>
    tpu.vector_store %arg6[%c0_69, %c0_70, %c32_71], %205 {strides = array<i32>} : memref<1x16x64xf32, #tpu.memory_space<vmem>>, vector<1x16x16xf32>,
    %c0_72 = arith.constant 0 : index
    %c0_73 = arith.constant 0 : index
    %c48 = arith.constant 48 : index
    %206 = vector.load %arg2[%c0_72, %c0_73, %c48] : memref<1x16x192xf32, #tpu.memory_space<vmem>>, vector<1x16x16xf32>
    %207 = vector.shape_cast %206 : vector<1x16x16xf32> to vector<16x16xf32>
    %208 = arith.mulf %207, %207 : vector<16x16xf32>
    %cst_74 = arith.constant dense<0.000000e+00> : vector<16xf32>
    %209 = vector.multi_reduction <add>, %208, %cst_74 [1] : vector<16x16xf32> to vector<16xf32>
    %210 = vector.shape_cast %209 : vector<16xf32> to vector<16x1xf32>
    %cst_75 = arith.constant 1.600000e+01 : f32
    %211 = vector.broadcast %cst_75 : f32 to vector<16x1xf32>
    %212 = arith.divf %210, %211 : vector<16x1xf32>
    %cst_76 = arith.constant 1.1920929E-7 : f32
    %213 = vector.broadcast %cst_76 : f32 to vector<16x1xf32>
    %214 = arith.addf %212, %213 : vector<16x1xf32>
    %215 = math.rsqrt %214 : vector<16x1xf32>
    %216 = vector.broadcast %215 : vector<16x1xf32> to vector<16x16xf32>
    %217 = arith.mulf %207, %216 : vector<16x16xf32>
    %c0_77 = arith.constant 0 : index
    %c0_78 = arith.constant 0 : index
    %c112 = arith.constant 112 : index
    %218 = vector.load %arg3[%c0_77, %c0_78, %c112] : memref<1x16x192xf32, #tpu.memory_space<vmem>>, vector<1x16x16xf32>
    %219 = vector.shape_cast %218 : vector<1x16x16xf32> to vector<16x16xf32>
    %220 = arith.mulf %219, %219 : vector<16x16xf32>
    %cst_79 = arith.constant dense<0.000000e+00> : vector<16xf32>
    %221 = vector.multi_reduction <add>, %220, %cst_79 [1] : vector<16x16xf32> to vector<16xf32>
    %222 = vector.shape_cast %221 : vector<16xf32> to vector<16x1xf32>
    %cst_80 = arith.constant 1.600000e+01 : f32
    %223 = vector.broadcast %cst_80 : f32 to vector<16x1xf32>
    %224 = arith.divf %222, %223 : vector<16x1xf32>
    %cst_81 = arith.constant 1.1920929E-7 : f32
    %225 = vector.broadcast %cst_81 : f32 to vector<16x1xf32>
    %226 = arith.addf %224, %225 : vector<16x1xf32>
    %227 = math.rsqrt %226 : vector<16x1xf32>
    %228 = vector.broadcast %227 : vector<16x1xf32> to vector<16x16xf32>
    %229 = arith.mulf %219, %228 : vector<16x16xf32>
    %c0_82 = arith.constant 0 : index
    %c0_83 = arith.constant 0 : index
    %c176 = arith.constant 176 : index
    %230 = vector.load %arg3[%c0_82, %c0_83, %c176] : memref<1x16x192xf32, #tpu.memory_space<vmem>>, vector<1x16x16xf32>
    %231 = vector.shape_cast %230 : vector<1x16x16xf32> to vector<16x16xf32>
    %232 = vector.extract_strided_slice %217 {offsets = [0, 0], sizes = [16, 8], strides = [1, 1]} : vector<16x16xf32> to vector<16x8xf32>
    %233 = vector.extract_strided_slice %217 {offsets = [0, 8], sizes = [16, 8], strides = [1, 1]} : vector<16x16xf32> to vector<16x8xf32>
    %234 = vector.extract_strided_slice %229 {offsets = [0, 0], sizes = [16, 8], strides = [1, 1]} : vector<16x16xf32> to vector<16x8xf32>
    %235 = vector.extract_strided_slice %229 {offsets = [0, 8], sizes = [16, 8], strides = [1, 1]} : vector<16x16xf32> to vector<16x8xf32>
    %236 = arith.mulf %232, %0 : vector<16x8xf32>
    %237 = arith.mulf %233, %1 : vector<16x8xf32>
    %238 = arith.addf %236, %237 : vector<16x8xf32>
    %239 = arith.mulf %233, %0 : vector<16x8xf32>
    %240 = arith.mulf %232, %1 : vector<16x8xf32>
    %241 = arith.subf %239, %240 : vector<16x8xf32>
    %242 = arith.mulf %234, %2 : vector<16x8xf32>
    %243 = arith.mulf %235, %3 : vector<16x8xf32>
    %244 = arith.addf %242, %243 : vector<16x8xf32>
    %245 = arith.mulf %235, %2 : vector<16x8xf32>
    %246 = arith.mulf %234, %3 : vector<16x8xf32>
    %247 = arith.subf %245, %246 : vector<16x8xf32>
    %248 = tpu.transpose %244, [1, 0] : vector<16x8xf32> -> vector<8x16xf32>
    %cst_84 = arith.constant dense<0.000000e+00> : vector<16x16xf32>
    %249 = tpu.matmul %238, %248, %cst_84 {dimension_numbers = #tpu.dot_dimension_numbers<[1], [0], [0], [1], [0, 0, 1, 1], [], []>} : vector<16x8xf32>, vector<8x16xf32>, vector<16x16xf32> -> vector<16x16xf32>
    %250 = tpu.transpose %247, [1, 0] : vector<16x8xf32> -> vector<8x16xf32>
    %cst_85 = arith.constant dense<0.000000e+00> : vector<16x16xf32>
    %251 = tpu.matmul %241, %250, %cst_85 {dimension_numbers = #tpu.dot_dimension_numbers<[1], [0], [0], [1], [0, 0, 1, 1], [], []>} : vector<16x8xf32>, vector<8x16xf32>, vector<16x16xf32> -> vector<16x16xf32>
    %252 = arith.addf %249, %251 : vector<16x16xf32>
    %cst_86 = arith.constant 2.500000e-01 : f32
    %253 = vector.broadcast %cst_86 : f32 to vector<16x16xf32>
    %254 = arith.mulf %252, %253 : vector<16x16xf32>
    %cst_87 = arith.constant 0xFF800000 : f32
    %255 = vector.broadcast %cst_87 : f32 to vector<16x16xf32>
    %256 = arith.select %13, %254, %255 : vector<16x16xi1>, vector<16x16xf32>
    %cst_88 = arith.constant dense<0xFF800000> : vector<16xf32>
    %257 = vector.multi_reduction <maximumf>, %256, %cst_88 [1] : vector<16x16xf32> to vector<16xf32>
    %258 = vector.shape_cast %257 : vector<16xf32> to vector<16x1xf32>
    %259 = vector.broadcast %258 : vector<16x1xf32> to vector<16x16xf32>
    %260 = arith.subf %256, %259 : vector<16x16xf32>
    %261 = math.exp %260 : vector<16x16xf32>
    %cst_89 = arith.constant dense<0.000000e+00> : vector<16xf32>
    %262 = vector.multi_reduction <add>, %261, %cst_89 [1] : vector<16x16xf32> to vector<16xf32>
    %263 = vector.shape_cast %262 : vector<16xf32> to vector<16x1xf32>
    %cst_90 = arith.constant dense<0.000000e+00> : vector<16x16xf32>
    %264 = tpu.matmul %261, %231, %cst_90 {dimension_numbers = #tpu.dot_dimension_numbers<[1], [0], [0], [1], [0, 0, 1, 1], [], []>} : vector<16x16xf32>, vector<16x16xf32>, vector<16x16xf32> -> vector<16x16xf32>
    %265 = vector.broadcast %263 : vector<16x1xf32> to vector<16x16xf32>
    %266 = arith.divf %264, %265 : vector<16x16xf32>
    %c0_91 = arith.constant 0 : index
    %c0_92 = arith.constant 0 : index
    %c48_93 = arith.constant 48 : index
    %267 = vector.load %arg6[%c0_91, %c0_92, %c48_93] : memref<1x16x64xf32, #tpu.memory_space<vmem>>, vector<1x16x16xf32>
    %268 = vector.shape_cast %267 : vector<1x16x16xf32> to vector<16x16xf32>
    %269 = vector.shape_cast %266 : vector<16x16xf32> to vector<1x16x16xf32>
    tpu.vector_store %arg6[%c0_91, %c0_92, %c48_93], %269 {strides = array<i32>} : memref<1x16x64xf32, #tpu.memory_space<vmem>>, vector<1x16x16xf32>,
    return
  }
  func.func @transform_0(%arg0: i32, %arg1: i32) -> (i32, i32, i32) {
    %c0_i32 = arith.constant 0 : i32
    %c0_i32_0 = arith.constant 0 : i32
    return %arg0, %arg1, %c0_i32 : i32, i32, i32
  }
  func.func @transform_1(%arg0: i32, %arg1: i32) -> (i32, i32, i32) {
    %c0_i32 = arith.constant 0 : i32
    %c0_i32_0 = arith.constant 0 : i32
    %c0_i32_1 = arith.constant 0 : i32
    return %arg0, %c0_i32, %c0_i32_0 : i32, i32, i32
  }
  func.func @transform_2(%arg0: i32, %arg1: i32) -> (i32, i32) {
    %c0_i32 = arith.constant 0 : i32
    %c0_i32_0 = arith.constant 0 : i32
    return %arg1, %c0_i32 : i32, i32
  }
  func.func @transform_3(%arg0: i32, %arg1: i32) -> (i32, i32) {
    %c0_i32 = arith.constant 0 : i32
    %c0_i32_0 = arith.constant 0 : i32
    %c0_i32_1 = arith.constant 0 : i32
    return %c0_i32, %c0_i32_0 : i32, i32
  }
  func.func @transform_4(%arg0: i32, %arg1: i32) -> (i32, i32, i32) {
    %c0_i32 = arith.constant 0 : i32
    %c0_i32_0 = arith.constant 0 : i32
    return %arg0, %arg1, %c0_i32 : i32, i32, i32
  }
}

module attributes {stable_mosaic.version = 11 : i64} {
  func.func @_matmul_residual_kernel(%arg0: i32, %arg1: i32, %arg2: memref<32x64xf32, #tpu.memory_space<vmem>>, %arg3: memref<64x64xf32, #tpu.memory_space<vmem>>, %arg4: memref<32x64xf32, #tpu.memory_space<vmem>>, %arg5: memref<32x64xf32, #tpu.memory_space<vmem>>) attributes {dimension_semantics = [#tpu.dimension_semantics<parallel>, #tpu.dimension_semantics<arbitrary>], iteration_bounds = array<i64: 1, 1>, scalar_prefetch = 0 : i64, scratch_operands = 0 : i64, tpu.core_type = #tpu.core_type<tc>, window_params = [{transform_indices = @transform_0, window_bounds = array<i64: 32, 64>}, {transform_indices = @transform_1, window_bounds = array<i64: 64, 64>}, {transform_indices = @transform_2, window_bounds = array<i64: 32, 64>}, {transform_indices = @transform_3, window_bounds = array<i64: 32, 64>}]} {
    %c0 = arith.constant 0 : index
    %c0_0 = arith.constant 0 : index
    %0 = vector.load %arg2[%c0, %c0_0] : memref<32x64xf32, #tpu.memory_space<vmem>>, vector<32x64xf32>
    %c0_1 = arith.constant 0 : index
    %c0_2 = arith.constant 0 : index
    %1 = vector.load %arg3[%c0_1, %c0_2] : memref<64x64xf32, #tpu.memory_space<vmem>>, vector<64x64xf32>
    %cst = arith.constant dense<0.000000e+00> : vector<32x64xf32>
    %2 = tpu.matmul %0, %1, %cst {dimension_numbers = #tpu.dot_dimension_numbers<[1], [0], [0], [1], [0, 0, 1, 1], [], []>} : vector<32x64xf32>, vector<64x64xf32>, vector<32x64xf32> -> vector<32x64xf32>
    %c0_3 = arith.constant 0 : index
    %c0_4 = arith.constant 0 : index
    %3 = vector.load %arg4[%c0_3, %c0_4] : memref<32x64xf32, #tpu.memory_space<vmem>>, vector<32x64xf32>
    %4 = arith.addf %3, %2 : vector<32x64xf32>
    %c0_5 = arith.constant 0 : index
    %c0_6 = arith.constant 0 : index
    %5 = vector.load %arg5[%c0_5, %c0_6] : memref<32x64xf32, #tpu.memory_space<vmem>>, vector<32x64xf32>
    tpu.vector_store %arg5[%c0_5, %c0_6], %4 {strides = array<i32>} : memref<32x64xf32, #tpu.memory_space<vmem>>, vector<32x64xf32>,
    return
  }
  func.func @transform_0(%arg0: i32, %arg1: i32) -> (i32, i32) {
    %c0_i32 = arith.constant 0 : i32
    %c0_i32_0 = arith.constant 0 : i32
    return %arg1, %c0_i32 : i32, i32
  }
  func.func @transform_1(%arg0: i32, %arg1: i32) -> (i32, i32) {
    %c0_i32 = arith.constant 0 : i32
    %c0_i32_0 = arith.constant 0 : i32
    return %c0_i32, %arg0 : i32, i32
  }
  func.func @transform_2(%arg0: i32, %arg1: i32) -> (i32, i32) {
    %c0_i32 = arith.constant 0 : i32
    return %arg1, %arg0 : i32, i32
  }
  func.func @transform_3(%arg0: i32, %arg1: i32) -> (i32, i32) {
    %c0_i32 = arith.constant 0 : i32
    return %arg1, %arg0 : i32, i32
  }
}

module attributes {stable_mosaic.version = 11 : i64} {
  func.func @_rmsnorm_matmul_kernel(%arg0: i32, %arg1: i32, %arg2: memref<32x64xf32, #tpu.memory_space<vmem>>, %arg3: memref<64x192xf32, #tpu.memory_space<vmem>>, %arg4: memref<32x192xf32, #tpu.memory_space<vmem>>) attributes {dimension_semantics = [#tpu.dimension_semantics<parallel>, #tpu.dimension_semantics<arbitrary>], iteration_bounds = array<i64: 1, 1>, scalar_prefetch = 0 : i64, scratch_operands = 0 : i64, tpu.core_type = #tpu.core_type<tc>, window_params = [{transform_indices = @transform_0, window_bounds = array<i64: 32, 64>}, {transform_indices = @transform_1, window_bounds = array<i64: 64, 192>}, {transform_indices = @transform_2, window_bounds = array<i64: 32, 192>}]} {
    %c0 = arith.constant 0 : index
    %c0_0 = arith.constant 0 : index
    %0 = vector.load %arg2[%c0, %c0_0] : memref<32x64xf32, #tpu.memory_space<vmem>>, vector<32x64xf32>
    %1 = arith.mulf %0, %0 : vector<32x64xf32>
    %cst = arith.constant dense<0.000000e+00> : vector<32xf32>
    %2 = vector.multi_reduction <add>, %1, %cst [1] : vector<32x64xf32> to vector<32xf32>
    %3 = vector.shape_cast %2 : vector<32xf32> to vector<32x1xf32>
    %cst_1 = arith.constant 6.400000e+01 : f32
    %4 = vector.broadcast %cst_1 : f32 to vector<32x1xf32>
    %5 = arith.divf %3, %4 : vector<32x1xf32>
    %cst_2 = arith.constant 1.1920929E-7 : f32
    %6 = vector.broadcast %cst_2 : f32 to vector<32x1xf32>
    %7 = arith.addf %5, %6 : vector<32x1xf32>
    %8 = math.rsqrt %7 : vector<32x1xf32>
    %9 = vector.broadcast %8 : vector<32x1xf32> to vector<32x64xf32>
    %10 = arith.mulf %0, %9 : vector<32x64xf32>
    %c0_3 = arith.constant 0 : index
    %c0_4 = arith.constant 0 : index
    %11 = vector.load %arg3[%c0_3, %c0_4] : memref<64x192xf32, #tpu.memory_space<vmem>>, vector<64x192xf32>
    %cst_5 = arith.constant dense<0.000000e+00> : vector<32x192xf32>
    %12 = tpu.matmul %10, %11, %cst_5 {dimension_numbers = #tpu.dot_dimension_numbers<[1], [0], [0], [1], [0, 0, 1, 1], [], []>} : vector<32x64xf32>, vector<64x192xf32>, vector<32x192xf32> -> vector<32x192xf32>
    %c0_6 = arith.constant 0 : index
    %c0_7 = arith.constant 0 : index
    %13 = vector.load %arg4[%c0_6, %c0_7] : memref<32x192xf32, #tpu.memory_space<vmem>>, vector<32x192xf32>
    tpu.vector_store %arg4[%c0_6, %c0_7], %12 {strides = array<i32>} : memref<32x192xf32, #tpu.memory_space<vmem>>, vector<32x192xf32>,
    return
  }
  func.func @transform_0(%arg0: i32, %arg1: i32) -> (i32, i32) {
    %c0_i32 = arith.constant 0 : i32
    %c0_i32_0 = arith.constant 0 : i32
    return %arg1, %c0_i32 : i32, i32
  }
  func.func @transform_1(%arg0: i32, %arg1: i32) -> (i32, i32) {
    %c0_i32 = arith.constant 0 : i32
    %c0_i32_0 = arith.constant 0 : i32
    return %c0_i32, %arg0 : i32, i32
  }
  func.func @transform_2(%arg0: i32, %arg1: i32) -> (i32, i32) {
    %c0_i32 = arith.constant 0 : i32
    return %arg1, %arg0 : i32, i32
  }
}

module attributes {stable_mosaic.version = 11 : i64} {
  func.func @_mlp_kernel(%arg0: i32, %arg1: i32, %arg2: memref<32x64xf32, #tpu.memory_space<vmem>>, %arg3: memref<64x128xf32, #tpu.memory_space<vmem>>, %arg4: memref<128x64xf32, #tpu.memory_space<vmem>>, %arg5: memref<32x64xf32, #tpu.memory_space<vmem>>, %arg6: memref<32x64xf32, #tpu.memory_space<vmem>>, %arg7: memref<32x64xf32, #tpu.memory_space<vmem>>) attributes {dimension_semantics = [#tpu.dimension_semantics<parallel>, #tpu.dimension_semantics<arbitrary>], iteration_bounds = array<i64: 1, 1>, scalar_prefetch = 0 : i64, scratch_operands = 2 : i64, tpu.core_type = #tpu.core_type<tc>, window_params = [{transform_indices = @transform_0, window_bounds = array<i64: 32, 64>}, {transform_indices = @transform_1, window_bounds = array<i64: 64, 128>}, {transform_indices = @transform_2, window_bounds = array<i64: 128, 64>}, {transform_indices = @transform_3, window_bounds = array<i64: 32, 64>}]} {
    %c0_i32 = arith.constant 0 : i32
    %0 = arith.cmpi eq, %arg1, %c0_i32 : i32
    %1 = arith.extui %0 : i1 to i32
    %c0_i32_0 = arith.constant 0 : i32
    %2 = arith.cmpi ne, %1, %c0_i32_0 : i32
    scf.if %2 {
      %c0_14 = arith.constant 0 : index
      %c0_15 = arith.constant 0 : index
      %17 = vector.load %arg2[%c0_14, %c0_15] : memref<32x64xf32, #tpu.memory_space<vmem>>, vector<32x64xf32>
      %c0_16 = arith.constant 0 : index
      %c0_17 = arith.constant 0 : index
      %18 = vector.load %arg7[%c0_16, %c0_17] : memref<32x64xf32, #tpu.memory_space<vmem>>, vector<32x64xf32>
      tpu.vector_store %arg7[%c0_16, %c0_17], %17 {strides = array<i32>} : memref<32x64xf32, #tpu.memory_space<vmem>>, vector<32x64xf32>,
      %19 = arith.mulf %17, %17 : vector<32x64xf32>
      %cst_18 = arith.constant dense<0.000000e+00> : vector<32xf32>
      %20 = vector.multi_reduction <add>, %19, %cst_18 [1] : vector<32x64xf32> to vector<32xf32>
      %21 = vector.shape_cast %20 : vector<32xf32> to vector<32x1xf32>
      %cst_19 = arith.constant 6.400000e+01 : f32
      %22 = vector.broadcast %cst_19 : f32 to vector<32x1xf32>
      %23 = arith.divf %21, %22 : vector<32x1xf32>
      %cst_20 = arith.constant 1.1920929E-7 : f32
      %24 = vector.broadcast %cst_20 : f32 to vector<32x1xf32>
      %25 = arith.addf %23, %24 : vector<32x1xf32>
      %26 = math.rsqrt %25 : vector<32x1xf32>
      %27 = vector.broadcast %26 : vector<32x1xf32> to vector<32x64xf32>
      %28 = arith.mulf %17, %27 : vector<32x64xf32>
      %c0_21 = arith.constant 0 : index
      %c0_22 = arith.constant 0 : index
      %29 = vector.load %arg6[%c0_21, %c0_22] : memref<32x64xf32, #tpu.memory_space<vmem>>, vector<32x64xf32>
      tpu.vector_store %arg6[%c0_21, %c0_22], %28 {strides = array<i32>} : memref<32x64xf32, #tpu.memory_space<vmem>>, vector<32x64xf32>,
    } else {
    }
    %c0 = arith.constant 0 : index
    %c0_1 = arith.constant 0 : index
    %3 = vector.load %arg6[%c0, %c0_1] : memref<32x64xf32, #tpu.memory_space<vmem>>, vector<32x64xf32>
    %c0_2 = arith.constant 0 : index
    %c0_3 = arith.constant 0 : index
    %4 = vector.load %arg3[%c0_2, %c0_3] : memref<64x128xf32, #tpu.memory_space<vmem>>, vector<64x128xf32>
    %cst = arith.constant dense<0.000000e+00> : vector<32x128xf32>
    %5 = tpu.matmul %3, %4, %cst {dimension_numbers = #tpu.dot_dimension_numbers<[1], [0], [0], [1], [0, 0, 1, 1], [], []>} : vector<32x64xf32>, vector<64x128xf32>, vector<32x128xf32> -> vector<32x128xf32>
    %cst_4 = arith.constant 0.000000e+00 : f32
    %6 = vector.broadcast %cst_4 : f32 to vector<32x128xf32>
    %7 = arith.maximumf %5, %6 : vector<32x128xf32>
    %8 = arith.mulf %7, %7 : vector<32x128xf32>
    %c0_5 = arith.constant 0 : index
    %c0_6 = arith.constant 0 : index
    %9 = vector.load %arg7[%c0_5, %c0_6] : memref<32x64xf32, #tpu.memory_space<vmem>>, vector<32x64xf32>
    %c0_7 = arith.constant 0 : index
    %c0_8 = arith.constant 0 : index
    %10 = vector.load %arg4[%c0_7, %c0_8] : memref<128x64xf32, #tpu.memory_space<vmem>>, vector<128x64xf32>
    %cst_9 = arith.constant dense<0.000000e+00> : vector<32x64xf32>
    %11 = tpu.matmul %8, %10, %cst_9 {dimension_numbers = #tpu.dot_dimension_numbers<[1], [0], [0], [1], [0, 0, 1, 1], [], []>} : vector<32x128xf32>, vector<128x64xf32>, vector<32x64xf32> -> vector<32x64xf32>
    %12 = arith.addf %9, %11 : vector<32x64xf32>
    %c0_10 = arith.constant 0 : index
    %c0_11 = arith.constant 0 : index
    %13 = vector.load %arg7[%c0_10, %c0_11] : memref<32x64xf32, #tpu.memory_space<vmem>>, vector<32x64xf32>
    tpu.vector_store %arg7[%c0_10, %c0_11], %12 {strides = array<i32>} : memref<32x64xf32, #tpu.memory_space<vmem>>, vector<32x64xf32>,
    %c0_i32_12 = arith.constant 0 : i32
    %14 = arith.cmpi eq, %arg1, %c0_i32_12 : i32
    %15 = arith.extui %14 : i1 to i32
    %c0_i32_13 = arith.constant 0 : i32
    %16 = arith.cmpi ne, %15, %c0_i32_13 : i32
    scf.if %16 {
      %c0_14 = arith.constant 0 : index
      %c0_15 = arith.constant 0 : index
      %17 = vector.load %arg7[%c0_14, %c0_15] : memref<32x64xf32, #tpu.memory_space<vmem>>, vector<32x64xf32>
      %c0_16 = arith.constant 0 : index
      %c0_17 = arith.constant 0 : index
      %18 = vector.load %arg5[%c0_16, %c0_17] : memref<32x64xf32, #tpu.memory_space<vmem>>, vector<32x64xf32>
      tpu.vector_store %arg5[%c0_16, %c0_17], %17 {strides = array<i32>} : memref<32x64xf32, #tpu.memory_space<vmem>>, vector<32x64xf32>,
    } else {
    }
    return
  }
  func.func @transform_0(%arg0: i32, %arg1: i32) -> (i32, i32) {
    %c0_i32 = arith.constant 0 : i32
    %c0_i32_0 = arith.constant 0 : i32
    return %arg0, %c0_i32 : i32, i32
  }
  func.func @transform_1(%arg0: i32, %arg1: i32) -> (i32, i32) {
    %c0_i32 = arith.constant 0 : i32
    %c0_i32_0 = arith.constant 0 : i32
    return %c0_i32, %arg1 : i32, i32
  }
  func.func @transform_2(%arg0: i32, %arg1: i32) -> (i32, i32) {
    %c0_i32 = arith.constant 0 : i32
    %c0_i32_0 = arith.constant 0 : i32
    return %arg1, %c0_i32 : i32, i32
  }
  func.func @transform_3(%arg0: i32, %arg1: i32) -> (i32, i32) {
    %c0_i32 = arith.constant 0 : i32
    %c0_i32_0 = arith.constant 0 : i32
    return %arg0, %c0_i32 : i32, i32
  }
}

module attributes {stable_mosaic.version = 11 : i64} {
  func.func @_rmsnorm_matmul_kernel(%arg0: i32, %arg1: i32, %arg2: memref<32x64xf32, #tpu.memory_space<vmem>>, %arg3: memref<64x192xf32, #tpu.memory_space<vmem>>, %arg4: memref<32x192xf32, #tpu.memory_space<vmem>>) attributes {dimension_semantics = [#tpu.dimension_semantics<parallel>, #tpu.dimension_semantics<arbitrary>], iteration_bounds = array<i64: 1, 1>, scalar_prefetch = 0 : i64, scratch_operands = 0 : i64, tpu.core_type = #tpu.core_type<tc>, window_params = [{transform_indices = @transform_0, window_bounds = array<i64: 32, 64>}, {transform_indices = @transform_1, window_bounds = array<i64: 64, 192>}, {transform_indices = @transform_2, window_bounds = array<i64: 32, 192>}]} {
    %c0 = arith.constant 0 : index
    %c0_0 = arith.constant 0 : index
    %0 = vector.load %arg2[%c0, %c0_0] : memref<32x64xf32, #tpu.memory_space<vmem>>, vector<32x64xf32>
    %1 = arith.mulf %0, %0 : vector<32x64xf32>
    %cst = arith.constant dense<0.000000e+00> : vector<32xf32>
    %2 = vector.multi_reduction <add>, %1, %cst [1] : vector<32x64xf32> to vector<32xf32>
    %3 = vector.shape_cast %2 : vector<32xf32> to vector<32x1xf32>
    %cst_1 = arith.constant 6.400000e+01 : f32
    %4 = vector.broadcast %cst_1 : f32 to vector<32x1xf32>
    %5 = arith.divf %3, %4 : vector<32x1xf32>
    %cst_2 = arith.constant 1.1920929E-7 : f32
    %6 = vector.broadcast %cst_2 : f32 to vector<32x1xf32>
    %7 = arith.addf %5, %6 : vector<32x1xf32>
    %8 = math.rsqrt %7 : vector<32x1xf32>
    %9 = vector.broadcast %8 : vector<32x1xf32> to vector<32x64xf32>
    %10 = arith.mulf %0, %9 : vector<32x64xf32>
    %c0_3 = arith.constant 0 : index
    %c0_4 = arith.constant 0 : index
    %11 = vector.load %arg3[%c0_3, %c0_4] : memref<64x192xf32, #tpu.memory_space<vmem>>, vector<64x192xf32>
    %cst_5 = arith.constant dense<0.000000e+00> : vector<32x192xf32>
    %12 = tpu.matmul %10, %11, %cst_5 {dimension_numbers = #tpu.dot_dimension_numbers<[1], [0], [0], [1], [0, 0, 1, 1], [], []>} : vector<32x64xf32>, vector<64x192xf32>, vector<32x192xf32> -> vector<32x192xf32>
    %c0_6 = arith.constant 0 : index
    %c0_7 = arith.constant 0 : index
    %13 = vector.load %arg4[%c0_6, %c0_7] : memref<32x192xf32, #tpu.memory_space<vmem>>, vector<32x192xf32>
    tpu.vector_store %arg4[%c0_6, %c0_7], %12 {strides = array<i32>} : memref<32x192xf32, #tpu.memory_space<vmem>>, vector<32x192xf32>,
    return
  }
  func.func @transform_0(%arg0: i32, %arg1: i32) -> (i32, i32) {
    %c0_i32 = arith.constant 0 : i32
    %c0_i32_0 = arith.constant 0 : i32
    return %arg1, %c0_i32 : i32, i32
  }
  func.func @transform_1(%arg0: i32, %arg1: i32) -> (i32, i32) {
    %c0_i32 = arith.constant 0 : i32
    %c0_i32_0 = arith.constant 0 : i32
    return %c0_i32, %arg0 : i32, i32
  }
  func.func @transform_2(%arg0: i32, %arg1: i32) -> (i32, i32) {
    %c0_i32 = arith.constant 0 : i32
    return %arg1, %arg0 : i32, i32
  }
}

</mosaic_0001>

<llo_original>
// kernel: decoder_forward.10
$region0: #{decoder_forward.10}
  #allocation0 [shape = 'u32[]', space=smem, size = 0x4, offset = 0x4, fixed_abs, tag = 'smem constant byte address 0x4 - core index']
  #allocation1 [shape = 'u32[144,128]{1,0:T(1,128)}', space=vmem, size = 0x12000, scoped, tag = 'internal scratch']
  %s0 = inlined_call_operand.vmem [shape: f32[32,64], index: 0, kind: input, shape index: {}]
  %s1 = inlined_call_operand.vmem [shape: f32[64,64], index: 1, kind: input, shape index: {}]
  %s2 = inlined_call_operand.vmem [shape: f32[32,64], index: 2, kind: input, shape index: {}, may-alias: {2,3}]
  %s3 = inlined_call_operand.vmem [shape: f32[32,64], index: 3, kind: output, shape index: {}, may-alias: {2,3}]
  %s4 = sld [smem:[#allocation0]]
  $region22: #{decoder_forward.10} parent=0
    _
  %s6 = ssub.s32 1, %s4
  %s7 = scalar_select 0, %s6, %s4
  // Predicated region
  $region2: #{decoder_forward.10} parent=0 // pred_check
    _
  $region3: #{decoder_forward.10} parent=0 // pred_check_branch
    %9 = sbr.rel (0) target = $region5
  $region4: #{decoder_forward.10} parent=0 // pred_region
    _
  $region5: #{decoder_forward.10} parent=0 // pred_fallthru
    _
  // Predicated region
  $region6: #{decoder_forward.10} parent=0 // pred_check
    _
  $region7: #{decoder_forward.10} parent=0 // pred_check_branch
    %11 = sbr.rel (0) target = $region9
  $region8: #{decoder_forward.10} parent=0 // pred_region
    _
  $region9: #{decoder_forward.10} parent=0 // pred_fallthru
    _
  // Predicated region
  $region10: #{decoder_forward.10} parent=0 // pred_check
    _
  $region11: #{decoder_forward.10} parent=0 // pred_check_branch
    %13 = sbr.rel (0) target = $region13
  $region12: #{decoder_forward.10} parent=0 // pred_region
    _
  $region13: #{decoder_forward.10} parent=0 // pred_fallthru
    _
  %v14 = vld [vmem:[%s0] sm:$0xff]
  %v15 = vld [vmem:[%s0 + $0x8] sm:$0xff]
  %v16 = vld [vmem:[%s0 + $0x10] sm:$0xff]
  %v17 = vld [vmem:[%s0 + $0x18] sm:$0xff]
  %v18 = vld [vmem:[%s1] sm:$0xff]
  %v19 = vld [vmem:[%s1 + $0x8] sm:$0xff]
  %v20 = vld [vmem:[%s1 + $0x10] sm:$0xff]
  %v21 = vld [vmem:[%s1 + $0x18] sm:$0xff]
  %v22 = vld [vmem:[%s1 + $0x20] sm:$0xff]
  %v23 = vld [vmem:[%s1 + $0x28] sm:$0xff]
  %v24 = vld [vmem:[%s1 + $0x30] sm:$0xff]
  %v25 = vld [vmem:[%s1 + $0x38] sm:$0xff]
  %vm26 = vcmask 523264
  %v28 = vsel %vm26, %v14, 0
  %v31 = vsel %vm26, %v15, 0
  %v34 = vsel %vm26, %v16, 0
  %v37 = vsel %vm26, %v17, 0
  %39 = vmatprep.subr.mxu0 0.0
  %40 = vmatpush1.msra.mxu0 %v18
  %41 = vmatprep.subr.mxu0 0.0
  %42 = vmatpush1.msra.mxu0 %v19
  %43 = vmatprep.subr.mxu0 0.0
  %44 = vmatpush1.msra.mxu0 %v20
  %45 = vmatprep.subr.mxu0 0.0
  %46 = vmatpush1.msra.mxu0 %v21
  %47 = vmatprep.subr.mxu0 0.0
  %48 = vmatpush1.msra.mxu0 %v22
  %49 = vmatprep.subr.mxu0 0.0
  %50 = vmatpush1.msra.mxu0 %v23
  %51 = vmatprep.subr.mxu0 0.0
  %52 = vmatpush1.msra.mxu0 %v24
  %53 = vmatprep.subr.mxu0 0.0
  %54 = vmatpush1.msra.mxu0 %v25
  %55 = vmatprep.subr.mxu0 0.0
  %56 = vmatpush1.msra.mxu0 0.0
  %57 = vmatprep.subr.mxu0 0.0
  %58 = vmatpush1.msra.mxu0 0.0
  %59 = vmatprep.subr.mxu0 0.0
  %60 = vmatpush1.msra.mxu0 0.0
  %61 = vmatprep.subr.mxu0 0.0
  %62 = vmatpush1.msra.mxu0 0.0
  %63 = vmatprep.subr.mxu0 0.0
  %64 = vmatpush1.msra.mxu0 0.0
  %65 = vmatprep.subr.mxu0 0.0
  %66 = vmatpush1.msra.mxu0 0.0
  %67 = vmatprep.subr.mxu0 0.0
  %68 = vmatpush1.msra.mxu0 0.0
  %69 = vmatprep.subr.mxu0 0.0
  %70 = vmatpush1.msra.mxu0 0.0
  %71 = vmatprep.subr.mxu0 0.0
  %72 = vmatpush1.msra.mxu0 0.0
  %73 = vmatprep.subr.mxu0 0.0
  %74 = vmatpush1.msra.mxu0 0.0
  %75 = vmatprep.subr.mxu0 0.0
  %76 = vmatpush1.msra.mxu0 0.0
  %77 = vmatprep.subr.mxu0 0.0
  %78 = vmatpush1.msra.mxu0 0.0
  %79 = vmatprep.subr.mxu0 0.0
  %80 = vmatpush1.msra.mxu0 0.0
  %81 = vmatprep.subr.mxu0 0.0
  %82 = vmatpush1.msra.mxu0 0.0
  %83 = vmatprep.subr.mxu0 0.0
  %84 = vmatpush1.msra.mxu0 0.0
  %85 = vmatprep.subr.mxu0 0.0
  %86 = vmatpush1.msra.mxu0 0.0
  %87 = vmatprep.subr.mxu0 0.0
  %88 = vmatpush1.msra.mxu0 0.0
  %89 = vmatprep.subr.mxu0 0.0
  %90 = vmatpush1.msra.mxu0 0.0
  %91 = vmatprep.subr.mxu0 0.0
  %92 = vmatpush1.msra.mxu0 0.0
  %93 = vmatprep.subr.mxu0 0.0
  %94 = vmatpush1.msra.mxu0 0.0
  %95 = vmatprep.subr.mxu0 0.0
  %96 = vmatpush1.msra.mxu0 0.0
  %97 = vmatprep.subr.mxu0 0.0
  %98 = vmatpush1.msra.mxu0 0.0
  %99 = vmatprep.subr.mxu0 0.0
  %100 = vmatpush1.msra.mxu0 0.0
  %101 = vmatprep.subr.mxu0 0.0
  %102 = vmatpush1.msra.mxu0 0.0
  %103 = vmatprep.mubr.f32.mxu0 0.0
  %104 = vmatmul.mubr.f32.gmra.mrb[0].mxu0 %v28
  %v105 = vpop.f32.mrb[0].mxu0
  %v106 = vadd.f32 0.0, %v105
  %v107 = vpop.f32.mrb[0].mxu0
  %108 = vmatprep.mubr.f32.mxu0 0.0
  %109 = vmatmul.mubr.f32.gmra.mrb[0].mxu0 %v31
  %v110 = vpop.f32.mrb[0].mxu0
  %v111 = vadd.f32 0.0, %v110
  %v112 = vpop.f32.mrb[0].mxu0
  %113 = vmatprep.mubr.f32.mxu0 0.0
  %114 = vmatmul.mubr.f32.gmra.mrb[0].mxu0 %v34
  %v115 = vpop.f32.mrb[0].mxu0
  %v116 = vadd.f32 0.0, %v115
  %v117 = vpop.f32.mrb[0].mxu0
  %118 = vmatprep.mubr.f32.mxu0 0.0
  %119 = vmatmul.mubr.f32.gmra.mrb[0].mxu0 %v37
  %v120 = vpop.f32.mrb[0].mxu0
  %v121 = vadd.f32 0.0, %v120
  %v122 = vpop.f32.mrb[0].mxu0
  %123 = vdwg.mxu0
  %v124 = vld [vmem:[%s2] sm:$0xff]
  %v125 = vld [vmem:[%s2 + $0x8] sm:$0xff]
  %v126 = vld [vmem:[%s2 + $0x10] sm:$0xff]
  %v127 = vld [vmem:[%s2 + $0x18] sm:$0xff]
  %v128 = vadd.f32 %v124, %v106
  %v129 = vadd.f32 %v125, %v111
  %v130 = vadd.f32 %v126, %v116
  %v131 = vadd.f32 %v127, %v121
  %132 = vst.msk [vmem:[%s3] sm:$0xff] %vm26, %v128
  %133 = vst.msk [vmem:[%s3 + $0x8] sm:$0xff] %vm26, %v129
  %134 = vst.msk [vmem:[%s3 + $0x10] sm:$0xff] %vm26, %v130
  %135 = vst.msk [vmem:[%s3 + $0x18] sm:$0xff] %vm26, %v131
  // Predicated region
  $region14: #{decoder_forward.10} parent=0 // pred_check
    _
  $region15: #{decoder_forward.10} parent=0 // pred_check_branch
    %137 = sbr.rel (0) target = $region17
  $region16: #{decoder_forward.10} parent=0 // pred_region
    _
  $region17: #{decoder_forward.10} parent=0 // pred_fallthru
    _
  // Predicated region
  $region18: #{decoder_forward.10} parent=0 // pred_check
    _
  $region19: #{decoder_forward.10} parent=0 // pred_check_branch
    %139 = sbr.rel (0) target = $region21
  $region20: #{decoder_forward.10} parent=0 // pred_region
    _
  $region21: #{decoder_forward.10} parent=0 // pred_fallthru
    _

// kernel: decoder_forward.8
$region0: #{decoder_forward.8}
  #allocation0 [shape = 'u32[]', space=smem, size = 0x4, offset = 0x4, fixed_abs, tag = 'smem constant byte address 0x4 - core index']
  #allocation1 [shape = 'u32[144,128]{1,0:T(1,128)}', space=vmem, size = 0x12000, scoped, tag = 'internal scratch']
  %s0 = inlined_call_operand.vmem [shape: f32[32,64], index: 0, kind: input, shape index: {}]
  %s1 = inlined_call_operand.hbm [shape: f32[64,192], index: 1, kind: input, shape index: {}]
  %s2 = inlined_call_operand.vmem [shape: f32[32,192], index: 2, kind: output, shape index: {}]
  %s3 = sld [smem:[#allocation0]]
  $region22: #{decoder_forward.8} parent=0
    _
  %s5 = ssub.s32 1, %s3
  %s6 = scalar_select 0, %s5, %s3
  $region1: #{decoder_forward.8} parent=0
    #allocation2 [shape = 'u8[65536]{0}', space=vmem, size = 0x10000, scoped, tag = 'input window, operand 1, single buffered']
    #allocation3 [shape = 's32[1]{0}', space=sflag, size = 0x4, scoped, tag = 'scoped memory for decoder_forward.8']
    %7 = vsyncpa [#allocation3], 0
    // Predicated region
    $region2: #{decoder_forward.8} parent=1 // pred_check
      _
    $region3: #{decoder_forward.8} parent=1 // pred_check_branch
      %9 = sbr.rel (0) target = $region5
    $region4: #{decoder_forward.8} parent=1 // pred_region
      _
    $region5: #{decoder_forward.8} parent=1 // pred_fallthru
      _
    // Predicated region
    $region6: #{decoder_forward.8} parent=1 // pred_check
      _
    $region7: #{decoder_forward.8} parent=1 // pred_check_branch
      %11 = sbr.rel (0) target = $region9
    $region8: #{decoder_forward.8} parent=1 // pred_region
      %s13 = ssub.s32 2048, 2048
      %14 = vsyncadd [#allocation3], %s13
      %s15 = sshll.u32 [#allocation2], 4
      %s16 = int_to_ptr.vmem [resolvable:$true] %s15
      %21 = dma.hbm_to_vmem [thread:$0]  %s1, 2048, %s16, [#allocation3], 256, 256, 16
    $region9: #{decoder_forward.8} parent=1 // pred_fallthru
      _
    // Predicated region
    $region10: #{decoder_forward.8} parent=1 // pred_check
      _
    $region11: #{decoder_forward.8} parent=1 // pred_check_branch
      %23 = sbr.rel (0) target = $region13
    $region12: #{decoder_forward.8} parent=1 // pred_region
      %24 = dma.done [#allocation3], 2048
    $region13: #{decoder_forward.8} parent=1 // pred_fallthru
      _
    %v25 = vld [vmem:[%s0] sm:$0xff]
    %v26 = vld [vmem:[%s0 + $0x8] sm:$0xff]
    %v27 = vld [vmem:[%s0 + $0x10] sm:$0xff]
    %v28 = vld [vmem:[%s0 + $0x18] sm:$0xff]
    %v29 = vmul.f32 %v25, %v25
    %v30 = vmul.f32 %v26, %v26
    %v31 = vmul.f32 %v27, %v27
    %v32 = vmul.f32 %v28, %v28
    %vm33 = vcmask 523264
    %v34 = vsel %vm33, %v29, 0.0
    %35 = vadd.xlane.f32.xlu0 %v34
    %v36 = vpop.xlane.xlu0 %35
    %v37 = vsel %vm33, %v30, 0.0
    %38 = vadd.xlane.f32.xlu0 %v37
    %v39 = vpop.xlane.xlu0 %38
    %v40 = vsel %vm33, %v31, 0.0
    %41 = vadd.xlane.f32.xlu0 %v40
    %v42 = vpop.xlane.xlu0 %41
    %v43 = vsel %vm33, %v32, 0.0
    %44 = vadd.xlane.f32.xlu0 %v43
    %v45 = vpop.xlane.xlu0 %44
    %v46 = vrcp.pop 64.0
    %v47 = vmul.f32 %v36, %v46
    %v48 = vmul.f32 %v39, %v46
    %v49 = vmul.f32 %v42, %v46
    %v50 = vmul.f32 %v45, %v46
    %v51 = vadd.f32 %v47, 1.1920929e-07
    %v52 = vadd.f32 %v48, 1.1920929e-07
    %v53 = vadd.f32 %v49, 1.1920929e-07
    %v54 = vadd.f32 %v50, 1.1920929e-07
    %v55 = vrsqrt.pop %v51
    %v56 = vrsqrt.pop %v52
    %v57 = vrsqrt.pop %v53
    %v58 = vrsqrt.pop %v54
    %v59 = vmul.f32 %v25, %v55
    %v60 = vmul.f32 %v26, %v56
    %v61 = vmul.f32 %v27, %v57
    %v62 = vmul.f32 %v28, %v58
    %v63 = vld [vmem:[#allocation2] sm:$0xff]
    %v64 = vld [vmem:[#allocation2 + $0x8] sm:$0xff]
    %v65 = vld [vmem:[#allocation2 + $0x10] sm:$0xff]
    %v66 = vld [vmem:[#allocation2 + $0x18] sm:$0xff]
    %v67 = vld [vmem:[#allocation2 + $0x20] sm:$0xff]
    %v68 = vld [vmem:[#allocation2 + $0x28] sm:$0xff]
    %v69 = vld [vmem:[#allocation2 + $0x30] sm:$0xff]
    %v70 = vld [vmem:[#allocation2 + $0x38] sm:$0xff]
    %v71 = vld [vmem:[#allocation2 + $0x40] sm:$0xff]
    %v72 = vld [vmem:[#allocation2 + $0x48] sm:$0xff]
    %v73 = vld [vmem:[#allocation2 + $0x50] sm:$0xff]
    %v74 = vld [vmem:[#allocation2 + $0x58] sm:$0xff]
    %v75 = vld [vmem:[#allocation2 + $0x60] sm:$0xff]
    %v76 = vld [vmem:[#allocation2 + $0x68] sm:$0xff]
    %v77 = vld [vmem:[#allocation2 + $0x70] sm:$0xff]
    %v78 = vld [vmem:[#allocation2 + $0x78] sm:$0xff]
    %v80 = vsel %vm33, %v59, 0
    %v83 = vsel %vm33, %v60, 0
    %v86 = vsel %vm33, %v61, 0
    %v89 = vsel %vm33, %v62, 0
    %91 = vmatprep.subr.mxu0 %v64
    %92 = vmatpush1.msra.mxu0 %v63
    %93 = vmatprep.subr.mxu0 %v66
    %94 = vmatpush1.msra.mxu0 %v65
    %95 = vmatprep.subr.mxu0 %v68
    %96 = vmatpush1.msra.mxu0 %v67
    %97 = vmatprep.subr.mxu0 %v70
    %98 = vmatpush1.msra.mxu0 %v69
    %99 = vmatprep.subr.mxu0 %v72
    %100 = vmatpush1.msra.mxu0 %v71
    %101 = vmatprep.subr.mxu0 %v74
    %102 = vmatpush1.msra.mxu0 %v73
    %103 = vmatprep.subr.mxu0 %v76
    %104 = vmatpush1.msra.mxu0 %v75
    %105 = vmatprep.subr.mxu0 %v78
    %106 = vmatpush1.msra.mxu0 %v77
    %107 = vmatprep.subr.mxu0 0.0
    %108 = vmatpush1.msra.mxu0 0.0
    %109 = vmatprep.subr.mxu0 0.0
    %110 = vmatpush1.msra.mxu0 0.0
    %111 = vmatprep.subr.mxu0 0.0
    %112 = vmatpush1.msra.mxu0 0.0
    %113 = vmatprep.subr.mxu0 0.0
    %114 = vmatpush1.msra.mxu0 0.0
    %115 = vmatprep.subr.mxu0 0.0
    %116 = vmatpush1.msra.mxu0 0.0
    %117 = vmatprep.subr.mxu0 0.0
    %118 = vmatpush1.msra.mxu0 0.0
    %119 = vmatprep.subr.mxu0 0.0
    %120 = vmatpush1.msra.mxu0 0.0
    %121 = vmatprep.subr.mxu0 0.0
    %122 = vmatpush1.msra.mxu0 0.0
    %123 = vmatprep.subr.mxu0 0.0
    %124 = vmatpush1.msra.mxu0 0.0
    %125 = vmatprep.subr.mxu0 0.0
    %126 = vmatpush1.msra.mxu0 0.0
    %127 = vmatprep.subr.mxu0 0.0
    %128 = vmatpush1.msra.mxu0 0.0
    %129 = vmatprep.subr.mxu0 0.0
    %130 = vmatpush1.msra.mxu0 0.0
    %131 = vmatprep.subr.mxu0 0.0
    %132 = vmatpush1.msra.mxu0 0.0
    %133 = vmatprep.subr.mxu0 0.0
    %134 = vmatpush1.msra.mxu0 0.0
    %135 = vmatprep.subr.mxu0 0.0
    %136 = vmatpush1.msra.mxu0 0.0
    %137 = vmatprep.subr.mxu0 0.0
    %138 = vmatpush1.msra.mxu0 0.0
    %139 = vmatprep.subr.mxu0 0.0
    %140 = vmatpush1.msra.mxu0 0.0
    %141 = vmatprep.subr.mxu0 0.0
    %142 = vmatpush1.msra.mxu0 0.0
    %143 = vmatprep.subr.mxu0 0.0
    %144 = vmatpush1.msra.mxu0 0.0
    %145 = vmatprep.subr.mxu0 0.0
    %146 = vmatpush1.msra.mxu0 0.0
    %147 = vmatprep.subr.mxu0 0.0
    %148 = vmatpush1.msra.mxu0 0.0
    %149 = vmatprep.subr.mxu0 0.0
    %150 = vmatpush1.msra.mxu0 0.0
    %151 = vmatprep.subr.mxu0 0.0
    %152 = vmatpush1.msra.mxu0 0.0
    %153 = vmatprep.subr.mxu0 0.0
    %154 = vmatpush1.msra.mxu0 0.0
    %155 = vmatprep.mubr.f32.mxu0 0.0
    %156 = vmatmul.mubr.f32.gmra.mrb[0].mxu0 %v80
    %v157 = vpop.f32.mrb[0].mxu0
    %v158 = vadd.f32 0.0, %v157
    %v159 = vpop.f32.mrb[0].mxu0
    %v160 = vadd.f32 0.0, %v159
    %161 = vmatprep.mubr.f32.mxu0 0.0
    %162 = vmatmul.mubr.f32.gmra.mrb[0].mxu0 %v83
    %v163 = vpop.f32.mrb[0].mxu0
    %v164 = vadd.f32 0.0, %v163
    %v165 = vpop.f32.mrb[0].mxu0
    %v166 = vadd.f32 0.0, %v165
    %167 = vmatprep.mubr.f32.mxu0 0.0
    %168 = vmatmul.mubr.f32.gmra.mrb[0].mxu0 %v86
    %v169 = vpop.f32.mrb[0].mxu0
    %v170 = vadd.f32 0.0, %v169
    %v171 = vpop.f32.mrb[0].mxu0
    %v172 = vadd.f32 0.0, %v171
    %173 = vmatprep.mubr.f32.mxu0 0.0
    %174 = vmatmul.mubr.f32.gmra.mrb[0].mxu0 %v89
    %v175 = vpop.f32.mrb[0].mxu0
    %v176 = vadd.f32 0.0, %v175
    %v177 = vpop.f32.mrb[0].mxu0
    %v178 = vadd.f32 0.0, %v177
    %179 = vdwg.mxu0
    %180 = vst [vmem:[%s2] sm:$0xff] %v158
    %181 = vst.msk [vmem:[%s2 + $0x8] sm:$0xff] %vm33, %v160
    %182 = vst [vmem:[%s2 + $0x10] sm:$0xff] %v164
    %183 = vst.msk [vmem:[%s2 + $0x18] sm:$0xff] %vm33, %v166
    %184 = vst [vmem:[%s2 + $0x20] sm:$0xff] %v170
    %185 = vst.msk [vmem:[%s2 + $0x28] sm:$0xff] %vm33, %v172
    %186 = vst [vmem:[%s2 + $0x30] sm:$0xff] %v176
    %187 = vst.msk [vmem:[%s2 + $0x38] sm:$0xff] %vm33, %v178
    // Predicated region
    $region14: #{decoder_forward.8} parent=1 // pred_check
      _
    $region15: #{decoder_forward.8} parent=1 // pred_check_branch
      %189 = sbr.rel (0) target = $region17
    $region16: #{decoder_forward.8} parent=1 // pred_region
      _
    $region17: #{decoder_forward.8} parent=1 // pred_fallthru
      _
    // Predicated region
    $region18: #{decoder_forward.8} parent=1 // pred_check
      _
    $region19: #{decoder_forward.8} parent=1 // pred_check_branch
      %191 = sbr.rel (0) target = $region21
    $region20: #{decoder_forward.8} parent=1 // pred_region
      _
    $region21: #{decoder_forward.8} parent=1 // pred_fallthru
      _
    %192 = vsyncpa [#allocation3], 1

// kernel: decoder_forward.12
$region0: #{decoder_forward.12}
  #allocation0 [shape = 'u32[]', space=smem, size = 0x4, offset = 0x4, fixed_abs, tag = 'smem constant byte address 0x4 - core index']
  #allocation1 [shape = 'u32[144,128]{1,0:T(1,128)}', space=vmem, size = 0x12000, scoped, tag = 'internal scratch']
  %s0 = inlined_call_operand.vmem [shape: f32[32,64], index: 0, kind: input, shape index: {}]
  %s1 = inlined_call_operand.vmem [shape: f32[64,192], index: 1, kind: input, shape index: {}]
  %s2 = inlined_call_operand.vmem [shape: f32[32,192], index: 2, kind: output, shape index: {}]
  %s3 = sld [smem:[#allocation0]]
  $region18: #{decoder_forward.12} parent=0
    _
  %s5 = ssub.s32 1, %s3
  %s6 = scalar_select 0, %s5, %s3
  // Predicated region
  $region2: #{decoder_forward.12} parent=0 // pred_check
    _
  $region3: #{decoder_forward.12} parent=0 // pred_check_branch
    %8 = sbr.rel (0) target = $region5
  $region4: #{decoder_forward.12} parent=0 // pred_region
    _
  $region5: #{decoder_forward.12} parent=0 // pred_fallthru
    _
  // Predicated region
  $region6: #{decoder_forward.12} parent=0 // pred_check
    _
  $region7: #{decoder_forward.12} parent=0 // pred_check_branch
    %10 = sbr.rel (0) target = $region9
  $region8: #{decoder_forward.12} parent=0 // pred_region
    _
  $region9: #{decoder_forward.12} parent=0 // pred_fallthru
    _
  %v11 = vld [vmem:[%s0] sm:$0xff]
  %v12 = vld [vmem:[%s0 + $0x8] sm:$0xff]
  %v13 = vld [vmem:[%s0 + $0x10] sm:$0xff]
  %v14 = vld [vmem:[%s0 + $0x18] sm:$0xff]
  %v15 = vmul.f32 %v11, %v11
  %v16 = vmul.f32 %v12, %v12
  %v17 = vmul.f32 %v13, %v13
  %v18 = vmul.f32 %v14, %v14
  %vm19 = vcmask 523264
  %v20 = vsel %vm19, %v15, 0.0
  %21 = vadd.xlane.f32.xlu0 %v20
  %v22 = vpop.xlane.xlu0 %21
  %v23 = vsel %vm19, %v16, 0.0
  %24 = vadd.xlane.f32.xlu0 %v23
  %v25 = vpop.xlane.xlu0 %24
  %v26 = vsel %vm19, %v17, 0.0
  %27 = vadd.xlane.f32.xlu0 %v26
  %v28 = vpop.xlane.xlu0 %27
  %v29 = vsel %vm19, %v18, 0.0
  %30 = vadd.xlane.f32.xlu0 %v29
  %v31 = vpop.xlane.xlu0 %30
  %v32 = vrcp.pop 64.0
  %v33 = vmul.f32 %v22, %v32
  %v34 = vmul.f32 %v25, %v32
  %v35 = vmul.f32 %v28, %v32
  %v36 = vmul.f32 %v31, %v32
  %v37 = vadd.f32 %v33, 1.1920929e-07
  %v38 = vadd.f32 %v34, 1.1920929e-07
  %v39 = vadd.f32 %v35, 1.1920929e-07
  %v40 = vadd.f32 %v36, 1.1920929e-07
  %v41 = vrsqrt.pop %v37
  %v42 = vrsqrt.pop %v38
  %v43 = vrsqrt.pop %v39
  %v44 = vrsqrt.pop %v40
  %v45 = vmul.f32 %v11, %v41
  %v46 = vmul.f32 %v12, %v42
  %v47 = vmul.f32 %v13, %v43
  %v48 = vmul.f32 %v14, %v44
  %v49 = vld [vmem:[%s1] sm:$0xff]
  %v50 = vld [vmem:[%s1 + $0x8] sm:$0xff]
  %v51 = vld [vmem:[%s1 + $0x10] sm:$0xff]
  %v52 = vld [vmem:[%s1 + $0x18] sm:$0xff]
  %v53 = vld [vmem:[%s1 + $0x20] sm:$0xff]
  %v54 = vld [vmem:[%s1 + $0x28] sm:$0xff]
  %v55 = vld [vmem:[%s1 + $0x30] sm:$0xff]
  %v56 = vld [vmem:[%s1 + $0x38] sm:$0xff]
  %v57 = vld [vmem:[%s1 + $0x40] sm:$0xff]
  %v58 = vld [vmem:[%s1 + $0x48] sm:$0xff]
  %v59 = vld [vmem:[%s1 + $0x50] sm:$0xff]
  %v60 = vld [vmem:[%s1 + $0x58] sm:$0xff]
  %v61 = vld [vmem:[%s1 + $0x60] sm:$0xff]
  %v62 = vld [vmem:[%s1 + $0x68] sm:$0xff]
  %v63 = vld [vmem:[%s1 + $0x70] sm:$0xff]
  %v64 = vld [vmem:[%s1 + $0x78] sm:$0xff]
  %v66 = vsel %vm19, %v45, 0
  %v69 = vsel %vm19, %v46, 0
  %v72 = vsel %vm19, %v47, 0
  %v75 = vsel %vm19, %v48, 0
  %77 = vmatprep.subr.mxu0 %v50
  %78 = vmatpush1.msra.mxu0 %v49
  %79 = vmatprep.subr.mxu0 %v52
  %80 = vmatpush1.msra.mxu0 %v51
  %81 = vmatprep.subr.mxu0 %v54
  %82 = vmatpush1.msra.mxu0 %v53
  %83 = vmatprep.subr.mxu0 %v56
  %84 = vmatpush1.msra.mxu0 %v55
  %85 = vmatprep.subr.mxu0 %v58
  %86 = vmatpush1.msra.mxu0 %v57
  %87 = vmatprep.subr.mxu0 %v60
  %88 = vmatpush1.msra.mxu0 %v59
  %89 = vmatprep.subr.mxu0 %v62
  %90 = vmatpush1.msra.mxu0 %v61
  %91 = vmatprep.subr.mxu0 %v64
  %92 = vmatpush1.msra.mxu0 %v63
  %93 = vmatprep.subr.mxu0 0.0
  %94 = vmatpush1.msra.mxu0 0.0
  %95 = vmatprep.subr.mxu0 0.0
  %96 = vmatpush1.msra.mxu0 0.0
  %97 = vmatprep.subr.mxu0 0.0
  %98 = vmatpush1.msra.mxu0 0.0
  %99 = vmatprep.subr.mxu0 0.0
  %100 = vmatpush1.msra.mxu0 0.0
  %101 = vmatprep.subr.mxu0 0.0
  %102 = vmatpush1.msra.mxu0 0.0
  %103 = vmatprep.subr.mxu0 0.0
  %104 = vmatpush1.msra.mxu0 0.0
  %105 = vmatprep.subr.mxu0 0.0
  %106 = vmatpush1.msra.mxu0 0.0
  %107 = vmatprep.subr.mxu0 0.0
  %108 = vmatpush1.msra.mxu0 0.0
  %109 = vmatprep.subr.mxu0 0.0
  %110 = vmatpush1.msra.mxu0 0.0
  %111 = vmatprep.subr.mxu0 0.0
  %112 = vmatpush1.msra.mxu0 0.0
  %113 = vmatprep.subr.mxu0 0.0
  %114 = vmatpush1.msra.mxu0 0.0
  %115 = vmatprep.subr.mxu0 0.0
  %116 = vmatpush1.msra.mxu0 0.0
  %117 = vmatprep.subr.mxu0 0.0
  %118 = vmatpush1.msra.mxu0 0.0
  %119 = vmatprep.subr.mxu0 0.0
  %120 = vmatpush1.msra.mxu0 0.0
  %121 = vmatprep.subr.mxu0 0.0
  %122 = vmatpush1.msra.mxu0 0.0
  %123 = vmatprep.subr.mxu0 0.0
  %124 = vmatpush1.msra.mxu0 0.0
  %125 = vmatprep.subr.mxu0 0.0
  %126 = vmatpush1.msra.mxu0 0.0
  %127 = vmatprep.subr.mxu0 0.0
  %128 = vmatpush1.msra.mxu0 0.0
  %129 = vmatprep.subr.mxu0 0.0
  %130 = vmatpush1.msra.mxu0 0.0
  %131 = vmatprep.subr.mxu0 0.0
  %132 = vmatpush1.msra.mxu0 0.0
  %133 = vmatprep.subr.mxu0 0.0
  %134 = vmatpush1.msra.mxu0 0.0
  %135 = vmatprep.subr.mxu0 0.0
  %136 = vmatpush1.msra.mxu0 0.0
  %137 = vmatprep.subr.mxu0 0.0
  %138 = vmatpush1.msra.mxu0 0.0
  %139 = vmatprep.subr.mxu0 0.0
  %140 = vmatpush1.msra.mxu0 0.0
  %141 = vmatprep.mubr.f32.mxu0 0.0
  %142 = vmatmul.mubr.f32.gmra.mrb[0].mxu0 %v66
  %v143 = vpop.f32.mrb[0].mxu0
  %v144 = vadd.f32 0.0, %v143
  %v145 = vpop.f32.mrb[0].mxu0
  %v146 = vadd.f32 0.0, %v145
  %147 = vmatprep.mubr.f32.mxu0 0.0
  %148 = vmatmul.mubr.f32.gmra.mrb[0].mxu0 %v69
  %v149 = vpop.f32.mrb[0].mxu0
  %v150 = vadd.f32 0.0, %v149
  %v151 = vpop.f32.mrb[0].mxu0
  %v152 = vadd.f32 0.0, %v151
  %153 = vmatprep.mubr.f32.mxu0 0.0
  %154 = vmatmul.mubr.f32.gmra.mrb[0].mxu0 %v72
  %v155 = vpop.f32.mrb[0].mxu0
  %v156 = vadd.f32 0.0, %v155
  %v157 = vpop.f32.mrb[0].mxu0
  %v158 = vadd.f32 0.0, %v157
  %159 = vmatprep.mubr.f32.mxu0 0.0
  %160 = vmatmul.mubr.f32.gmra.mrb[0].mxu0 %v75
  %v161 = vpop.f32.mrb[0].mxu0
  %v162 = vadd.f32 0.0, %v161
  %v163 = vpop.f32.mrb[0].mxu0
  %v164 = vadd.f32 0.0, %v163
  %165 = vdwg.mxu0
  %166 = vst [vmem:[%s2] sm:$0xff] %v144
  %167 = vst.msk [vmem:[%s2 + $0x8] sm:$0xff] %vm19, %v146
  %168 = vst [vmem:[%s2 + $0x10] sm:$0xff] %v150
  %169 = vst.msk [vmem:[%s2 + $0x18] sm:$0xff] %vm19, %v152
  %170 = vst [vmem:[%s2 + $0x20] sm:$0xff] %v156
  %171 = vst.msk [vmem:[%s2 + $0x28] sm:$0xff] %vm19, %v158
  %172 = vst [vmem:[%s2 + $0x30] sm:$0xff] %v162
  %173 = vst.msk [vmem:[%s2 + $0x38] sm:$0xff] %vm19, %v164
  // Predicated region
  $region10: #{decoder_forward.12} parent=0 // pred_check
    _
  $region11: #{decoder_forward.12} parent=0 // pred_check_branch
    %175 = sbr.rel (0) target = $region13
  $region12: #{decoder_forward.12} parent=0 // pred_region
    _
  $region13: #{decoder_forward.12} parent=0 // pred_fallthru
    _
  // Predicated region
  $region14: #{decoder_forward.12} parent=0 // pred_check
    _
  $region15: #{decoder_forward.12} parent=0 // pred_check_branch
    %177 = sbr.rel (0) target = $region17
  $region16: #{decoder_forward.12} parent=0 // pred_region
    _
  $region17: #{decoder_forward.12} parent=0 // pred_fallthru
    _

// kernel: decoder_forward.11
$region0: #{decoder_forward.11}
  #allocation0 [shape = 'u32[]', space=smem, size = 0x4, offset = 0x4, fixed_abs, tag = 'smem constant byte address 0x4 - core index']
  #allocation1 [shape = 'u32[144,128]{1,0:T(1,128)}', space=vmem, size = 0x12000, scoped, tag = 'internal scratch']
  #allocation2 [shape = 'f32[32,64]{1,0:T(8,128)}', space=vmem, size = 0x4000, scoped, tag = 'scratch operand']
  #allocation3 [shape = 'f32[32,64]{1,0:T(8,128)}', space=vmem, size = 0x4000, scoped, tag = 'scratch operand']
  %s0 = inlined_call_operand.vmem [shape: f32[32,64], index: 0, kind: input, shape index: {}, may-alias: {0,3}]
  %s1 = inlined_call_operand.vmem [shape: f32[64,128], index: 1, kind: input, shape index: {}]
  %s2 = inlined_call_operand.vmem [shape: f32[128,64], index: 2, kind: input, shape index: {}]
  %s3 = inlined_call_operand.vmem [shape: f32[32,64], index: 3, kind: output, shape index: {}, may-alias: {0,3}]
  %s4 = sld [smem:[#allocation0]]
  $region30: #{decoder_forward.11} parent=0
    _
  %s6 = ssub.s32 1, %s4
  %s7 = scalar_select 0, %s6, %s4
  // Predicated region
  $region2: #{decoder_forward.11} parent=0 // pred_check
    _
  $region3: #{decoder_forward.11} parent=0 // pred_check_branch
    %9 = sbr.rel (0) target = $region5
  $region4: #{decoder_forward.11} parent=0 // pred_region
    _
  $region5: #{decoder_forward.11} parent=0 // pred_fallthru
    _
  // Predicated region
  $region6: #{decoder_forward.11} parent=0 // pred_check
    _
  $region7: #{decoder_forward.11} parent=0 // pred_check_branch
    %11 = sbr.rel (0) target = $region9
  $region8: #{decoder_forward.11} parent=0 // pred_region
    _
  $region9: #{decoder_forward.11} parent=0 // pred_fallthru
    _
  // Predicated region
  $region10: #{decoder_forward.11} parent=0 // pred_check
    _
  $region11: #{decoder_forward.11} parent=0 // pred_check_branch
    %13 = sbr.rel (0) target = $region13
  $region12: #{decoder_forward.11} parent=0 // pred_region
    _
  $region13: #{decoder_forward.11} parent=0 // pred_fallthru
    _
  %p14 = scmp.eq.s32.totalorder 0, 0
  // Predicated region
  $region14: #{decoder_forward.11} parent=0 // pred_check
    %p15 = pneg %p14
  $region15: #{decoder_forward.11} parent=0 // pred_check_branch
    %17 = sbr.rel (%p15) target = $region17
  $region16: #{decoder_forward.11} parent=0 // pred_region
    %v18 = vld [vmem:[%s0] sm:$0xff]
    %v19 = vld [vmem:[%s0 + $0x8] sm:$0xff]
    %v20 = vld [vmem:[%s0 + $0x10] sm:$0xff]
    %v21 = vld [vmem:[%s0 + $0x18] sm:$0xff]
    %vm22 = vcmask 523264
    %23 = vst.msk [vmem:[#allocation3] sm:$0xff] %vm22, %v18
    %24 = vst.msk [vmem:[#allocation3 + $0x8] sm:$0xff] %vm22, %v19
    %25 = vst.msk [vmem:[#allocation3 + $0x10] sm:$0xff] %vm22, %v20
    %26 = vst.msk [vmem:[#allocation3 + $0x18] sm:$0xff] %vm22, %v21
    %v27 = vmul.f32 %v18, %v18
    %v28 = vmul.f32 %v19, %v19
    %v29 = vmul.f32 %v20, %v20
    %v30 = vmul.f32 %v21, %v21
    %v31 = vsel %vm22, %v27, 0.0
    %32 = vadd.xlane.f32.xlu0 %v31
    %v33 = vpop.xlane.xlu0 %32
    %v34 = vsel %vm22, %v28, 0.0
    %35 = vadd.xlane.f32.xlu0 %v34
    %v36 = vpop.xlane.xlu0 %35
    %v37 = vsel %vm22, %v29, 0.0
    %38 = vadd.xlane.f32.xlu0 %v37
    %v39 = vpop.xlane.xlu0 %38
    %v40 = vsel %vm22, %v30, 0.0
    %41 = vadd.xlane.f32.xlu0 %v40
    %v42 = vpop.xlane.xlu0 %41
    %v43 = vrcp.pop 64.0
    %v44 = vmul.f32 %v33, %v43
    %v45 = vmul.f32 %v36, %v43
    %v46 = vmul.f32 %v39, %v43
    %v47 = vmul.f32 %v42, %v43
    %v48 = vadd.f32 %v44, 1.1920929e-07
    %v49 = vadd.f32 %v45, 1.1920929e-07
    %v50 = vadd.f32 %v46, 1.1920929e-07
    %v51 = vadd.f32 %v47, 1.1920929e-07
    %v52 = vrsqrt.pop %v48
    %v53 = vrsqrt.pop %v49
    %v54 = vrsqrt.pop %v50
    %v55 = vrsqrt.pop %v51
    %v56 = vmul.f32 %v18, %v52
    %v57 = vmul.f32 %v19, %v53
    %v58 = vmul.f32 %v20, %v54
    %v59 = vmul.f32 %v21, %v55
    %60 = vst.msk [vmem:[#allocation2] sm:$0xff] %vm22, %v56
    %61 = vst.msk [vmem:[#allocation2 + $0x8] sm:$0xff] %vm22, %v57
    %62 = vst.msk [vmem:[#allocation2 + $0x10] sm:$0xff] %vm22, %v58
    %63 = vst.msk [vmem:[#allocation2 + $0x18] sm:$0xff] %vm22, %v59
  $region17: #{decoder_forward.11} parent=0 // pred_fallthru
    _
  %v64 = vld [vmem:[#allocation2] sm:$0xff]
  %v65 = vld [vmem:[#allocation2 + $0x8] sm:$0xff]
  %v66 = vld [vmem:[#allocation2 + $0x10] sm:$0xff]
  %v67 = vld [vmem:[#allocation2 + $0x18] sm:$0xff]
  %v68 = vld [vmem:[%s1] sm:$0xff]
  %v69 = vld [vmem:[%s1 + $0x8] sm:$0xff]
  %v70 = vld [vmem:[%s1 + $0x10] sm:$0xff]
  %v71 = vld [vmem:[%s1 + $0x18] sm:$0xff]
  %v72 = vld [vmem:[%s1 + $0x20] sm:$0xff]
  %v73 = vld [vmem:[%s1 + $0x28] sm:$0xff]
  %v74 = vld [vmem:[%s1 + $0x30] sm:$0xff]
  %v75 = vld [vmem:[%s1 + $0x38] sm:$0xff]
  %vm76 = vcmask 523264
  %v78 = vsel %vm76, %v64, 0
  %v81 = vsel %vm76, %v65, 0
  %v84 = vsel %vm76, %v66, 0
  %v87 = vsel %vm76, %v67, 0
  %89 = vmatprep.subr.mxu0 0.0
  %90 = vmatpush1.msra.mxu0 %v68
  %91 = vmatprep.subr.mxu0 0.0
  %92 = vmatpush1.msra.mxu0 %v69
  %93 = vmatprep.subr.mxu0 0.0
  %94 = vmatpush1.msra.mxu0 %v70
  %95 = vmatprep.subr.mxu0 0.0
  %96 = vmatpush1.msra.mxu0 %v71
  %97 = vmatprep.subr.mxu0 0.0
  %98 = vmatpush1.msra.mxu0 %v72
  %99 = vmatprep.subr.mxu0 0.0
  %100 = vmatpush1.msra.mxu0 %v73
  %101 = vmatprep.subr.mxu0 0.0
  %102 = vmatpush1.msra.mxu0 %v74
  %103 = vmatprep.subr.mxu0 0.0
  %104 = vmatpush1.msra.mxu0 %v75
  %105 = vmatprep.subr.mxu0 0.0
  %106 = vmatpush1.msra.mxu0 0.0
  %107 = vmatprep.subr.mxu0 0.0
  %108 = vmatpush1.msra.mxu0 0.0
  %109 = vmatprep.subr.mxu0 0.0
  %110 = vmatpush1.msra.mxu0 0.0
  %111 = vmatprep.subr.mxu0 0.0
  %112 = vmatpush1.msra.mxu0 0.0
  %113 = vmatprep.subr.mxu0 0.0
  %114 = vmatpush1.msra.mxu0 0.0
  %115 = vmatprep.subr.mxu0 0.0
  %116 = vmatpush1.msra.mxu0 0.0
  %117 = vmatprep.subr.mxu0 0.0
  %118 = vmatpush1.msra.mxu0 0.0
  %119 = vmatprep.subr.mxu0 0.0
  %120 = vmatpush1.msra.mxu0 0.0
  %121 = vmatprep.subr.mxu0 0.0
  %122 = vmatpush1.msra.mxu0 0.0
  %123 = vmatprep.subr.mxu0 0.0
  %124 = vmatpush1.msra.mxu0 0.0
  %125 = vmatprep.subr.mxu0 0.0
  %126 = vmatpush1.msra.mxu0 0.0
  %127 = vmatprep.subr.mxu0 0.0
  %128 = vmatpush1.msra.mxu0 0.0
  %129 = vmatprep.subr.mxu0 0.0
  %130 = vmatpush1.msra.mxu0 0.0
  %131 = vmatprep.subr.mxu0 0.0
  %132 = vmatpush1.msra.mxu0 0.0
  %133 = vmatprep.subr.mxu0 0.0
  %134 = vmatpush1.msra.mxu0 0.0
  %135 = vmatprep.subr.mxu0 0.0
  %136 = vmatpush1.msra.mxu0 0.0
  %137 = vmatprep.subr.mxu0 0.0
  %138 = vmatpush1.msra.mxu0 0.0
  %139 = vmatprep.subr.mxu0 0.0
  %140 = vmatpush1.msra.mxu0 0.0
  %141 = vmatprep.subr.mxu0 0.0
  %142 = vmatpush1.msra.mxu0 0.0
  %143 = vmatprep.subr.mxu0 0.0
  %144 = vmatpush1.msra.mxu0 0.0
  %145 = vmatprep.subr.mxu0 0.0
  %146 = vmatpush1.msra.mxu0 0.0
  %147 = vmatprep.subr.mxu0 0.0
  %148 = vmatpush1.msra.mxu0 0.0
  %149 = vmatprep.subr.mxu0 0.0
  %150 = vmatpush1.msra.mxu0 0.0
  %151 = vmatprep.subr.mxu0 0.0
  %152 = vmatpush1.msra.mxu0 0.0
  %153 = vmatprep.mubr.f32.mxu0 0.0
  %154 = vmatmul.mubr.f32.gmra.mrb[0].mxu0 %v78
  %v155 = vpop.f32.mrb[0].mxu0
  %v156 = vadd.f32 0.0, %v155
  %v157 = vpop.f32.mrb[0].mxu0
  %158 = vmatprep.mubr.f32.mxu0 0.0
  %159 = vmatmul.mubr.f32.gmra.mrb[0].mxu0 %v81
  %v160 = vpop.f32.mrb[0].mxu0
  %v161 = vadd.f32 0.0, %v160
  %v162 = vpop.f32.mrb[0].mxu0
  %163 = vmatprep.mubr.f32.mxu0 0.0
  %164 = vmatmul.mubr.f32.gmra.mrb[0].mxu0 %v84
  %v165 = vpop.f32.mrb[0].mxu0
  %v166 = vadd.f32 0.0, %v165
  %v167 = vpop.f32.mrb[0].mxu0
  %168 = vmatprep.mubr.f32.mxu0 0.0
  %169 = vmatmul.mubr.f32.gmra.mrb[0].mxu0 %v87
  %v170 = vpop.f32.mrb[0].mxu0
  %v171 = vadd.f32 0.0, %v170
  %v172 = vpop.f32.mrb[0].mxu0
  %173 = vdwg.mxu0
  %v174 = vmax.f32 %v156, 0.0
  %v175 = vmax.f32 %v161, 0.0
  %v176 = vmax.f32 %v166, 0.0
  %v177 = vmax.f32 %v171, 0.0
  %v178 = vmul.f32 %v174, %v174
  %v179 = vmul.f32 %v175, %v175
  %v180 = vmul.f32 %v176, %v176
  %v181 = vmul.f32 %v177, %v177
  %v182 = vld [vmem:[#allocation3] sm:$0xff]
  %v183 = vld [vmem:[#allocation3 + $0x8] sm:$0xff]
  %v184 = vld [vmem:[#allocation3 + $0x10] sm:$0xff]
  %v185 = vld [vmem:[#allocation3 + $0x18] sm:$0xff]
  %v186 = vld [vmem:[%s2] sm:$0xff]
  %v187 = vld [vmem:[%s2 + $0x8] sm:$0xff]
  %v188 = vld [vmem:[%s2 + $0x10] sm:$0xff]
  %v189 = vld [vmem:[%s2 + $0x18] sm:$0xff]
  %v190 = vld [vmem:[%s2 + $0x20] sm:$0xff]
  %v191 = vld [vmem:[%s2 + $0x28] sm:$0xff]
  %v192 = vld [vmem:[%s2 + $0x30] sm:$0xff]
  %v193 = vld [vmem:[%s2 + $0x38] sm:$0xff]
  %v194 = vld [vmem:[%s2 + $0x40] sm:$0xff]
  %v195 = vld [vmem:[%s2 + $0x48] sm:$0xff]
  %v196 = vld [vmem:[%s2 + $0x50] sm:$0xff]
  %v197 = vld [vmem:[%s2 + $0x58] sm:$0xff]
  %v198 = vld [vmem:[%s2 + $0x60] sm:$0xff]
  %v199 = vld [vmem:[%s2 + $0x68] sm:$0xff]
  %v200 = vld [vmem:[%s2 + $0x70] sm:$0xff]
  %v201 = vld [vmem:[%s2 + $0x78] sm:$0xff]
  %202 = vmatprep.subr.mxu0 0.0
  %203 = vmatpush1.msra.mxu0 %v186
  %204 = vmatprep.subr.mxu0 0.0
  %205 = vmatpush1.msra.mxu0 %v187
  %206 = vmatprep.subr.mxu0 0.0
  %207 = vmatpush1.msra.mxu0 %v188
  %208 = vmatprep.subr.mxu0 0.0
  %209 = vmatpush1.msra.mxu0 %v189
  %210 = vmatprep.subr.mxu0 0.0
  %211 = vmatpush1.msra.mxu0 %v190
  %212 = vmatprep.subr.mxu0 0.0
  %213 = vmatpush1.msra.mxu0 %v191
  %214 = vmatprep.subr.mxu0 0.0
  %215 = vmatpush1.msra.mxu0 %v192
  %216 = vmatprep.subr.mxu0 0.0
  %217 = vmatpush1.msra.mxu0 %v193
  %218 = vmatprep.subr.mxu0 0.0
  %219 = vmatpush1.msra.mxu0 %v194
  %220 = vmatprep.subr.mxu0 0.0
  %221 = vmatpush1.msra.mxu0 %v195
  %222 = vmatprep.subr.mxu0 0.0
  %223 = vmatpush1.msra.mxu0 %v196
  %224 = vmatprep.subr.mxu0 0.0
  %225 = vmatpush1.msra.mxu0 %v197
  %226 = vmatprep.subr.mxu0 0.0
  %227 = vmatpush1.msra.mxu0 %v198
  %228 = vmatprep.subr.mxu0 0.0
  %229 = vmatpush1.msra.mxu0 %v199
  %230 = vmatprep.subr.mxu0 0.0
  %231 = vmatpush1.msra.mxu0 %v200
  %232 = vmatprep.subr.mxu0 0.0
  %233 = vmatpush1.msra.mxu0 %v201
  %234 = vmatprep.subr.mxu0 0.0
  %235 = vmatpush1.msra.mxu0 0.0
  %236 = vmatprep.subr.mxu0 0.0
  %237 = vmatpush1.msra.mxu0 0.0
  %238 = vmatprep.subr.mxu0 0.0
  %239 = vmatpush1.msra.mxu0 0.0
  %240 = vmatprep.subr.mxu0 0.0
  %241 = vmatpush1.msra.mxu0 0.0
  %242 = vmatprep.subr.mxu0 0.0
  %243 = vmatpush1.msra.mxu0 0.0
  %244 = vmatprep.subr.mxu0 0.0
  %245 = vmatpush1.msra.mxu0 0.0
  %246 = vmatprep.subr.mxu0 0.0
  %247 = vmatpush1.msra.mxu0 0.0
  %248 = vmatprep.subr.mxu0 0.0
  %249 = vmatpush1.msra.mxu0 0.0
  %250 = vmatprep.subr.mxu0 0.0
  %251 = vmatpush1.msra.mxu0 0.0
  %252 = vmatprep.subr.mxu0 0.0
  %253 = vmatpush1.msra.mxu0 0.0
  %254 = vmatprep.subr.mxu0 0.0
  %255 = vmatpush1.msra.mxu0 0.0
  %256 = vmatprep.subr.mxu0 0.0
  %257 = vmatpush1.msra.mxu0 0.0
  %258 = vmatprep.subr.mxu0 0.0
  %259 = vmatpush1.msra.mxu0 0.0
  %260 = vmatprep.subr.mxu0 0.0
  %261 = vmatpush1.msra.mxu0 0.0
  %262 = vmatprep.subr.mxu0 0.0
  %263 = vmatpush1.msra.mxu0 0.0
  %264 = vmatprep.subr.mxu0 0.0
  %265 = vmatpush1.msra.mxu0 0.0
  %266 = vmatprep.mubr.f32.mxu0 0.0
  %267 = vmatmul.mubr.f32.gmra.mrb[0].mxu0 %v178
  %v268 = vpop.f32.mrb[0].mxu0
  %v269 = vadd.f32 0.0, %v268
  %v270 = vpop.f32.mrb[0].mxu0
  %271 = vmatprep.mubr.f32.mxu0 0.0
  %272 = vmatmul.mubr.f32.gmra.mrb[0].mxu0 %v179
  %v273 = vpop.f32.mrb[0].mxu0
  %v274 = vadd.f32 0.0, %v273
  %v275 = vpop.f32.mrb[0].mxu0
  %276 = vmatprep.mubr.f32.mxu0 0.0
  %277 = vmatmul.mubr.f32.gmra.mrb[0].mxu0 %v180
  %v278 = vpop.f32.mrb[0].mxu0
  %v279 = vadd.f32 0.0, %v278
  %v280 = vpop.f32.mrb[0].mxu0
  %281 = vmatprep.mubr.f32.mxu0 0.0
  %282 = vmatmul.mubr.f32.gmra.mrb[0].mxu0 %v181
  %v283 = vpop.f32.mrb[0].mxu0
  %v284 = vadd.f32 0.0, %v283
  %v285 = vpop.f32.mrb[0].mxu0
  %286 = vdwg.mxu0
  %v287 = vadd.f32 %v182, %v269
  %v288 = vadd.f32 %v183, %v274
  %v289 = vadd.f32 %v184, %v279
  %v290 = vadd.f32 %v185, %v284
  %291 = vst.msk [vmem:[#allocation3] sm:$0xff] %vm76, %v287
  %292 = vst.msk [vmem:[#allocation3 + $0x8] sm:$0xff] %vm76, %v288
  %293 = vst.msk [vmem:[#allocation3 + $0x10] sm:$0xff] %vm76, %v289
  %294 = vst.msk [vmem:[#allocation3 + $0x18] sm:$0xff] %vm76, %v290
  // Predicated region
  $region18: #{decoder_forward.11} parent=0 // pred_check
    %p295 = pneg %p14
  $region19: #{decoder_forward.11} parent=0 // pred_check_branch
    %297 = sbr.rel (%p295) target = $region21
  $region20: #{decoder_forward.11} parent=0 // pred_region
    %v298 = vld [vmem:[#allocation3] sm:$0xff]
    %v299 = vld [vmem:[#allocation3 + $0x8] sm:$0xff]
    %v300 = vld [vmem:[#allocation3 + $0x10] sm:$0xff]
    %v301 = vld [vmem:[#allocation3 + $0x18] sm:$0xff]
    %302 = vst.msk [vmem:[%s3] sm:$0xff] %vm76, %v298
    %303 = vst.msk [vmem:[%s3 + $0x8] sm:$0xff] %vm76, %v299
    %304 = vst.msk [vmem:[%s3 + $0x10] sm:$0xff] %vm76, %v300
    %305 = vst.msk [vmem:[%s3 + $0x18] sm:$0xff] %vm76, %v301
  $region21: #{decoder_forward.11} parent=0 // pred_fallthru
    _
  // Predicated region
  $region22: #{decoder_forward.11} parent=0 // pred_check
    _
  $region23: #{decoder_forward.11} parent=0 // pred_check_branch
    %307 = sbr.rel (0) target = $region25
  $region24: #{decoder_forward.11} parent=0 // pred_region
    _
  $region25: #{decoder_forward.11} parent=0 // pred_fallthru
    _
  // Predicated region
  $region26: #{decoder_forward.11} parent=0 // pred_check
    _
  $region27: #{decoder_forward.11} parent=0 // pred_check_branch
    %309 = sbr.rel (0) target = $region29
  $region28: #{decoder_forward.11} parent=0 // pred_region
    _
  $region29: #{decoder_forward.11} parent=0 // pred_fallthru
    _

// kernel: decoder_forward.9
$region0: #{decoder_forward.9}
  #allocation0 [shape = 'u32[]', space=smem, size = 0x4, offset = 0x4, fixed_abs, tag = 'smem constant byte address 0x4 - core index']
  #allocation1 [shape = 'u32[144,128]{1,0:T(1,128)}', space=vmem, size = 0x12000, scoped, tag = 'internal scratch']
  %s0 = inlined_call_operand.vmem [shape: f32[2,16,192], index: 0, kind: input, shape index: {}, may-alias: {0,1}]
  %s1 = inlined_call_operand.vmem [shape: f32[2,16,192], index: 1, kind: input, shape index: {}, may-alias: {0,1}]
  %s2 = inlined_call_operand.vmem [shape: f32[16,16], index: 2, kind: input, shape index: {}, may-alias: {2,3}]
  %s3 = inlined_call_operand.vmem [shape: f32[16,16], index: 3, kind: input, shape index: {}, may-alias: {2,3}]
  %s4 = inlined_call_operand.vmem [shape: f32[2,16,64], index: 4, kind: output, shape index: {}]
  %s5 = sld [smem:[#allocation0]]
  $region49: #{decoder_forward.9} parent=0
    _
  %s7 = ssub.s32 1, %s5
  %s8 = scalar_select 0, %s7, %s5
  loop: start=0, step=1, limit=4
  $region2: #{decoder_forward.9} parent=0 // loop_pre_header
    _
  $region3: #{decoder_forward.9} parent=0 // loop_header
    %s10 = sphi 0, %s14
    %p11 = scmp.ge.s32.totalorder %s10, 4
    %s17 = sphi 0, %s29
    %s18 = sphi 0, %s25
    %s19 = sphi 0, %s17
    %s20 = sphi 0, %s18
    %s21 = sphi 0, %s19
    %s22 = sphi 0, %s20
    %s34 = sphi 0, %s36
    %s37 = sphi 0, %s34
    %s38 = sphi 0, %s37
    %s54 = sphi 0, %s38
    %s60 = sphi 0, %s62
    %s63 = sphi 0, %s60
    %s64 = sphi 0, %s63
    %s80 = sphi 0, %s64
    %s86 = sphi 0, %s88
    %s89 = sphi 0, %s86
    %s90 = sphi 0, %s89
    %s106 = sphi 0, %s90
    %s110 = sphi 0, %s110
    %s112 = sphi 0, %s110
    %s113 = sphi 0, %s112
    %s127 = sphi 0, %s113
    %s135 = sphi 0, %s137
    %s138 = sphi 0, %s135
    %s139 = sphi 0, %s138
    %s155 = sphi 0, %s139
  $region4: #{decoder_forward.9} parent=0 // loop_header_branch
    %13 = sbr.rel (%p11) target = $region8
  $region5: #{decoder_forward.9} parent=0 // loop_body
    %s15 = ssub.s32 %s10, 1
    %s16 = ssub.s32 %s10, 2
    %s23 = sadd.s32 1, %s18
    %p24 = scmp.ge.s32.totalorder %s23, 1
    %s25 = scalar_select %p24, 0, %s23
    %s26 = sadd.s32 1, %s17
    %s27 = scalar_select %p24, %s26, %s17
    %p28 = scmp.ge.s32.totalorder %s27, 2
    %s29 = scalar_select %p28, 0, %s27
    %s30 = ssub.s32 %s17, %s29
    %s31 = ssub.s32 %s18, %s25
    %s32 = sor.u32 %s30, %s31
    %p33 = scmp.eq.s32.totalorder %s32, 0
    %s35 = sadd.s32 %s34, 1
    %s36 = scalar_select %p33, %s34, %s35
    %p39 = pneg %p33
    %p40 = scmp.eq.s32.totalorder %s10, 1
    %p41 = por %p39, %p40
    %p42 = scmp.ne.s32.totalorder %s34, %s37
    %p43 = scmp.eq.s32.totalorder %s10, 0
    %p44 = por %p42, %p43
    %p45 = scmp.ne.s32.totalorder %s34, %s37
    %p46 = scmp.eq.s32.totalorder %s15, 1
    %p47 = por %p45, %p46
    %p48 = scmp.ne.s32.totalorder %s37, %s38
    %p49 = scmp.eq.s32.totalorder %s15, 0
    %p50 = por %p48, %p49
    %p51 = scmp.ne.s32.totalorder %s37, %s38
    %p52 = scmp.eq.s32.totalorder %s16, 1
    %p53 = por %p51, %p52
    %p55 = scmp.ne.s32.totalorder %s38, %s54
    %p56 = scmp.eq.s32.totalorder %s16, 0
    %p57 = por %p55, %p56
    %s58 = ssub.s32 %s17, %s29
    %p59 = scmp.eq.s32.totalorder %s58, 0
    %s61 = sadd.s32 %s60, 1
    %s62 = scalar_select %p59, %s60, %s61
    %p65 = pneg %p59
    %p66 = scmp.eq.s32.totalorder %s10, 1
    %p67 = por %p65, %p66
    %p68 = scmp.ne.s32.totalorder %s60, %s63
    %p69 = scmp.eq.s32.totalorder %s10, 0
    %p70 = por %p68, %p69
    %p71 = scmp.ne.s32.totalorder %s60, %s63
    %p72 = scmp.eq.s32.totalorder %s15, 1
    %p73 = por %p71, %p72
    %p74 = scmp.ne.s32.totalorder %s63, %s64
    %p75 = scmp.eq.s32.totalorder %s15, 0
    %p76 = por %p74, %p75
    %p77 = scmp.ne.s32.totalorder %s63, %s64
    %p78 = scmp.eq.s32.totalorder %s16, 1
    %p79 = por %p77, %p78
    %p81 = scmp.ne.s32.totalorder %s64, %s80
    %p82 = scmp.eq.s32.totalorder %s16, 0
    %p83 = por %p81, %p82
    %s84 = ssub.s32 %s18, %s25
    %p85 = scmp.eq.s32.totalorder %s84, 0
    %s87 = sadd.s32 %s86, 1
    %s88 = scalar_select %p85, %s86, %s87
    %p91 = pneg %p85
    %p92 = scmp.eq.s32.totalorder %s10, 1
    %p93 = por %p91, %p92
    %p94 = scmp.ne.s32.totalorder %s86, %s89
    %p95 = scmp.eq.s32.totalorder %s10, 0
    %p96 = por %p94, %p95
    %p97 = scmp.ne.s32.totalorder %s86, %s89
    %p98 = scmp.eq.s32.totalorder %s15, 1
    %p99 = por %p97, %p98
    %p100 = scmp.ne.s32.totalorder %s89, %s90
    %p101 = scmp.eq.s32.totalorder %s15, 0
    %p102 = por %p100, %p101
    %p103 = scmp.ne.s32.totalorder %s89, %s90
    %p104 = scmp.eq.s32.totalorder %s16, 1
    %p105 = por %p103, %p104
    %p107 = scmp.ne.s32.totalorder %s90, %s106
    %p108 = scmp.eq.s32.totalorder %s16, 0
    %p109 = por %p107, %p108
    %s111 = sadd.s32 %s110, 1
    %p114 = scmp.eq.s32.totalorder %s10, 1
    %p115 = scmp.ne.s32.totalorder %s110, %s112
    %p116 = scmp.eq.s32.totalorder %s10, 0
    %p117 = por %p115, %p116
    %p118 = scmp.ne.s32.totalorder %s110, %s112
    %p119 = scmp.eq.s32.totalorder %s15, 1
    %p120 = por %p118, %p119
    %p121 = scmp.ne.s32.totalorder %s112, %s113
    %p122 = scmp.eq.s32.totalorder %s15, 0
    %p123 = por %p121, %p122
    %p124 = scmp.ne.s32.totalorder %s112, %s113
    %p125 = scmp.eq.s32.totalorder %s16, 1
    %p126 = por %p124, %p125
    %p128 = scmp.ne.s32.totalorder %s113, %s127
    %p129 = scmp.eq.s32.totalorder %s16, 0
    %p130 = por %p128, %p129
    %s131 = ssub.s32 %s17, %s29
    %s132 = ssub.s32 %s18, %s25
    %s133 = sor.u32 %s131, %s132
    %p134 = scmp.eq.s32.totalorder %s133, 0
    %s136 = sadd.s32 %s135, 1
    %s137 = scalar_select %p134, %s135, %s136
    %p140 = pneg %p134
    %p141 = scmp.eq.s32.totalorder %s10, 1
    %p142 = por %p140, %p141
    %p143 = scmp.ne.s32.totalorder %s135, %s138
    %p144 = scmp.eq.s32.totalorder %s10, 0
    %p145 = por %p143, %p144
    %p146 = scmp.ne.s32.totalorder %s135, %s138
    %p147 = scmp.eq.s32.totalorder %s15, 1
    %p148 = por %p146, %p147
    %p149 = scmp.ne.s32.totalorder %s138, %s139
    %p150 = scmp.eq.s32.totalorder %s15, 0
    %p151 = por %p149, %p150
    %p152 = scmp.ne.s32.totalorder %s138, %s139
    %p153 = scmp.eq.s32.totalorder %s16, 1
    %p154 = por %p152, %p153
    %p156 = scmp.ne.s32.totalorder %s139, %s155
    %p157 = scmp.eq.s32.totalorder %s16, 0
    %p158 = por %p156, %p157
    %p159 = scmp.le.s32.totalorder 1, %s10
    %p160 = scmp.lt.s32.totalorder %s10, 3
    %p161 = pnand %p159, %p160
    %p162 = pneg %p161
    // Predicated region
    $region9: #{decoder_forward.9} parent=5 // pred_check
      _
    $region10: #{decoder_forward.9} parent=5 // pred_check_branch
      %164 = sbr.rel (%p161) target = $region12
    $region11: #{decoder_forward.9} parent=5 // pred_region
      %s165 = ssub.s32 %s10, 1
      // Predicated region
      $region13: #{decoder_forward.9} parent=11 // pred_check
        %p166 = pneg %p102
      $region14: #{decoder_forward.9} parent=11 // pred_check_branch
        %168 = sbr.rel (%p166) target = $region16
      $region15: #{decoder_forward.9} parent=11 // pred_region
        %s169 = smul.u32 2, %s20
        %p170 = scmp.lt.s32.totalorder %s169, 1
        %s171 = scalar_select %p170, %s169, 1
        %s172 = smul.addr %s171, 8
        %s173 = scalar_lea.vmem %s2, %s172
        %s174 = smul.u32 2, %s20
      $region16: #{decoder_forward.9} parent=11 // pred_fallthru
        _
      // Predicated region
      $region17: #{decoder_forward.9} parent=11 // pred_check
        %p175 = pneg %p123
      $region18: #{decoder_forward.9} parent=11 // pred_check_branch
        %177 = sbr.rel (%p175) target = $region20
      $region19: #{decoder_forward.9} parent=11 // pred_region
        _
      $region20: #{decoder_forward.9} parent=11 // pred_fallthru
        _
    $region12: #{decoder_forward.9} parent=5 // pred_fallthru
      _
    %p178 = scmp.lt.s32.totalorder %s10, 2
    // Predicated region
    $region21: #{decoder_forward.9} parent=5 // pred_check
      %p179 = pneg %p178
    $region22: #{decoder_forward.9} parent=5 // pred_check_branch
      %181 = sbr.rel (%p179) target = $region24
    $region23: #{decoder_forward.9} parent=5 // pred_region
      // Predicated region
      $region25: #{decoder_forward.9} parent=23 // pred_check
        %p182 = pneg %p44
      $region26: #{decoder_forward.9} parent=23 // pred_check_branch
        %184 = sbr.rel (%p182) target = $region28
      $region27: #{decoder_forward.9} parent=23 // pred_region
        %s185 = smul.u32 2, %s18
        %p186 = scmp.lt.s32.totalorder %s17, 1
        %s187 = scalar_select %p186, %s17, 1
        %p188 = scmp.lt.s32.totalorder %s185, 1
        %s189 = scalar_select %p188, %s185, 1
        %s190 = smul.addr %s189, 2
        %s191 = smul.addr %s187, 4
        %s192 = sadd.s32 %s190, %s191
        %s193 = smul.addr %s192, 8
        %s194 = scalar_lea.vmem %s0, %s193
        %s195 = smul.u32 2, %s18
      $region28: #{decoder_forward.9} parent=23 // pred_fallthru
        _
      // Predicated region
      $region29: #{decoder_forward.9} parent=23 // pred_check
        %p196 = pneg %p70
      $region30: #{decoder_forward.9} parent=23 // pred_check_branch
        %198 = sbr.rel (%p196) target = $region32
      $region31: #{decoder_forward.9} parent=23 // pred_region
        %p199 = scmp.lt.s32.totalorder %s17, 1
        %s200 = scalar_select %p199, %s17, 1
        %s201 = smul.addr %s200, 4
        %s202 = smul.addr %s201, 8
        %s203 = scalar_lea.vmem %s1, %s202
      $region32: #{decoder_forward.9} parent=23 // pred_fallthru
        _
    $region24: #{decoder_forward.9} parent=5 // pred_fallthru
      _
    %p204 = scmp.le.s32.totalorder 1, %s10
    %p205 = scmp.lt.s32.totalorder %s10, 3
    %p206 = pnand %p204, %p205
    %p207 = pneg %p206
    // Predicated region
    $region33: #{decoder_forward.9} parent=5 // pred_check
      _
    $region34: #{decoder_forward.9} parent=5 // pred_check_branch
      %209 = sbr.rel (%p206) target = $region36
    $region35: #{decoder_forward.9} parent=5 // pred_region
      %s210 = ssub.s32 %s10, 1
      %s211 = smul.u32 2, %s20
      %p212 = scmp.lt.s32.totalorder %s19, 1
      %s213 = scalar_select %p212, %s19, 1
      %p214 = scmp.lt.s32.totalorder %s211, 1
      %s215 = scalar_select %p214, %s211, 1
      %s216 = smul.addr %s215, 2
      %s217 = smul.addr %s213, 4
      %s218 = sadd.s32 %s216, %s217
      %s219 = smul.addr %s218, 8
      %s220 = scalar_lea.vmem %s0, %s219
      %p221 = pneg %p50
      %p222 = pneg %p47
      %p223 = scmp.lt.s32.totalorder %s19, 1
      %s224 = scalar_select %p223, %s19, 1
      %s225 = smul.addr %s224, 4
      %s226 = smul.addr %s225, 8
      %s227 = scalar_lea.vmem %s1, %s226
      %p228 = pneg %p76
      %p229 = pneg %p73
      %s230 = smul.u32 2, %s20
      %p231 = scmp.lt.s32.totalorder %s230, 1
      %s232 = scalar_select %p231, %s230, 1
      %s233 = smul.addr %s232, 8
      %s234 = scalar_lea.vmem %s2, %s233
      %p235 = pneg %p102
      %p236 = pneg %p99
      %p237 = pneg %p123
      %p238 = pneg %p120
      %p239 = pneg %p151
      %p240 = pneg %p148
      %s241 = smul.u32 2, %s20
      %p242 = scmp.lt.s32.totalorder %s19, 1
      %s243 = scalar_select %p242, %s19, 1
      %p244 = scmp.lt.s32.totalorder %s241, 1
      %s245 = scalar_select %p244, %s241, 1
      %s246 = smul.addr %s243, 2
      %s247 = sadd.s32 %s245, %s246
      %s248 = smul.addr %s247, 8
      %s249 = scalar_lea.vmem %s4, %s248
      %s250 = smul.u32 2, %s20
      %p251 = scmp.lt.s32.totalorder %s19, 1
      %s252 = scalar_select %p251, %s19, 1
      %p253 = scmp.lt.s32.totalorder %s250, 1
      %s254 = scalar_select %p253, %s250, 1
      %s255 = smul.addr %s254, 2
      %s256 = smul.addr %s252, 4
      %s257 = sadd.s32 %s255, %s256
      %s258 = smul.addr %s257, 8
      %s259 = scalar_lea.vmem %s0, %s258
      %s260 = smul.u32 2, %s20
      %p261 = scmp.lt.s32.totalorder %s19, 1
      %s262 = scalar_select %p261, %s19, 1
      %s263 = smul.addr %s262, 4
      %s264 = smul.addr %s263, 8
      %s265 = scalar_lea.vmem %s1, %s264
      %s266 = smul.u32 2, %s20
      %p267 = scmp.lt.s32.totalorder %s266, 1
      %s268 = scalar_select %p267, %s266, 1
      %s269 = smul.addr %s268, 8
      %s270 = scalar_lea.vmem %s2, %s269
      %s271 = smul.u32 2, %s20
      %s272 = smul.u32 2, %s20
      %p273 = scmp.lt.s32.totalorder %s19, 1
      %s274 = scalar_select %p273, %s19, 1
      %p275 = scmp.lt.s32.totalorder %s272, 1
      %s276 = scalar_select %p275, %s272, 1
      %s277 = smul.addr %s274, 2
      %s278 = sadd.s32 %s276, %s277
      %s279 = smul.addr %s278, 8
      %s280 = scalar_lea.vmem %s4, %s279
      %s281 = smul.u32 2, %s20
      %v282 = vld [vmem:[%s270] sm:$0xff]
      %v283 = vld [vmem:[%s270 + $0x8] sm:$0xff]
      %v284 = vld [vmem:[%s3] sm:$0xff]
      %v285 = vld [vmem:[%s3 + $0x8] sm:$0xff]
      %s286 = smul.u32 %s20, 16
      %v287 = vlaneseq
      %v288 = vshrl.u32 %v287, 7
      %v289 = vadd.s32 %v288, 8
      %v290 = vstv %s286
      %v291 = vadd.s32 %v290, %v288
      %v292 = vadd.s32 %v290, %v289
      %v293 = vlaneseq
      %v294 = vand.u32 %v293, 127
      %vm295 = vcmp.le.s32.totalorder %v294, %v291
      %vm296 = vcmp.le.s32.totalorder %v294, %v292
      %v297 = vadd.s32 %v294, 8
      %vm298 = vcmp.lt.s32.totalorder %v291, %v297
      %vm299 = vcmp.lt.s32.totalorder %v292, %v297
      %vm300 = vmand %vm295, %vm298
      %vm301 = vmand %vm296, %vm299
      %v302 = vld [vmem:[%s259] sm:$0xff]
      %v303 = vld [vmem:[%s259 + $0x10] sm:$0xff]
      %v304 = vmul.f32 %v302, %v302
      %v305 = vmul.f32 %v303, %v303
      %vm306 = vcmask 130048
      %v307 = vsel %vm306, %v304, 0.0
      %308 = vadd.xlane.f32.xlu0 %v307
      %v309 = vpop.xlane.xlu0 %308
      %v310 = vsel %vm306, %v305, 0.0
      %311 = vadd.xlane.f32.xlu0 %v310
      %v312 = vpop.xlane.xlu0 %311
      %v313 = vrcp.pop 16.0
      %v314 = vmul.f32 %v309, %v313
      %v315 = vmul.f32 %v312, %v313
      %v316 = vadd.f32 %v314, 1.1920929e-07
      %v317 = vadd.f32 %v315, 1.1920929e-07
      %v318 = vrsqrt.pop %v316
      %v319 = vrsqrt.pop %v317
      %v320 = vmul.f32 %v302, %v318
      %v321 = vmul.f32 %v303, %v319
      %v322 = vld [vmem:[%s265] sm:$0xff]
      %v323 = vld [vmem:[%s265 + $0x10] sm:$0xff]
      %v324 = vmul.f32 %v322, %v322
      %v325 = vmul.f32 %v323, %v323
      %328 = vrot.lane.b32.xlu0 %v324, 64
      %v329 = vpop.permute.xlu0 %328
      %330 = vrot.lane.b32.xlu0 %v325, 64
      %v331 = vpop.permute.xlu0 %330
      %v334 = vsel %vm306, %v329, 0.0
      %335 = vadd.xlane.f32.xlu0 %v334
      %v336 = vpop.xlane.xlu0 %335
      %v337 = vsel %vm306, %v331, 0.0
      %338 = vadd.xlane.f32.xlu0 %v337
      %v339 = vpop.xlane.xlu0 %338
      %v340 = vmul.f32 %v336, %v313
      %v341 = vmul.f32 %v339, %v313
      %v342 = vadd.f32 %v340, 1.1920929e-07
      %v343 = vadd.f32 %v341, 1.1920929e-07
      %v344 = vrsqrt.pop %v342
      %v345 = vrsqrt.pop %v343
      %v346 = vmul.f32 %v322, %v344
      %v347 = vmul.f32 %v323, %v345
      %v348 = vld [vmem:[%s265 + $0x8] sm:$0xff]
      %v349 = vld [vmem:[%s265 + $0x18] sm:$0xff]
      %v350 = vmul.f32 %v320, %v282
      %v351 = vmul.f32 %v321, %v283
      %354 = vrot.lane.b32.xlu0 %v350, 120
      %v355 = vpop.permute.xlu0 %354
      %356 = vrot.lane.b32.xlu0 %v351, 120
      %v357 = vpop.permute.xlu0 %356
      %v360 = vadd.f32 %v350, %v355
      %v361 = vadd.f32 %v351, %v357
      %364 = vrot.lane.b32.xlu0 %v282, 8
      %v365 = vpop.permute.xlu0 %364
      %366 = vrot.lane.b32.xlu0 %v283, 8
      %v367 = vpop.permute.xlu0 %366
      %v370 = vmul.f32 %v320, %v365
      %v371 = vmul.f32 %v321, %v367
      %372 = vrot.lane.b32.xlu0 %v282, 120
      %v373 = vpop.permute.xlu0 %372
      %374 = vrot.lane.b32.xlu0 %v283, 120
      %v375 = vpop.permute.xlu0 %374
      %v378 = vmul.f32 %v320, %v373
      %v379 = vmul.f32 %v321, %v375
      %382 = vrot.lane.b32.xlu0 %v378, 8
      %v383 = vpop.permute.xlu0 %382
      %384 = vrot.lane.b32.xlu0 %v379, 8
      %v385 = vpop.permute.xlu0 %384
      %v388 = vsub.f32 %v370, %v383
      %v389 = vsub.f32 %v371, %v385
      %392 = vrot.lane.b32.xlu0 %v284, 64
      %v393 = vpop.permute.xlu0 %392
      %394 = vrot.lane.b32.xlu0 %v285, 64
      %v395 = vpop.permute.xlu0 %394
      %v398 = vmul.f32 %v346, %v393
      %v399 = vmul.f32 %v347, %v395
      %402 = vrot.lane.b32.xlu0 %v398, 120
      %v403 = vpop.permute.xlu0 %402
      %404 = vrot.lane.b32.xlu0 %v399, 120
      %v405 = vpop.permute.xlu0 %404
      %v408 = vadd.f32 %v398, %v403
      %v409 = vadd.f32 %v399, %v405
      %410 = vrot.lane.b32.xlu0 %v284, 72
      %v411 = vpop.permute.xlu0 %410
      %412 = vrot.lane.b32.xlu0 %v285, 72
      %v413 = vpop.permute.xlu0 %412
      %v416 = vmul.f32 %v346, %v411
      %v417 = vmul.f32 %v347, %v413
      %418 = vrot.lane.b32.xlu0 %v284, 56
      %v419 = vpop.permute.xlu0 %418
      %420 = vrot.lane.b32.xlu0 %v285, 56
      %v421 = vpop.permute.xlu0 %420
      %v424 = vmul.f32 %v346, %v419
      %v425 = vmul.f32 %v347, %v421
      %428 = vrot.lane.b32.xlu0 %v424, 8
      %v429 = vpop.permute.xlu0 %428
      %430 = vrot.lane.b32.xlu0 %v425, 8
      %v431 = vpop.permute.xlu0 %430
      %v434 = vsub.f32 %v416, %v429
      %v435 = vsub.f32 %v417, %v431
      %438 = vrot.lane.b32.xlu0 %v388, 120
      %v439 = vpop.permute.xlu0 %438
      %440 = vrot.lane.b32.xlu0 %v389, 120
      %v441 = vpop.permute.xlu0 %440
      %444 = vrot.lane.b32.xlu0 %v434, 56
      %v445 = vpop.permute.xlu0 %444
      %446 = vrot.lane.b32.xlu0 %v435, 56
      %v447 = vpop.permute.xlu0 %446
      %vm448 = vcmask 64512
      %v449 = vsel %vm448, %v439, 0
      %v451 = vsel %vm448, %v441, 0
      %v453 = vsel %vm448, %v445, 0
      %v455 = vsel %vm448, %v447, 0
      %457 = vmatprep.subr.mxu0 0.0
      %458 = vmatpush1.xpose.msra.mxu0 %v453
      %459 = vmatprep.subr.mxu0 0.0
      %460 = vmatpush1.xpose.msra.mxu0 %v455
      %461 = vmatprep.subr.mxu0 0.0
      %462 = vmatpush1.xpose.msra.mxu0 0.0
      %463 = vmatprep.subr.mxu0 0.0
      %464 = vmatpush1.xpose.msra.mxu0 0.0
      %465 = vmatprep.subr.mxu0 0.0
      %466 = vmatpush1.xpose.msra.mxu0 0.0
      %467 = vmatprep.subr.mxu0 0.0
      %468 = vmatpush1.xpose.msra.mxu0 0.0
      %469 = vmatprep.subr.mxu0 0.0
      %470 = vmatpush1.xpose.msra.mxu0 0.0
      %471 = vmatprep.subr.mxu0 0.0
      %472 = vmatpush1.xpose.msra.mxu0 0.0
      %473 = vmatprep.subr.mxu0 0.0
      %474 = vmatpush1.xpose.msra.mxu0 0.0
      %475 = vmatprep.subr.mxu0 0.0
      %476 = vmatpush1.xpose.msra.mxu0 0.0
      %477 = vmatprep.subr.mxu0 0.0
      %478 = vmatpush1.xpose.msra.mxu0 0.0
      %479 = vmatprep.subr.mxu0 0.0
      %480 = vmatpush1.xpose.msra.mxu0 0.0
      %481 = vmatprep.subr.mxu0 0.0
      %482 = vmatpush1.xpose.msra.mxu0 0.0
      %483 = vmatprep.subr.mxu0 0.0
      %484 = vmatpush1.xpose.msra.mxu0 0.0
      %485 = vmatprep.subr.mxu0 0.0
      %486 = vmatpush1.xpose.msra.mxu0 0.0
      %487 = vmatprep.subr.mxu0 0.0
      %488 = vmatpush1.xpose.msra.mxu0 0.0
      %489 = vmatprep.subr.mxu0 0.0
      %490 = vmatpush1.xpose.msra.mxu0 0.0
      %491 = vmatprep.subr.mxu0 0.0
      %492 = vmatpush1.xpose.msra.mxu0 0.0
      %493 = vmatprep.subr.mxu0 0.0
      %494 = vmatpush1.xpose.msra.mxu0 0.0
      %495 = vmatprep.subr.mxu0 0.0
      %496 = vmatpush1.xpose.msra.mxu0 0.0
      %497 = vmatprep.subr.mxu0 0.0
      %498 = vmatpush1.xpose.msra.mxu0 0.0
      %499 = vmatprep.subr.mxu0 0.0
      %500 = vmatpush1.xpose.msra.mxu0 0.0
      %501 = vmatprep.subr.mxu0 0.0
      %502 = vmatpush1.xpose.msra.mxu0 0.0
      %503 = vmatprep.subr.mxu0 0.0
      %504 = vmatpush1.xpose.msra.mxu0 0.0
      %505 = vmatprep.subr.mxu0 0.0
      %506 = vmatpush1.xpose.msra.mxu0 0.0
      %507 = vmatprep.subr.mxu0 0.0
      %508 = vmatpush1.xpose.msra.mxu0 0.0
      %509 = vmatprep.subr.mxu0 0.0
      %510 = vmatpush1.xpose.msra.mxu0 0.0
      %511 = vmatprep.subr.mxu0 0.0
      %512 = vmatpush1.xpose.msra.mxu0 0.0
      %513 = vmatprep.subr.mxu0 0.0
      %514 = vmatpush1.xpose.msra.mxu0 0.0
      %515 = vmatprep.subr.mxu0 0.0
      %516 = vmatpush1.xpose.msra.mxu0 0.0
      %517 = vmatprep.subr.mxu0 0.0
      %518 = vmatpush1.xpose.msra.mxu0 0.0
      %519 = vmatprep.subr.mxu0 0.0
      %520 = vmatpush1.xpose.msra.mxu0 0.0
      %521 = vmatprep.mubr.f32.mxu0 0.0
      %522 = vmatmul.mubr.f32.gmra.mrb[0].mxu0 %v449
      %v523 = vpop.f32.mrb[0].mxu0
      %v524 = vadd.f32 0.0, %v523
      %v525 = vpop.f32.mrb[0].mxu0
      %526 = vmatprep.mubr.f32.mxu0 0.0
      %527 = vmatmul.mubr.f32.gmra.mrb[0].mxu0 %v451
      %v528 = vpop.f32.mrb[0].mxu0
      %v529 = vadd.f32 0.0, %v528
      %v530 = vpop.f32.mrb[0].mxu0
      %531 = vdwg.mxu0
      %534 = vrot.lane.b32.xlu0 %v408, 64
      %v535 = vpop.permute.xlu0 %534
      %536 = vrot.lane.b32.xlu0 %v409, 64
      %v537 = vpop.permute.xlu0 %536
      %v539 = vsel %vm448, %v360, 0
      %v542 = vsel %vm448, %v361, 0
      %v544 = vsel %vm448, %v535, 0
      %v546 = vsel %vm448, %v537, 0
      %548 = vmatprep.subr.mxu0 0.0
      %549 = vmatpush1.xpose.msra.mxu0 %v544
      %550 = vmatprep.subr.mxu0 0.0
      %551 = vmatpush1.xpose.msra.mxu0 %v546
      %552 = vmatprep.subr.mxu0 0.0
      %553 = vmatpush1.xpose.msra.mxu0 0.0
      %554 = vmatprep.subr.mxu0 0.0
      %555 = vmatpush1.xpose.msra.mxu0 0.0
      %556 = vmatprep.subr.mxu0 0.0
      %557 = vmatpush1.xpose.msra.mxu0 0.0
      %558 = vmatprep.subr.mxu0 0.0
      %559 = vmatpush1.xpose.msra.mxu0 0.0
      %560 = vmatprep.subr.mxu0 0.0
      %561 = vmatpush1.xpose.msra.mxu0 0.0
      %562 = vmatprep.subr.mxu0 0.0
      %563 = vmatpush1.xpose.msra.mxu0 0.0
      %564 = vmatprep.subr.mxu0 0.0
      %565 = vmatpush1.xpose.msra.mxu0 0.0
      %566 = vmatprep.subr.mxu0 0.0
      %567 = vmatpush1.xpose.msra.mxu0 0.0
      %568 = vmatprep.subr.mxu0 0.0
      %569 = vmatpush1.xpose.msra.mxu0 0.0
      %570 = vmatprep.subr.mxu0 0.0
      %571 = vmatpush1.xpose.msra.mxu0 0.0
      %572 = vmatprep.subr.mxu0 0.0
      %573 = vmatpush1.xpose.msra.mxu0 0.0
      %574 = vmatprep.subr.mxu0 0.0
      %575 = vmatpush1.xpose.msra.mxu0 0.0
      %576 = vmatprep.subr.mxu0 0.0
      %577 = vmatpush1.xpose.msra.mxu0 0.0
      %578 = vmatprep.subr.mxu0 0.0
      %579 = vmatpush1.xpose.msra.mxu0 0.0
      %580 = vmatprep.subr.mxu0 0.0
      %581 = vmatpush1.xpose.msra.mxu0 0.0
      %582 = vmatprep.subr.mxu0 0.0
      %583 = vmatpush1.xpose.msra.mxu0 0.0
      %584 = vmatprep.subr.mxu0 0.0
      %585 = vmatpush1.xpose.msra.mxu0 0.0
      %586 = vmatprep.subr.mxu0 0.0
      %587 = vmatpush1.xpose.msra.mxu0 0.0
      %588 = vmatprep.subr.mxu0 0.0
      %589 = vmatpush1.xpose.msra.mxu0 0.0
      %590 = vmatprep.subr.mxu0 0.0
      %591 = vmatpush1.xpose.msra.mxu0 0.0
      %592 = vmatprep.subr.mxu0 0.0
      %593 = vmatpush1.xpose.msra.mxu0 0.0
      %594 = vmatprep.subr.mxu0 0.0
      %595 = vmatpush1.xpose.msra.mxu0 0.0
      %596 = vmatprep.subr.mxu0 0.0
      %597 = vmatpush1.xpose.msra.mxu0 0.0
      %598 = vmatprep.subr.mxu0 0.0
      %599 = vmatpush1.xpose.msra.mxu0 0.0
      %600 = vmatprep.subr.mxu0 0.0
      %601 = vmatpush1.xpose.msra.mxu0 0.0
      %602 = vmatprep.subr.mxu0 0.0
      %603 = vmatpush1.xpose.msra.mxu0 0.0
      %604 = vmatprep.subr.mxu0 0.0
      %605 = vmatpush1.xpose.msra.mxu0 0.0
      %606 = vmatprep.subr.mxu0 0.0
      %607 = vmatpush1.xpose.msra.mxu0 0.0
      %608 = vmatprep.subr.mxu0 0.0
      %609 = vmatpush1.xpose.msra.mxu0 0.0
      %610 = vmatprep.subr.mxu0 0.0
      %611 = vmatpush1.xpose.msra.mxu0 0.0
      %612 = vmatprep.mubr.f32.mxu0 0.0
      %613 = vmatmul.mubr.f32.gmra.mrb[0].mxu0 %v539
      %v614 = vpop.f32.mrb[0].mxu0
      %v615 = vadd.f32 %v524, %v614
      %v616 = vpop.f32.mrb[0].mxu0
      %617 = vmatprep.mubr.f32.mxu0 0.0
      %618 = vmatmul.mubr.f32.gmra.mrb[0].mxu0 %v542
      %v619 = vpop.f32.mrb[0].mxu0
      %v620 = vadd.f32 %v529, %v619
      %v621 = vpop.f32.mrb[0].mxu0
      %622 = vdwg.mxu0
      %v623 = vmul.f32 %v615, 0.25
      %v624 = vmul.f32 %v620, 0.25
      %v625 = vsel %vm300, %v623, -inf
      %v626 = vsel %vm301, %v624, -inf
      %v627 = vsel %vm306, %v625, -inf
      %628 = vmax.xlane.f32.xlu0 %v627
      %v629 = vpop.xlane.xlu0 %628
      %v630 = vsel %vm306, %v626, -inf
      %631 = vmax.xlane.f32.xlu0 %v630
      %v632 = vpop.xlane.xlu0 %631
      %v633 = vsub.f32 %v625, %v629
      %v634 = vsub.f32 %v626, %v632
      %v635 = vmul.f32 %v633, 1.442695
      %v636 = vpow.pop %v635
      %v637 = vmul.f32 %v634, 1.442695
      %v638 = vpow.pop %v637
      %v639 = vsel %vm306, %v636, 0.0
      %640 = vadd.xlane.f32.xlu0 %v639
      %v641 = vpop.xlane.xlu0 %640
      %v642 = vsel %vm306, %v638, 0.0
      %643 = vadd.xlane.f32.xlu0 %v642
      %v644 = vpop.xlane.xlu0 %643
      %v646 = vsel %vm306, %v636, 0
      %v649 = vsel %vm306, %v638, 0
      %651 = vmatprep.subr.mxu0 0.0
      %652 = vmatpush1.msra.mxu0 %v348
      %653 = vmatprep.subr.mxu0 0.0
      %654 = vmatpush1.msra.mxu0 %v349
      %655 = vmatprep.subr.mxu0 0.0
      %656 = vmatpush1.msra.mxu0 0.0
      %657 = vmatprep.subr.mxu0 0.0
      %658 = vmatpush1.msra.mxu0 0.0
      %659 = vmatprep.subr.mxu0 0.0
      %660 = vmatpush1.msra.mxu0 0.0
      %661 = vmatprep.subr.mxu0 0.0
      %662 = vmatpush1.msra.mxu0 0.0
      %663 = vmatprep.subr.mxu0 0.0
      %664 = vmatpush1.msra.mxu0 0.0
      %665 = vmatprep.subr.mxu0 0.0
      %666 = vmatpush1.msra.mxu0 0.0
      %667 = vmatprep.subr.mxu0 0.0
      %668 = vmatpush1.msra.mxu0 0.0
      %669 = vmatprep.subr.mxu0 0.0
      %670 = vmatpush1.msra.mxu0 0.0
      %671 = vmatprep.subr.mxu0 0.0
      %672 = vmatpush1.msra.mxu0 0.0
      %673 = vmatprep.subr.mxu0 0.0
      %674 = vmatpush1.msra.mxu0 0.0
      %675 = vmatprep.subr.mxu0 0.0
      %676 = vmatpush1.msra.mxu0 0.0
      %677 = vmatprep.subr.mxu0 0.0
      %678 = vmatpush1.msra.mxu0 0.0
      %679 = vmatprep.subr.mxu0 0.0
      %680 = vmatpush1.msra.mxu0 0.0
      %681 = vmatprep.subr.mxu0 0.0
      %682 = vmatpush1.msra.mxu0 0.0
      %683 = vmatprep.subr.mxu0 0.0
      %684 = vmatpush1.msra.mxu0 0.0
      %685 = vmatprep.subr.mxu0 0.0
      %686 = vmatpush1.msra.mxu0 0.0
      %687 = vmatprep.subr.mxu0 0.0
      %688 = vmatpush1.msra.mxu0 0.0
      %689 = vmatprep.subr.mxu0 0.0
      %690 = vmatpush1.msra.mxu0 0.0
      %691 = vmatprep.subr.mxu0 0.0
      %692 = vmatpush1.msra.mxu0 0.0
      %693 = vmatprep.subr.mxu0 0.0
      %694 = vmatpush1.msra.mxu0 0.0
      %695 = vmatprep.subr.mxu0 0.0
      %696 = vmatpush1.msra.mxu0 0.0
      %697 = vmatprep.subr.mxu0 0.0
      %698 = vmatpush1.msra.mxu0 0.0
      %699 = vmatprep.subr.mxu0 0.0
      %700 = vmatpush1.msra.mxu0 0.0
      %701 = vmatprep.subr.mxu0 0.0
      %702 = vmatpush1.msra.mxu0 0.0
      %703 = vmatprep.subr.mxu0 0.0
      %704 = vmatpush1.msra.mxu0 0.0
      %705 = vmatprep.subr.mxu0 0.0
      %706 = vmatpush1.msra.mxu0 0.0
      %707 = vmatprep.subr.mxu0 0.0
      %708 = vmatpush1.msra.mxu0 0.0
      %709 = vmatprep.subr.mxu0 0.0
      %710 = vmatpush1.msra.mxu0 0.0
      %711 = vmatprep.subr.mxu0 0.0
      %712 = vmatpush1.msra.mxu0 0.0
      %713 = vmatprep.subr.mxu0 0.0
      %714 = vmatpush1.msra.mxu0 0.0
      %715 = vmatprep.mubr.f32.mxu0 0.0
      %716 = vmatmul.mubr.f32.gmra.mrb[0].mxu0 %v646
      %v717 = vpop.f32.mrb[0].mxu0
      %v718 = vadd.f32 0.0, %v717
      %v719 = vpop.f32.mrb[0].mxu0
      %720 = vmatprep.mubr.f32.mxu0 0.0
      %721 = vmatmul.mubr.f32.gmra.mrb[0].mxu0 %v649
      %v722 = vpop.f32.mrb[0].mxu0
      %v723 = vadd.f32 0.0, %v722
      %v724 = vpop.f32.mrb[0].mxu0
      %725 = vdwg.mxu0
      %v726 = vrcp.pop %v641
      %v727 = vmul.f32 %v718, %v726
      %v728 = vrcp.pop %v644
      %v729 = vmul.f32 %v723, %v728
      %730 = vst.msk [vmem:[%s280] sm:$0xff] %vm306, %v727
      %731 = vst.msk [vmem:[%s280 + $0x8] sm:$0xff] %vm306, %v729
      %v732 = vld [vmem:[%s259] sm:$0xff]
      %v733 = vld [vmem:[%s259 + $0x10] sm:$0xff]
      %v734 = vmul.f32 %v732, %v732
      %v735 = vmul.f32 %v733, %v733
      %738 = vrot.lane.b32.xlu0 %v734, 112
      %v739 = vpop.permute.xlu0 %738
      %740 = vrot.lane.b32.xlu0 %v735, 112
      %v741 = vpop.permute.xlu0 %740
      %v744 = vsel %vm306, %v739, 0.0
      %745 = vadd.xlane.f32.xlu0 %v744
      %v746 = vpop.xlane.xlu0 %745
      %v747 = vsel %vm306, %v741, 0.0
      %748 = vadd.xlane.f32.xlu0 %v747
      %v749 = vpop.xlane.xlu0 %748
      %v750 = vmul.f32 %v746, %v313
      %v751 = vmul.f32 %v749, %v313
      %v752 = vadd.f32 %v750, 1.1920929e-07
      %v753 = vadd.f32 %v751, 1.1920929e-07
      %v754 = vrsqrt.pop %v752
      %v755 = vrsqrt.pop %v753
      %v756 = vmul.f32 %v732, %v754
      %v757 = vmul.f32 %v733, %v755
      %v758 = vld [vmem:[%s265] sm:$0xff]
      %v759 = vld [vmem:[%s265 + $0x10] sm:$0xff]
      %v760 = vmul.f32 %v758, %v758
      %v761 = vmul.f32 %v759, %v759
      %764 = vrot.lane.b32.xlu0 %v760, 48
      %v765 = vpop.permute.xlu0 %764
      %766 = vrot.lane.b32.xlu0 %v761, 48
      %v767 = vpop.permute.xlu0 %766
      %v770 = vsel %vm306, %v765, 0.0
      %771 = vadd.xlane.f32.xlu0 %v770
      %v772 = vpop.xlane.xlu0 %771
      %v773 = vsel %vm306, %v767, 0.0
      %774 = vadd.xlane.f32.xlu0 %v773
      %v775 = vpop.xlane.xlu0 %774
      %v776 = vmul.f32 %v772, %v313
      %v777 = vmul.f32 %v775, %v313
      %v778 = vadd.f32 %v776, 1.1920929e-07
      %v779 = vadd.f32 %v777, 1.1920929e-07
      %v780 = vrsqrt.pop %v778
      %v781 = vrsqrt.pop %v779
      %v782 = vmul.f32 %v758, %v780
      %v783 = vmul.f32 %v759, %v781
      %v784 = vld [vmem:[%s265 + $0x8] sm:$0xff]
      %v785 = vld [vmem:[%s265 + $0x18] sm:$0xff]
      %786 = vrot.lane.b32.xlu0 %v282, 16
      %v787 = vpop.permute.xlu0 %786
      %788 = vrot.lane.b32.xlu0 %v283, 16
      %v789 = vpop.permute.xlu0 %788
      %v792 = vmul.f32 %v756, %v787
      %v793 = vmul.f32 %v757, %v789
      %796 = vrot.lane.b32.xlu0 %v792, 120
      %v797 = vpop.permute.xlu0 %796
      %798 = vrot.lane.b32.xlu0 %v793, 120
      %v799 = vpop.permute.xlu0 %798
      %v802 = vadd.f32 %v792, %v797
      %v803 = vadd.f32 %v793, %v799
      %804 = vrot.lane.b32.xlu0 %v282, 24
      %v805 = vpop.permute.xlu0 %804
      %806 = vrot.lane.b32.xlu0 %v283, 24
      %v807 = vpop.permute.xlu0 %806
      %v810 = vmul.f32 %v756, %v805
      %v811 = vmul.f32 %v757, %v807
      %v812 = vmul.f32 %v756, %v365
      %v813 = vmul.f32 %v757, %v367
      %816 = vrot.lane.b32.xlu0 %v812, 8
      %v817 = vpop.permute.xlu0 %816
      %818 = vrot.lane.b32.xlu0 %v813, 8
      %v819 = vpop.permute.xlu0 %818
      %v822 = vsub.f32 %v810, %v817
      %v823 = vsub.f32 %v811, %v819
      %824 = vrot.lane.b32.xlu0 %v284, 80
      %v825 = vpop.permute.xlu0 %824
      %826 = vrot.lane.b32.xlu0 %v285, 80
      %v827 = vpop.permute.xlu0 %826
      %v830 = vmul.f32 %v782, %v825
      %v831 = vmul.f32 %v783, %v827
      %834 = vrot.lane.b32.xlu0 %v830, 120
      %v835 = vpop.permute.xlu0 %834
      %836 = vrot.lane.b32.xlu0 %v831, 120
      %v837 = vpop.permute.xlu0 %836
      %v840 = vadd.f32 %v830, %v835
      %v841 = vadd.f32 %v831, %v837
      %842 = vrot.lane.b32.xlu0 %v284, 88
      %v843 = vpop.permute.xlu0 %842
      %844 = vrot.lane.b32.xlu0 %v285, 88
      %v845 = vpop.permute.xlu0 %844
      %v848 = vmul.f32 %v782, %v843
      %v849 = vmul.f32 %v783, %v845
      %v850 = vmul.f32 %v782, %v411
      %v851 = vmul.f32 %v783, %v413
      %854 = vrot.lane.b32.xlu0 %v850, 8
      %v855 = vpop.permute.xlu0 %854
      %856 = vrot.lane.b32.xlu0 %v851, 8
      %v857 = vpop.permute.xlu0 %856
      %v860 = vsub.f32 %v848, %v855
      %v861 = vsub.f32 %v849, %v857
      %864 = vrot.lane.b32.xlu0 %v822, 104
      %v865 = vpop.permute.xlu0 %864
      %866 = vrot.lane.b32.xlu0 %v823, 104
      %v867 = vpop.permute.xlu0 %866
      %870 = vrot.lane.b32.xlu0 %v860, 40
      %v871 = vpop.permute.xlu0 %870
      %872 = vrot.lane.b32.xlu0 %v861, 40
      %v873 = vpop.permute.xlu0 %872
      %v874 = vsel %vm448, %v865, 0
      %v876 = vsel %vm448, %v867, 0
      %v878 = vsel %vm448, %v871, 0
      %v880 = vsel %vm448, %v873, 0
      %882 = vmatprep.subr.mxu0 0.0
      %883 = vmatpush1.xpose.msra.mxu0 %v878
      %884 = vmatprep.subr.mxu0 0.0
      %885 = vmatpush1.xpose.msra.mxu0 %v880
      %886 = vmatprep.subr.mxu0 0.0
      %887 = vmatpush1.xpose.msra.mxu0 0.0
      %888 = vmatprep.subr.mxu0 0.0
      %889 = vmatpush1.xpose.msra.mxu0 0.0
      %890 = vmatprep.subr.mxu0 0.0
      %891 = vmatpush1.xpose.msra.mxu0 0.0
      %892 = vmatprep.subr.mxu0 0.0
      %893 = vmatpush1.xpose.msra.mxu0 0.0
      %894 = vmatprep.subr.mxu0 0.0
      %895 = vmatpush1.xpose.msra.mxu0 0.0
      %896 = vmatprep.subr.mxu0 0.0
      %897 = vmatpush1.xpose.msra.mxu0 0.0
      %898 = vmatprep.subr.mxu0 0.0
      %899 = vmatpush1.xpose.msra.mxu0 0.0
      %900 = vmatprep.subr.mxu0 0.0
      %901 = vmatpush1.xpose.msra.mxu0 0.0
      %902 = vmatprep.subr.mxu0 0.0
      %903 = vmatpush1.xpose.msra.mxu0 0.0
      %904 = vmatprep.subr.mxu0 0.0
      %905 = vmatpush1.xpose.msra.mxu0 0.0
      %906 = vmatprep.subr.mxu0 0.0
      %907 = vmatpush1.xpose.msra.mxu0 0.0
      %908 = vmatprep.subr.mxu0 0.0
      %909 = vmatpush1.xpose.msra.mxu0 0.0
      %910 = vmatprep.subr.mxu0 0.0
      %911 = vmatpush1.xpose.msra.mxu0 0.0
      %912 = vmatprep.subr.mxu0 0.0
      %913 = vmatpush1.xpose.msra.mxu0 0.0
      %914 = vmatprep.subr.mxu0 0.0
      %915 = vmatpush1.xpose.msra.mxu0 0.0
      %916 = vmatprep.subr.mxu0 0.0
      %917 = vmatpush1.xpose.msra.mxu0 0.0
      %918 = vmatprep.subr.mxu0 0.0
      %919 = vmatpush1.xpose.msra.mxu0 0.0
      %920 = vmatprep.subr.mxu0 0.0
      %921 = vmatpush1.xpose.msra.mxu0 0.0
      %922 = vmatprep.subr.mxu0 0.0
      %923 = vmatpush1.xpose.msra.mxu0 0.0
      %924 = vmatprep.subr.mxu0 0.0
      %925 = vmatpush1.xpose.msra.mxu0 0.0
      %926 = vmatprep.subr.mxu0 0.0
      %927 = vmatpush1.xpose.msra.mxu0 0.0
      %928 = vmatprep.subr.mxu0 0.0
      %929 = vmatpush1.xpose.msra.mxu0 0.0
      %930 = vmatprep.subr.mxu0 0.0
      %931 = vmatpush1.xpose.msra.mxu0 0.0
      %932 = vmatprep.subr.mxu0 0.0
      %933 = vmatpush1.xpose.msra.mxu0 0.0
      %934 = vmatprep.subr.mxu0 0.0
      %935 = vmatpush1.xpose.msra.mxu0 0.0
      %936 = vmatprep.subr.mxu0 0.0
      %937 = vmatpush1.xpose.msra.mxu0 0.0
      %938 = vmatprep.subr.mxu0 0.0
      %939 = vmatpush1.xpose.msra.mxu0 0.0
      %940 = vmatprep.subr.mxu0 0.0
      %941 = vmatpush1.xpose.msra.mxu0 0.0
      %942 = vmatprep.subr.mxu0 0.0
      %943 = vmatpush1.xpose.msra.mxu0 0.0
      %944 = vmatprep.subr.mxu0 0.0
      %945 = vmatpush1.xpose.msra.mxu0 0.0
      %946 = vmatprep.mubr.f32.mxu0 0.0
      %947 = vmatmul.mubr.f32.gmra.mrb[0].mxu0 %v874
      %v948 = vpop.f32.mrb[0].mxu0
      %v949 = vadd.f32 0.0, %v948
      %v950 = vpop.f32.mrb[0].mxu0
      %951 = vmatprep.mubr.f32.mxu0 0.0
      %952 = vmatmul.mubr.f32.gmra.mrb[0].mxu0 %v876
      %v953 = vpop.f32.mrb[0].mxu0
      %v954 = vadd.f32 0.0, %v953
      %v955 = vpop.f32.mrb[0].mxu0
      %956 = vdwg.mxu0
      %959 = vrot.lane.b32.xlu0 %v802, 112
      %v960 = vpop.permute.xlu0 %959
      %961 = vrot.lane.b32.xlu0 %v803, 112
      %v962 = vpop.permute.xlu0 %961
      %965 = vrot.lane.b32.xlu0 %v840, 48
      %v966 = vpop.permute.xlu0 %965
      %967 = vrot.lane.b32.xlu0 %v841, 48
      %v968 = vpop.permute.xlu0 %967
      %v969 = vsel %vm448, %v960, 0
      %v971 = vsel %vm448, %v962, 0
      %v973 = vsel %vm448, %v966, 0
      %v975 = vsel %vm448, %v968, 0
      %977 = vmatprep.subr.mxu0 0.0
      %978 = vmatpush1.xpose.msra.mxu0 %v973
      %979 = vmatprep.subr.mxu0 0.0
      %980 = vmatpush1.xpose.msra.mxu0 %v975
      %981 = vmatprep.subr.mxu0 0.0
      %982 = vmatpush1.xpose.msra.mxu0 0.0
      %983 = vmatprep.subr.mxu0 0.0
      %984 = vmatpush1.xpose.msra.mxu0 0.0
      %985 = vmatprep.subr.mxu0 0.0
      %986 = vmatpush1.xpose.msra.mxu0 0.0
      %987 = vmatprep.subr.mxu0 0.0
      %988 = vmatpush1.xpose.msra.mxu0 0.0
      %989 = vmatprep.subr.mxu0 0.0
      %990 = vmatpush1.xpose.msra.mxu0 0.0
      %991 = vmatprep.subr.mxu0 0.0
      %992 = vmatpush1.xpose.msra.mxu0 0.0
      %993 = vmatprep.subr.mxu0 0.0
      %994 = vmatpush1.xpose.msra.mxu0 0.0
      %995 = vmatprep.subr.mxu0 0.0
      %996 = vmatpush1.xpose.msra.mxu0 0.0
      %997 = vmatprep.subr.mxu0 0.0
      %998 = vmatpush1.xpose.msra.mxu0 0.0
      %999 = vmatprep.subr.mxu0 0.0
      %1000 = vmatpush1.xpose.msra.mxu0 0.0
      %1001 = vmatprep.subr.mxu0 0.0
      %1002 = vmatpush1.xpose.msra.mxu0 0.0
      %1003 = vmatprep.subr.mxu0 0.0
      %1004 = vmatpush1.xpose.msra.mxu0 0.0
      %1005 = vmatprep.subr.mxu0 0.0
      %1006 = vmatpush1.xpose.msra.mxu0 0.0
      %1007 = vmatprep.subr.mxu0 0.0
      %1008 = vmatpush1.xpose.msra.mxu0 0.0
      %1009 = vmatprep.subr.mxu0 0.0
      %1010 = vmatpush1.xpose.msra.mxu0 0.0
      %1011 = vmatprep.subr.mxu0 0.0
      %1012 = vmatpush1.xpose.msra.mxu0 0.0
      %1013 = vmatprep.subr.mxu0 0.0
      %1014 = vmatpush1.xpose.msra.mxu0 0.0
      %1015 = vmatprep.subr.mxu0 0.0
      %1016 = vmatpush1.xpose.msra.mxu0 0.0
      %1017 = vmatprep.subr.mxu0 0.0
      %1018 = vmatpush1.xpose.msra.mxu0 0.0
      %1019 = vmatprep.subr.mxu0 0.0
      %1020 = vmatpush1.xpose.msra.mxu0 0.0
      %1021 = vmatprep.subr.mxu0 0.0
      %1022 = vmatpush1.xpose.msra.mxu0 0.0
      %1023 = vmatprep.subr.mxu0 0.0
      %1024 = vmatpush1.xpose.msra.mxu0 0.0
      %1025 = vmatprep.subr.mxu0 0.0
      %1026 = vmatpush1.xpose.msra.mxu0 0.0
      %1027 = vmatprep.subr.mxu0 0.0
      %1028 = vmatpush1.xpose.msra.mxu0 0.0
      %1029 = vmatprep.subr.mxu0 0.0
      %1030 = vmatpush1.xpose.msra.mxu0 0.0
      %1031 = vmatprep.subr.mxu0 0.0
      %1032 = vmatpush1.xpose.msra.mxu0 0.0
      %1033 = vmatprep.subr.mxu0 0.0
      %1034 = vmatpush1.xpose.msra.mxu0 0.0
      %1035 = vmatprep.subr.mxu0 0.0
      %1036 = vmatpush1.xpose.msra.mxu0 0.0
      %1037 = vmatprep.subr.mxu0 0.0
      %1038 = vmatpush1.xpose.msra.mxu0 0.0
      %1039 = vmatprep.subr.mxu0 0.0
      %1040 = vmatpush1.xpose.msra.mxu0 0.0
      %1041 = vmatprep.mubr.f32.mxu0 0.0
      %1042 = vmatmul.mubr.f32.gmra.mrb[0].mxu0 %v969
      %v1043 = vpop.f32.mrb[0].mxu0
      %v1044 = vadd.f32 %v949, %v1043
      %v1045 = vpop.f32.mrb[0].mxu0
      %1046 = vmatprep.mubr.f32.mxu0 0.0
      %1047 = vmatmul.mubr.f32.gmra.mrb[0].mxu0 %v971
      %v1048 = vpop.f32.mrb[0].mxu0
      %v1049 = vadd.f32 %v954, %v1048
      %v1050 = vpop.f32.mrb[0].mxu0
      %1051 = vdwg.mxu0
      %v1052 = vmul.f32 %v1044, 0.25
      %v1053 = vmul.f32 %v1049, 0.25
      %v1054 = vsel %vm300, %v1052, -inf
      %v1055 = vsel %vm301, %v1053, -inf
      %v1056 = vsel %vm306, %v1054, -inf
      %1057 = vmax.xlane.f32.xlu0 %v1056
      %v1058 = vpop.xlane.xlu0 %1057
      %v1059 = vsel %vm306, %v1055, -inf
      %1060 = vmax.xlane.f32.xlu0 %v1059
      %v1061 = vpop.xlane.xlu0 %1060
      %v1062 = vsub.f32 %v1054, %v1058
      %v1063 = vsub.f32 %v1055, %v1061
      %v1064 = vmul.f32 %v1062, 1.442695
      %v1065 = vpow.pop %v1064
      %v1066 = vmul.f32 %v1063, 1.442695
      %v1067 = vpow.pop %v1066
      %v1068 = vsel %vm306, %v1065, 0.0
      %1069 = vadd.xlane.f32.xlu0 %v1068
      %v1070 = vpop.xlane.xlu0 %1069
      %v1071 = vsel %vm306, %v1067, 0.0
      %1072 = vadd.xlane.f32.xlu0 %v1071
      %v1073 = vpop.xlane.xlu0 %1072
      %1076 = vrot.lane.b32.xlu0 %v784, 112
      %v1077 = vpop.permute.xlu0 %1076
      %1078 = vrot.lane.b32.xlu0 %v785, 112
      %v1079 = vpop.permute.xlu0 %1078
      %v1083 = vsel %vm306, %v1065, 0
      %v1086 = vsel %vm306, %v1067, 0
      %1088 = vmatprep.subr.mxu0 0.0
      %1089 = vmatpush1.msra.mxu0 %v1077
      %1090 = vmatprep.subr.mxu0 0.0
      %1091 = vmatpush1.msra.mxu0 %v1079
      %1092 = vmatprep.subr.mxu0 0.0
      %1093 = vmatpush1.msra.mxu0 0.0
      %1094 = vmatprep.subr.mxu0 0.0
      %1095 = vmatpush1.msra.mxu0 0.0
      %1096 = vmatprep.subr.mxu0 0.0
      %1097 = vmatpush1.msra.mxu0 0.0
      %1098 = vmatprep.subr.mxu0 0.0
      %1099 = vmatpush1.msra.mxu0 0.0
      %1100 = vmatprep.subr.mxu0 0.0
      %1101 = vmatpush1.msra.mxu0 0.0
      %1102 = vmatprep.subr.mxu0 0.0
      %1103 = vmatpush1.msra.mxu0 0.0
      %1104 = vmatprep.subr.mxu0 0.0
      %1105 = vmatpush1.msra.mxu0 0.0
      %1106 = vmatprep.subr.mxu0 0.0
      %1107 = vmatpush1.msra.mxu0 0.0
      %1108 = vmatprep.subr.mxu0 0.0
      %1109 = vmatpush1.msra.mxu0 0.0
      %1110 = vmatprep.subr.mxu0 0.0
      %1111 = vmatpush1.msra.mxu0 0.0
      %1112 = vmatprep.subr.mxu0 0.0
      %1113 = vmatpush1.msra.mxu0 0.0
      %1114 = vmatprep.subr.mxu0 0.0
      %1115 = vmatpush1.msra.mxu0 0.0
      %1116 = vmatprep.subr.mxu0 0.0
      %1117 = vmatpush1.msra.mxu0 0.0
      %1118 = vmatprep.subr.mxu0 0.0
      %1119 = vmatpush1.msra.mxu0 0.0
      %1120 = vmatprep.subr.mxu0 0.0
      %1121 = vmatpush1.msra.mxu0 0.0
      %1122 = vmatprep.subr.mxu0 0.0
      %1123 = vmatpush1.msra.mxu0 0.0
      %1124 = vmatprep.subr.mxu0 0.0
      %1125 = vmatpush1.msra.mxu0 0.0
      %1126 = vmatprep.subr.mxu0 0.0
      %1127 = vmatpush1.msra.mxu0 0.0
      %1128 = vmatprep.subr.mxu0 0.0
      %1129 = vmatpush1.msra.mxu0 0.0
      %1130 = vmatprep.subr.mxu0 0.0
      %1131 = vmatpush1.msra.mxu0 0.0
      %1132 = vmatprep.subr.mxu0 0.0
      %1133 = vmatpush1.msra.mxu0 0.0
      %1134 = vmatprep.subr.mxu0 0.0
      %1135 = vmatpush1.msra.mxu0 0.0
      %1136 = vmatprep.subr.mxu0 0.0
      %1137 = vmatpush1.msra.mxu0 0.0
      %1138 = vmatprep.subr.mxu0 0.0
      %1139 = vmatpush1.msra.mxu0 0.0
      %1140 = vmatprep.subr.mxu0 0.0
      %1141 = vmatpush1.msra.mxu0 0.0
      %1142 = vmatprep.subr.mxu0 0.0
      %1143 = vmatpush1.msra.mxu0 0.0
      %1144 = vmatprep.subr.mxu0 0.0
      %1145 = vmatpush1.msra.mxu0 0.0
      %1146 = vmatprep.subr.mxu0 0.0
      %1147 = vmatpush1.msra.mxu0 0.0
      %1148 = vmatprep.subr.mxu0 0.0
      %1149 = vmatpush1.msra.mxu0 0.0
      %1150 = vmatprep.subr.mxu0 0.0
      %1151 = vmatpush1.msra.mxu0 0.0
      %1152 = vmatprep.mubr.f32.mxu0 0.0
      %1153 = vmatmul.mubr.f32.gmra.mrb[0].mxu0 %v1083
      %v1154 = vpop.f32.mrb[0].mxu0
      %v1155 = vadd.f32 0.0, %v1154
      %v1156 = vpop.f32.mrb[0].mxu0
      %1157 = vmatprep.mubr.f32.mxu0 0.0
      %1158 = vmatmul.mubr.f32.gmra.mrb[0].mxu0 %v1086
      %v1159 = vpop.f32.mrb[0].mxu0
      %v1160 = vadd.f32 0.0, %v1159
      %v1161 = vpop.f32.mrb[0].mxu0
      %1162 = vdwg.mxu0
      %v1163 = vrcp.pop %v1070
      %v1164 = vmul.f32 %v1155, %v1163
      %v1165 = vrcp.pop %v1073
      %v1166 = vmul.f32 %v1160, %v1165
      %1169 = vrot.lane.b32.xlu0 %v1164, 16
      %v1170 = vpop.permute.xlu0 %1169
      %1171 = vrot.lane.b32.xlu0 %v1166, 16
      %v1172 = vpop.permute.xlu0 %1171
      %vm1175 = vcmask 261248
      %1176 = vst.msk [vmem:[%s280] sm:$0xff] %vm1175, %v1170
      %1177 = vst.msk [vmem:[%s280 + $0x8] sm:$0xff] %vm1175, %v1172
      %v1178 = vld [vmem:[%s259] sm:$0xff]
      %v1179 = vld [vmem:[%s259 + $0x10] sm:$0xff]
      %v1180 = vmul.f32 %v1178, %v1178
      %v1181 = vmul.f32 %v1179, %v1179
      %1184 = vrot.lane.b32.xlu0 %v1180, 96
      %v1185 = vpop.permute.xlu0 %1184
      %1186 = vrot.lane.b32.xlu0 %v1181, 96
      %v1187 = vpop.permute.xlu0 %1186
      %v1190 = vsel %vm306, %v1185, 0.0
      %1191 = vadd.xlane.f32.xlu0 %v1190
      %v1192 = vpop.xlane.xlu0 %1191
      %v1193 = vsel %vm306, %v1187, 0.0
      %1194 = vadd.xlane.f32.xlu0 %v1193
      %v1195 = vpop.xlane.xlu0 %1194
      %v1196 = vmul.f32 %v1192, %v313
      %v1197 = vmul.f32 %v1195, %v313
      %v1198 = vadd.f32 %v1196, 1.1920929e-07
      %v1199 = vadd.f32 %v1197, 1.1920929e-07
      %v1200 = vrsqrt.pop %v1198
      %v1201 = vrsqrt.pop %v1199
      %v1202 = vmul.f32 %v1178, %v1200
      %v1203 = vmul.f32 %v1179, %v1201
      %v1204 = vld [vmem:[%s265] sm:$0xff]
      %v1205 = vld [vmem:[%s265 + $0x10] sm:$0xff]
      %v1206 = vmul.f32 %v1204, %v1204
      %v1207 = vmul.f32 %v1205, %v1205
      %1210 = vrot.lane.b32.xlu0 %v1206, 32
      %v1211 = vpop.permute.xlu0 %1210
      %1212 = vrot.lane.b32.xlu0 %v1207, 32
      %v1213 = vpop.permute.xlu0 %1212
      %v1216 = vsel %vm306, %v1211, 0.0
      %1217 = vadd.xlane.f32.xlu0 %v1216
      %v1218 = vpop.xlane.xlu0 %1217
      %v1219 = vsel %vm306, %v1213, 0.0
      %1220 = vadd.xlane.f32.xlu0 %v1219
      %v1221 = vpop.xlane.xlu0 %1220
      %v1222 = vmul.f32 %v1218, %v313
      %v1223 = vmul.f32 %v1221, %v313
      %v1224 = vadd.f32 %v1222, 1.1920929e-07
      %v1225 = vadd.f32 %v1223, 1.1920929e-07
      %v1226 = vrsqrt.pop %v1224
      %v1227 = vrsqrt.pop %v1225
      %v1228 = vmul.f32 %v1204, %v1226
      %v1229 = vmul.f32 %v1205, %v1227
      %v1230 = vld [vmem:[%s265 + $0x8] sm:$0xff]
      %v1231 = vld [vmem:[%s265 + $0x18] sm:$0xff]
      %1232 = vrot.lane.b32.xlu0 %v282, 32
      %v1233 = vpop.permute.xlu0 %1232
      %1234 = vrot.lane.b32.xlu0 %v283, 32
      %v1235 = vpop.permute.xlu0 %1234
      %v1238 = vmul.f32 %v1202, %v1233
      %v1239 = vmul.f32 %v1203, %v1235
      %1242 = vrot.lane.b32.xlu0 %v1238, 120
      %v1243 = vpop.permute.xlu0 %1242
      %1244 = vrot.lane.b32.xlu0 %v1239, 120
      %v1245 = vpop.permute.xlu0 %1244
      %v1248 = vadd.f32 %v1238, %v1243
      %v1249 = vadd.f32 %v1239, %v1245
      %1250 = vrot.lane.b32.xlu0 %v282, 40
      %v1251 = vpop.permute.xlu0 %1250
      %1252 = vrot.lane.b32.xlu0 %v283, 40
      %v1253 = vpop.permute.xlu0 %1252
      %v1256 = vmul.f32 %v1202, %v1251
      %v1257 = vmul.f32 %v1203, %v1253
      %v1258 = vmul.f32 %v1202, %v805
      %v1259 = vmul.f32 %v1203, %v807
      %1262 = vrot.lane.b32.xlu0 %v1258, 8
      %v1263 = vpop.permute.xlu0 %1262
      %1264 = vrot.lane.b32.xlu0 %v1259, 8
      %v1265 = vpop.permute.xlu0 %1264
      %v1268 = vsub.f32 %v1256, %v1263
      %v1269 = vsub.f32 %v1257, %v1265
      %1270 = vrot.lane.b32.xlu0 %v284, 96
      %v1271 = vpop.permute.xlu0 %1270
      %1272 = vrot.lane.b32.xlu0 %v285, 96
      %v1273 = vpop.permute.xlu0 %1272
      %v1276 = vmul.f32 %v1228, %v1271
      %v1277 = vmul.f32 %v1229, %v1273
      %1280 = vrot.lane.b32.xlu0 %v1276, 120
      %v1281 = vpop.permute.xlu0 %1280
      %1282 = vrot.lane.b32.xlu0 %v1277, 120
      %v1283 = vpop.permute.xlu0 %1282
      %v1286 = vadd.f32 %v1276, %v1281
      %v1287 = vadd.f32 %v1277, %v1283
      %1288 = vrot.lane.b32.xlu0 %v284, 104
      %v1289 = vpop.permute.xlu0 %1288
      %1290 = vrot.lane.b32.xlu0 %v285, 104
      %v1291 = vpop.permute.xlu0 %1290
      %v1294 = vmul.f32 %v1228, %v1289
      %v1295 = vmul.f32 %v1229, %v1291
      %v1296 = vmul.f32 %v1228, %v843
      %v1297 = vmul.f32 %v1229, %v845
      %1300 = vrot.lane.b32.xlu0 %v1296, 8
      %v1301 = vpop.permute.xlu0 %1300
      %1302 = vrot.lane.b32.xlu0 %v1297, 8
      %v1303 = vpop.permute.xlu0 %1302
      %v1306 = vsub.f32 %v1294, %v1301
      %v1307 = vsub.f32 %v1295, %v1303
      %1310 = vrot.lane.b32.xlu0 %v1268, 88
      %v1311 = vpop.permute.xlu0 %1310
      %1312 = vrot.lane.b32.xlu0 %v1269, 88
      %v1313 = vpop.permute.xlu0 %1312
      %1316 = vrot.lane.b32.xlu0 %v1306, 24
      %v1317 = vpop.permute.xlu0 %1316
      %1318 = vrot.lane.b32.xlu0 %v1307, 24
      %v1319 = vpop.permute.xlu0 %1318
      %v1320 = vsel %vm448, %v1311, 0
      %v1322 = vsel %vm448, %v1313, 0
      %v1324 = vsel %vm448, %v1317, 0
      %v1326 = vsel %vm448, %v1319, 0
      %1328 = vmatprep.subr.mxu0 0.0
      %1329 = vmatpush1.xpose.msra.mxu0 %v1324
      %1330 = vmatprep.subr.mxu0 0.0
      %1331 = vmatpush1.xpose.msra.mxu0 %v1326
      %1332 = vmatprep.subr.mxu0 0.0
      %1333 = vmatpush1.xpose.msra.mxu0 0.0
      %1334 = vmatprep.subr.mxu0 0.0
      %1335 = vmatpush1.xpose.msra.mxu0 0.0
      %1336 = vmatprep.subr.mxu0 0.0
      %1337 = vmatpush1.xpose.msra.mxu0 0.0
      %1338 = vmatprep.subr.mxu0 0.0
      %1339 = vmatpush1.xpose.msra.mxu0 0.0
      %1340 = vmatprep.subr.mxu0 0.0
      %1341 = vmatpush1.xpose.msra.mxu0 0.0
      %1342 = vmatprep.subr.mxu0 0.0
      %1343 = vmatpush1.xpose.msra.mxu0 0.0
      %1344 = vmatprep.subr.mxu0 0.0
      %1345 = vmatpush1.xpose.msra.mxu0 0.0
      %1346 = vmatprep.subr.mxu0 0.0
      %1347 = vmatpush1.xpose.msra.mxu0 0.0
      %1348 = vmatprep.subr.mxu0 0.0
      %1349 = vmatpush1.xpose.msra.mxu0 0.0
      %1350 = vmatprep.subr.mxu0 0.0
      %1351 = vmatpush1.xpose.msra.mxu0 0.0
      %1352 = vmatprep.subr.mxu0 0.0
      %1353 = vmatpush1.xpose.msra.mxu0 0.0
      %1354 = vmatprep.subr.mxu0 0.0
      %1355 = vmatpush1.xpose.msra.mxu0 0.0
      %1356 = vmatprep.subr.mxu0 0.0
      %1357 = vmatpush1.xpose.msra.mxu0 0.0
      %1358 = vmatprep.subr.mxu0 0.0
      %1359 = vmatpush1.xpose.msra.mxu0 0.0
      %1360 = vmatprep.subr.mxu0 0.0
      %1361 = vmatpush1.xpose.msra.mxu0 0.0
      %1362 = vmatprep.subr.mxu0 0.0
      %1363 = vmatpush1.xpose.msra.mxu0 0.0
      %1364 = vmatprep.subr.mxu0 0.0
      %1365 = vmatpush1.xpose.msra.mxu0 0.0
      %1366 = vmatprep.subr.mxu0 0.0
      %1367 = vmatpush1.xpose.msra.mxu0 0.0
      %1368 = vmatprep.subr.mxu0 0.0
      %1369 = vmatpush1.xpose.msra.mxu0 0.0
      %1370 = vmatprep.subr.mxu0 0.0
      %1371 = vmatpush1.xpose.msra.mxu0 0.0
      %1372 = vmatprep.subr.mxu0 0.0
      %1373 = vmatpush1.xpose.msra.mxu0 0.0
      %1374 = vmatprep.subr.mxu0 0.0
      %1375 = vmatpush1.xpose.msra.mxu0 0.0
      %1376 = vmatprep.subr.mxu0 0.0
      %1377 = vmatpush1.xpose.msra.mxu0 0.0
      %1378 = vmatprep.subr.mxu0 0.0
      %1379 = vmatpush1.xpose.msra.mxu0 0.0
      %1380 = vmatprep.subr.mxu0 0.0
      %1381 = vmatpush1.xpose.msra.mxu0 0.0
      %1382 = vmatprep.subr.mxu0 0.0
      %1383 = vmatpush1.xpose.msra.mxu0 0.0
      %1384 = vmatprep.subr.mxu0 0.0
      %1385 = vmatpush1.xpose.msra.mxu0 0.0
      %1386 = vmatprep.subr.mxu0 0.0
      %1387 = vmatpush1.xpose.msra.mxu0 0.0
      %1388 = vmatprep.subr.mxu0 0.0
      %1389 = vmatpush1.xpose.msra.mxu0 0.0
      %1390 = vmatprep.subr.mxu0 0.0
      %1391 = vmatpush1.xpose.msra.mxu0 0.0
      %1392 = vmatprep.mubr.f32.mxu0 0.0
      %1393 = vmatmul.mubr.f32.gmra.mrb[0].mxu0 %v1320
      %v1394 = vpop.f32.mrb[0].mxu0
      %v1395 = vadd.f32 0.0, %v1394
      %v1396 = vpop.f32.mrb[0].mxu0
      %1397 = vmatprep.mubr.f32.mxu0 0.0
      %1398 = vmatmul.mubr.f32.gmra.mrb[0].mxu0 %v1322
      %v1399 = vpop.f32.mrb[0].mxu0
      %v1400 = vadd.f32 0.0, %v1399
      %v1401 = vpop.f32.mrb[0].mxu0
      %1402 = vdwg.mxu0
      %1405 = vrot.lane.b32.xlu0 %v1248, 96
      %v1406 = vpop.permute.xlu0 %1405
      %1407 = vrot.lane.b32.xlu0 %v1249, 96
      %v1408 = vpop.permute.xlu0 %1407
      %1411 = vrot.lane.b32.xlu0 %v1286, 32
      %v1412 = vpop.permute.xlu0 %1411
      %1413 = vrot.lane.b32.xlu0 %v1287, 32
      %v1414 = vpop.permute.xlu0 %1413
      %v1415 = vsel %vm448, %v1406, 0
      %v1417 = vsel %vm448, %v1408, 0
      %v1419 = vsel %vm448, %v1412, 0
      %v1421 = vsel %vm448, %v1414, 0
      %1423 = vmatprep.subr.mxu0 0.0
      %1424 = vmatpush1.xpose.msra.mxu0 %v1419
      %1425 = vmatprep.subr.mxu0 0.0
      %1426 = vmatpush1.xpose.msra.mxu0 %v1421
      %1427 = vmatprep.subr.mxu0 0.0
      %1428 = vmatpush1.xpose.msra.mxu0 0.0
      %1429 = vmatprep.subr.mxu0 0.0
      %1430 = vmatpush1.xpose.msra.mxu0 0.0
      %1431 = vmatprep.subr.mxu0 0.0
      %1432 = vmatpush1.xpose.msra.mxu0 0.0
      %1433 = vmatprep.subr.mxu0 0.0
      %1434 = vmatpush1.xpose.msra.mxu0 0.0
      %1435 = vmatprep.subr.mxu0 0.0
      %1436 = vmatpush1.xpose.msra.mxu0 0.0
      %1437 = vmatprep.subr.mxu0 0.0
      %1438 = vmatpush1.xpose.msra.mxu0 0.0
      %1439 = vmatprep.subr.mxu0 0.0
      %1440 = vmatpush1.xpose.msra.mxu0 0.0
      %1441 = vmatprep.subr.mxu0 0.0
      %1442 = vmatpush1.xpose.msra.mxu0 0.0
      %1443 = vmatprep.subr.mxu0 0.0
      %1444 = vmatpush1.xpose.msra.mxu0 0.0
      %1445 = vmatprep.subr.mxu0 0.0
      %1446 = vmatpush1.xpose.msra.mxu0 0.0
      %1447 = vmatprep.subr.mxu0 0.0
      %1448 = vmatpush1.xpose.msra.mxu0 0.0
      %1449 = vmatprep.subr.mxu0 0.0
      %1450 = vmatpush1.xpose.msra.mxu0 0.0
      %1451 = vmatprep.subr.mxu0 0.0
      %1452 = vmatpush1.xpose.msra.mxu0 0.0
      %1453 = vmatprep.subr.mxu0 0.0
      %1454 = vmatpush1.xpose.msra.mxu0 0.0
      %1455 = vmatprep.subr.mxu0 0.0
      %1456 = vmatpush1.xpose.msra.mxu0 0.0
      %1457 = vmatprep.subr.mxu0 0.0
      %1458 = vmatpush1.xpose.msra.mxu0 0.0
      %1459 = vmatprep.subr.mxu0 0.0
      %1460 = vmatpush1.xpose.msra.mxu0 0.0
      %1461 = vmatprep.subr.mxu0 0.0
      %1462 = vmatpush1.xpose.msra.mxu0 0.0
      %1463 = vmatprep.subr.mxu0 0.0
      %1464 = vmatpush1.xpose.msra.mxu0 0.0
      %1465 = vmatprep.subr.mxu0 0.0
      %1466 = vmatpush1.xpose.msra.mxu0 0.0
      %1467 = vmatprep.subr.mxu0 0.0
      %1468 = vmatpush1.xpose.msra.mxu0 0.0
      %1469 = vmatprep.subr.mxu0 0.0
      %1470 = vmatpush1.xpose.msra.mxu0 0.0
      %1471 = vmatprep.subr.mxu0 0.0
      %1472 = vmatpush1.xpose.msra.mxu0 0.0
      %1473 = vmatprep.subr.mxu0 0.0
      %1474 = vmatpush1.xpose.msra.mxu0 0.0
      %1475 = vmatprep.subr.mxu0 0.0
      %1476 = vmatpush1.xpose.msra.mxu0 0.0
      %1477 = vmatprep.subr.mxu0 0.0
      %1478 = vmatpush1.xpose.msra.mxu0 0.0
      %1479 = vmatprep.subr.mxu0 0.0
      %1480 = vmatpush1.xpose.msra.mxu0 0.0
      %1481 = vmatprep.subr.mxu0 0.0
      %1482 = vmatpush1.xpose.msra.mxu0 0.0
      %1483 = vmatprep.subr.mxu0 0.0
      %1484 = vmatpush1.xpose.msra.mxu0 0.0
      %1485 = vmatprep.subr.mxu0 0.0
      %1486 = vmatpush1.xpose.msra.mxu0 0.0
      %1487 = vmatprep.mubr.f32.mxu0 0.0
      %1488 = vmatmul.mubr.f32.gmra.mrb[0].mxu0 %v1415
      %v1489 = vpop.f32.mrb[0].mxu0
      %v1490 = vadd.f32 %v1395, %v1489
      %v1491 = vpop.f32.mrb[0].mxu0
      %1492 = vmatprep.mubr.f32.mxu0 0.0
      %1493 = vmatmul.mubr.f32.gmra.mrb[0].mxu0 %v1417
      %v1494 = vpop.f32.mrb[0].mxu0
      %v1495 = vadd.f32 %v1400, %v1494
      %v1496 = vpop.f32.mrb[0].mxu0
      %1497 = vdwg.mxu0
      %v1498 = vmul.f32 %v1490, 0.25
      %v1499 = vmul.f32 %v1495, 0.25
      %v1500 = vsel %vm300, %v1498, -inf
      %v1501 = vsel %vm301, %v1499, -inf
      %v1502 = vsel %vm306, %v1500, -inf
      %1503 = vmax.xlane.f32.xlu0 %v1502
      %v1504 = vpop.xlane.xlu0 %1503
      %v1505 = vsel %vm306, %v1501, -inf
      %1506 = vmax.xlane.f32.xlu0 %v1505
      %v1507 = vpop.xlane.xlu0 %1506
      %v1508 = vsub.f32 %v1500, %v1504
      %v1509 = vsub.f32 %v1501, %v1507
      %v1510 = vmul.f32 %v1508, 1.442695
      %v1511 = vpow.pop %v1510
      %v1512 = vmul.f32 %v1509, 1.442695
      %v1513 = vpow.pop %v1512
      %v1514 = vsel %vm306, %v1511, 0.0
      %1515 = vadd.xlane.f32.xlu0 %v1514
      %v1516 = vpop.xlane.xlu0 %1515
      %v1517 = vsel %vm306, %v1513, 0.0
      %1518 = vadd.xlane.f32.xlu0 %v1517
      %v1519 = vpop.xlane.xlu0 %1518
      %1522 = vrot.lane.b32.xlu0 %v1230, 96
      %v1523 = vpop.permute.xlu0 %1522
      %1524 = vrot.lane.b32.xlu0 %v1231, 96
      %v1525 = vpop.permute.xlu0 %1524
      %v1529 = vsel %vm306, %v1511, 0
      %v1532 = vsel %vm306, %v1513, 0
      %1534 = vmatprep.subr.mxu0 0.0
      %1535 = vmatpush1.msra.mxu0 %v1523
      %1536 = vmatprep.subr.mxu0 0.0
      %1537 = vmatpush1.msra.mxu0 %v1525
      %1538 = vmatprep.subr.mxu0 0.0
      %1539 = vmatpush1.msra.mxu0 0.0
      %1540 = vmatprep.subr.mxu0 0.0
      %1541 = vmatpush1.msra.mxu0 0.0
      %1542 = vmatprep.subr.mxu0 0.0
      %1543 = vmatpush1.msra.mxu0 0.0
      %1544 = vmatprep.subr.mxu0 0.0
      %1545 = vmatpush1.msra.mxu0 0.0
      %1546 = vmatprep.subr.mxu0 0.0
      %1547 = vmatpush1.msra.mxu0 0.0
      %1548 = vmatprep.subr.mxu0 0.0
      %1549 = vmatpush1.msra.mxu0 0.0
      %1550 = vmatprep.subr.mxu0 0.0
      %1551 = vmatpush1.msra.mxu0 0.0
      %1552 = vmatprep.subr.mxu0 0.0
      %1553 = vmatpush1.msra.mxu0 0.0
      %1554 = vmatprep.subr.mxu0 0.0
      %1555 = vmatpush1.msra.mxu0 0.0
      %1556 = vmatprep.subr.mxu0 0.0
      %1557 = vmatpush1.msra.mxu0 0.0
      %1558 = vmatprep.subr.mxu0 0.0
      %1559 = vmatpush1.msra.mxu0 0.0
      %1560 = vmatprep.subr.mxu0 0.0
      %1561 = vmatpush1.msra.mxu0 0.0
      %1562 = vmatprep.subr.mxu0 0.0
      %1563 = vmatpush1.msra.mxu0 0.0
      %1564 = vmatprep.subr.mxu0 0.0
      %1565 = vmatpush1.msra.mxu0 0.0
      %1566 = vmatprep.subr.mxu0 0.0
      %1567 = vmatpush1.msra.mxu0 0.0
      %1568 = vmatprep.subr.mxu0 0.0
      %1569 = vmatpush1.msra.mxu0 0.0
      %1570 = vmatprep.subr.mxu0 0.0
      %1571 = vmatpush1.msra.mxu0 0.0
      %1572 = vmatprep.subr.mxu0 0.0
      %1573 = vmatpush1.msra.mxu0 0.0
      %1574 = vmatprep.subr.mxu0 0.0
      %1575 = vmatpush1.msra.mxu0 0.0
      %1576 = vmatprep.subr.mxu0 0.0
      %1577 = vmatpush1.msra.mxu0 0.0
      %1578 = vmatprep.subr.mxu0 0.0
      %1579 = vmatpush1.msra.mxu0 0.0
      %1580 = vmatprep.subr.mxu0 0.0
      %1581 = vmatpush1.msra.mxu0 0.0
      %1582 = vmatprep.subr.mxu0 0.0
      %1583 = vmatpush1.msra.mxu0 0.0
      %1584 = vmatprep.subr.mxu0 0.0
      %1585 = vmatpush1.msra.mxu0 0.0
      %1586 = vmatprep.subr.mxu0 0.0
      %1587 = vmatpush1.msra.mxu0 0.0
      %1588 = vmatprep.subr.mxu0 0.0
      %1589 = vmatpush1.msra.mxu0 0.0
      %1590 = vmatprep.subr.mxu0 0.0
      %1591 = vmatpush1.msra.mxu0 0.0
      %1592 = vmatprep.subr.mxu0 0.0
      %1593 = vmatpush1.msra.mxu0 0.0
      %1594 = vmatprep.subr.mxu0 0.0
      %1595 = vmatpush1.msra.mxu0 0.0
      %1596 = vmatprep.subr.mxu0 0.0
      %1597 = vmatpush1.msra.mxu0 0.0
      %1598 = vmatprep.mubr.f32.mxu0 0.0
      %1599 = vmatmul.mubr.f32.gmra.mrb[0].mxu0 %v1529
      %v1600 = vpop.f32.mrb[0].mxu0
      %v1601 = vadd.f32 0.0, %v1600
      %v1602 = vpop.f32.mrb[0].mxu0
      %1603 = vmatprep.mubr.f32.mxu0 0.0
      %1604 = vmatmul.mubr.f32.gmra.mrb[0].mxu0 %v1532
      %v1605 = vpop.f32.mrb[0].mxu0
      %v1606 = vadd.f32 0.0, %v1605
      %v1607 = vpop.f32.mrb[0].mxu0
      %1608 = vdwg.mxu0
      %v1609 = vrcp.pop %v1516
      %v1610 = vmul.f32 %v1601, %v1609
      %v1611 = vrcp.pop %v1519
      %v1612 = vmul.f32 %v1606, %v1611
      %1615 = vrot.lane.b32.xlu0 %v1610, 32
      %v1616 = vpop.permute.xlu0 %1615
      %1617 = vrot.lane.b32.xlu0 %v1612, 32
      %v1618 = vpop.permute.xlu0 %1617
      %vm1621 = vcmask 392448
      %1622 = vst.msk [vmem:[%s280] sm:$0xff] %vm1621, %v1616
      %1623 = vst.msk [vmem:[%s280 + $0x8] sm:$0xff] %vm1621, %v1618
      %v1624 = vld [vmem:[%s259] sm:$0xff]
      %v1625 = vld [vmem:[%s259 + $0x10] sm:$0xff]
      %v1626 = vmul.f32 %v1624, %v1624
      %v1627 = vmul.f32 %v1625, %v1625
      %1630 = vrot.lane.b32.xlu0 %v1626, 80
      %v1631 = vpop.permute.xlu0 %1630
      %1632 = vrot.lane.b32.xlu0 %v1627, 80
      %v1633 = vpop.permute.xlu0 %1632
      %v1636 = vsel %vm306, %v1631, 0.0
      %1637 = vadd.xlane.f32.xlu0 %v1636
      %v1638 = vpop.xlane.xlu0 %1637
      %v1639 = vsel %vm306, %v1633, 0.0
      %1640 = vadd.xlane.f32.xlu0 %v1639
      %v1641 = vpop.xlane.xlu0 %1640
      %v1642 = vmul.f32 %v1638, %v313
      %v1643 = vmul.f32 %v1641, %v313
      %v1644 = vadd.f32 %v1642, 1.1920929e-07
      %v1645 = vadd.f32 %v1643, 1.1920929e-07
      %v1646 = vrsqrt.pop %v1644
      %v1647 = vrsqrt.pop %v1645
      %v1648 = vmul.f32 %v1624, %v1646
      %v1649 = vmul.f32 %v1625, %v1647
      %v1650 = vld [vmem:[%s265] sm:$0xff]
      %v1651 = vld [vmem:[%s265 + $0x10] sm:$0xff]
      %v1652 = vmul.f32 %v1650, %v1650
      %v1653 = vmul.f32 %v1651, %v1651
      %1656 = vrot.lane.b32.xlu0 %v1652, 16
      %v1657 = vpop.permute.xlu0 %1656
      %1658 = vrot.lane.b32.xlu0 %v1653, 16
      %v1659 = vpop.permute.xlu0 %1658
      %v1662 = vsel %vm306, %v1657, 0.0
      %1663 = vadd.xlane.f32.xlu0 %v1662
      %v1664 = vpop.xlane.xlu0 %1663
      %v1665 = vsel %vm306, %v1659, 0.0
      %1666 = vadd.xlane.f32.xlu0 %v1665
      %v1667 = vpop.xlane.xlu0 %1666
      %v1668 = vmul.f32 %v1664, %v313
      %v1669 = vmul.f32 %v1667, %v313
      %v1670 = vadd.f32 %v1668, 1.1920929e-07
      %v1671 = vadd.f32 %v1669, 1.1920929e-07
      %v1672 = vrsqrt.pop %v1670
      %v1673 = vrsqrt.pop %v1671
      %v1674 = vmul.f32 %v1650, %v1672
      %v1675 = vmul.f32 %v1651, %v1673
      %v1676 = vld [vmem:[%s265 + $0x8] sm:$0xff]
      %v1677 = vld [vmem:[%s265 + $0x18] sm:$0xff]
      %1678 = vrot.lane.b32.xlu0 %v282, 48
      %v1679 = vpop.permute.xlu0 %1678
      %1680 = vrot.lane.b32.xlu0 %v283, 48
      %v1681 = vpop.permute.xlu0 %1680
      %v1684 = vmul.f32 %v1648, %v1679
      %v1685 = vmul.f32 %v1649, %v1681
      %1688 = vrot.lane.b32.xlu0 %v1684, 120
      %v1689 = vpop.permute.xlu0 %1688
      %1690 = vrot.lane.b32.xlu0 %v1685, 120
      %v1691 = vpop.permute.xlu0 %1690
      %v1694 = vadd.f32 %v1684, %v1689
      %v1695 = vadd.f32 %v1685, %v1691
      %1696 = vrot.lane.b32.xlu0 %v282, 56
      %v1697 = vpop.permute.xlu0 %1696
      %1698 = vrot.lane.b32.xlu0 %v283, 56
      %v1699 = vpop.permute.xlu0 %1698
      %v1702 = vmul.f32 %v1648, %v1697
      %v1703 = vmul.f32 %v1649, %v1699
      %v1704 = vmul.f32 %v1648, %v1251
      %v1705 = vmul.f32 %v1649, %v1253
      %1708 = vrot.lane.b32.xlu0 %v1704, 8
      %v1709 = vpop.permute.xlu0 %1708
      %1710 = vrot.lane.b32.xlu0 %v1705, 8
      %v1711 = vpop.permute.xlu0 %1710
      %v1714 = vsub.f32 %v1702, %v1709
      %v1715 = vsub.f32 %v1703, %v1711
      %1716 = vrot.lane.b32.xlu0 %v284, 112
      %v1717 = vpop.permute.xlu0 %1716
      %1718 = vrot.lane.b32.xlu0 %v285, 112
      %v1719 = vpop.permute.xlu0 %1718
      %v1722 = vmul.f32 %v1674, %v1717
      %v1723 = vmul.f32 %v1675, %v1719
      %1726 = vrot.lane.b32.xlu0 %v1722, 120
      %v1727 = vpop.permute.xlu0 %1726
      %1728 = vrot.lane.b32.xlu0 %v1723, 120
      %v1729 = vpop.permute.xlu0 %1728
      %v1732 = vadd.f32 %v1722, %v1727
      %v1733 = vadd.f32 %v1723, %v1729
      %1734 = vrot.lane.b32.xlu0 %v284, 120
      %v1735 = vpop.permute.xlu0 %1734
      %1736 = vrot.lane.b32.xlu0 %v285, 120
      %v1737 = vpop.permute.xlu0 %1736
      %v1740 = vmul.f32 %v1674, %v1735
      %v1741 = vmul.f32 %v1675, %v1737
      %v1742 = vmul.f32 %v1674, %v1289
      %v1743 = vmul.f32 %v1675, %v1291
      %1746 = vrot.lane.b32.xlu0 %v1742, 8
      %v1747 = vpop.permute.xlu0 %1746
      %1748 = vrot.lane.b32.xlu0 %v1743, 8
      %v1749 = vpop.permute.xlu0 %1748
      %v1752 = vsub.f32 %v1740, %v1747
      %v1753 = vsub.f32 %v1741, %v1749
      %1756 = vrot.lane.b32.xlu0 %v1714, 72
      %v1757 = vpop.permute.xlu0 %1756
      %1758 = vrot.lane.b32.xlu0 %v1715, 72
      %v1759 = vpop.permute.xlu0 %1758
      %1762 = vrot.lane.b32.xlu0 %v1752, 8
      %v1763 = vpop.permute.xlu0 %1762
      %1764 = vrot.lane.b32.xlu0 %v1753, 8
      %v1765 = vpop.permute.xlu0 %1764
      %v1766 = vsel %vm448, %v1757, 0
      %v1768 = vsel %vm448, %v1759, 0
      %v1770 = vsel %vm448, %v1763, 0
      %v1772 = vsel %vm448, %v1765, 0
      %1774 = vmatprep.subr.mxu0 0.0
      %1775 = vmatpush1.xpose.msra.mxu0 %v1770
      %1776 = vmatprep.subr.mxu0 0.0
      %1777 = vmatpush1.xpose.msra.mxu0 %v1772
      %1778 = vmatprep.subr.mxu0 0.0
      %1779 = vmatpush1.xpose.msra.mxu0 0.0
      %1780 = vmatprep.subr.mxu0 0.0
      %1781 = vmatpush1.xpose.msra.mxu0 0.0
      %1782 = vmatprep.subr.mxu0 0.0
      %1783 = vmatpush1.xpose.msra.mxu0 0.0
      %1784 = vmatprep.subr.mxu0 0.0
      %1785 = vmatpush1.xpose.msra.mxu0 0.0
      %1786 = vmatprep.subr.mxu0 0.0
      %1787 = vmatpush1.xpose.msra.mxu0 0.0
      %1788 = vmatprep.subr.mxu0 0.0
      %1789 = vmatpush1.xpose.msra.mxu0 0.0
      %1790 = vmatprep.subr.mxu0 0.0
      %1791 = vmatpush1.xpose.msra.mxu0 0.0
      %1792 = vmatprep.subr.mxu0 0.0
      %1793 = vmatpush1.xpose.msra.mxu0 0.0
      %1794 = vmatprep.subr.mxu0 0.0
      %1795 = vmatpush1.xpose.msra.mxu0 0.0
      %1796 = vmatprep.subr.mxu0 0.0
      %1797 = vmatpush1.xpose.msra.mxu0 0.0
      %1798 = vmatprep.subr.mxu0 0.0
      %1799 = vmatpush1.xpose.msra.mxu0 0.0
      %1800 = vmatprep.subr.mxu0 0.0
      %1801 = vmatpush1.xpose.msra.mxu0 0.0
      %1802 = vmatprep.subr.mxu0 0.0
      %1803 = vmatpush1.xpose.msra.mxu0 0.0
      %1804 = vmatprep.subr.mxu0 0.0
      %1805 = vmatpush1.xpose.msra.mxu0 0.0
      %1806 = vmatprep.subr.mxu0 0.0
      %1807 = vmatpush1.xpose.msra.mxu0 0.0
      %1808 = vmatprep.subr.mxu0 0.0
      %1809 = vmatpush1.xpose.msra.mxu0 0.0
      %1810 = vmatprep.subr.mxu0 0.0
      %1811 = vmatpush1.xpose.msra.mxu0 0.0
      %1812 = vmatprep.subr.mxu0 0.0
      %1813 = vmatpush1.xpose.msra.mxu0 0.0
      %1814 = vmatprep.subr.mxu0 0.0
      %1815 = vmatpush1.xpose.msra.mxu0 0.0
      %1816 = vmatprep.subr.mxu0 0.0
      %1817 = vmatpush1.xpose.msra.mxu0 0.0
      %1818 = vmatprep.subr.mxu0 0.0
      %1819 = vmatpush1.xpose.msra.mxu0 0.0
      %1820 = vmatprep.subr.mxu0 0.0
      %1821 = vmatpush1.xpose.msra.mxu0 0.0
      %1822 = vmatprep.subr.mxu0 0.0
      %1823 = vmatpush1.xpose.msra.mxu0 0.0
      %1824 = vmatprep.subr.mxu0 0.0
      %1825 = vmatpush1.xpose.msra.mxu0 0.0
      %1826 = vmatprep.subr.mxu0 0.0
      %1827 = vmatpush1.xpose.msra.mxu0 0.0
      %1828 = vmatprep.subr.mxu0 0.0
      %1829 = vmatpush1.xpose.msra.mxu0 0.0
      %1830 = vmatprep.subr.mxu0 0.0
      %1831 = vmatpush1.xpose.msra.mxu0 0.0
      %1832 = vmatprep.subr.mxu0 0.0
      %1833 = vmatpush1.xpose.msra.mxu0 0.0
      %1834 = vmatprep.subr.mxu0 0.0
      %1835 = vmatpush1.xpose.msra.mxu0 0.0
      %1836 = vmatprep.subr.mxu0 0.0
      %1837 = vmatpush1.xpose.msra.mxu0 0.0
      %1838 = vmatprep.mubr.f32.mxu0 0.0
      %1839 = vmatmul.mubr.f32.gmra.mrb[0].mxu0 %v1766
      %v1840 = vpop.f32.mrb[0].mxu0
      %v1841 = vadd.f32 0.0, %v1840
      %v1842 = vpop.f32.mrb[0].mxu0
      %1843 = vmatprep.mubr.f32.mxu0 0.0
      %1844 = vmatmul.mubr.f32.gmra.mrb[0].mxu0 %v1768
      %v1845 = vpop.f32.mrb[0].mxu0
      %v1846 = vadd.f32 0.0, %v1845
      %v1847 = vpop.f32.mrb[0].mxu0
      %1848 = vdwg.mxu0
      %1851 = vrot.lane.b32.xlu0 %v1694, 80
      %v1852 = vpop.permute.xlu0 %1851
      %1853 = vrot.lane.b32.xlu0 %v1695, 80
      %v1854 = vpop.permute.xlu0 %1853
      %1857 = vrot.lane.b32.xlu0 %v1732, 16
      %v1858 = vpop.permute.xlu0 %1857
      %1859 = vrot.lane.b32.xlu0 %v1733, 16
      %v1860 = vpop.permute.xlu0 %1859
      %v1861 = vsel %vm448, %v1852, 0
      %v1863 = vsel %vm448, %v1854, 0
      %v1865 = vsel %vm448, %v1858, 0
      %v1867 = vsel %vm448, %v1860, 0
      %1869 = vmatprep.subr.mxu0 0.0
      %1870 = vmatpush1.xpose.msra.mxu0 %v1865
      %1871 = vmatprep.subr.mxu0 0.0
      %1872 = vmatpush1.xpose.msra.mxu0 %v1867
      %1873 = vmatprep.subr.mxu0 0.0
      %1874 = vmatpush1.xpose.msra.mxu0 0.0
      %1875 = vmatprep.subr.mxu0 0.0
      %1876 = vmatpush1.xpose.msra.mxu0 0.0
      %1877 = vmatprep.subr.mxu0 0.0
      %1878 = vmatpush1.xpose.msra.mxu0 0.0
      %1879 = vmatprep.subr.mxu0 0.0
      %1880 = vmatpush1.xpose.msra.mxu0 0.0
      %1881 = vmatprep.subr.mxu0 0.0
      %1882 = vmatpush1.xpose.msra.mxu0 0.0
      %1883 = vmatprep.subr.mxu0 0.0
      %1884 = vmatpush1.xpose.msra.mxu0 0.0
      %1885 = vmatprep.subr.mxu0 0.0
      %1886 = vmatpush1.xpose.msra.mxu0 0.0
      %1887 = vmatprep.subr.mxu0 0.0
      %1888 = vmatpush1.xpose.msra.mxu0 0.0
      %1889 = vmatprep.subr.mxu0 0.0
      %1890 = vmatpush1.xpose.msra.mxu0 0.0
      %1891 = vmatprep.subr.mxu0 0.0
      %1892 = vmatpush1.xpose.msra.mxu0 0.0
      %1893 = vmatprep.subr.mxu0 0.0
      %1894 = vmatpush1.xpose.msra.mxu0 0.0
      %1895 = vmatprep.subr.mxu0 0.0
      %1896 = vmatpush1.xpose.msra.mxu0 0.0
      %1897 = vmatprep.subr.mxu0 0.0
      %1898 = vmatpush1.xpose.msra.mxu0 0.0
      %1899 = vmatprep.subr.mxu0 0.0
      %1900 = vmatpush1.xpose.msra.mxu0 0.0
      %1901 = vmatprep.subr.mxu0 0.0
      %1902 = vmatpush1.xpose.msra.mxu0 0.0
      %1903 = vmatprep.subr.mxu0 0.0
      %1904 = vmatpush1.xpose.msra.mxu0 0.0
      %1905 = vmatprep.subr.mxu0 0.0
      %1906 = vmatpush1.xpose.msra.mxu0 0.0
      %1907 = vmatprep.subr.mxu0 0.0
      %1908 = vmatpush1.xpose.msra.mxu0 0.0
      %1909 = vmatprep.subr.mxu0 0.0
      %1910 = vmatpush1.xpose.msra.mxu0 0.0
      %1911 = vmatprep.subr.mxu0 0.0
      %1912 = vmatpush1.xpose.msra.mxu0 0.0
      %1913 = vmatprep.subr.mxu0 0.0
      %1914 = vmatpush1.xpose.msra.mxu0 0.0
      %1915 = vmatprep.subr.mxu0 0.0
      %1916 = vmatpush1.xpose.msra.mxu0 0.0
      %1917 = vmatprep.subr.mxu0 0.0
      %1918 = vmatpush1.xpose.msra.mxu0 0.0
      %1919 = vmatprep.subr.mxu0 0.0
      %1920 = vmatpush1.xpose.msra.mxu0 0.0
      %1921 = vmatprep.subr.mxu0 0.0
      %1922 = vmatpush1.xpose.msra.mxu0 0.0
      %1923 = vmatprep.subr.mxu0 0.0
      %1924 = vmatpush1.xpose.msra.mxu0 0.0
      %1925 = vmatprep.subr.mxu0 0.0
      %1926 = vmatpush1.xpose.msra.mxu0 0.0
      %1927 = vmatprep.subr.mxu0 0.0
      %1928 = vmatpush1.xpose.msra.mxu0 0.0
      %1929 = vmatprep.subr.mxu0 0.0
      %1930 = vmatpush1.xpose.msra.mxu0 0.0
      %1931 = vmatprep.subr.mxu0 0.0
      %1932 = vmatpush1.xpose.msra.mxu0 0.0
      %1933 = vmatprep.mubr.f32.mxu0 0.0
      %1934 = vmatmul.mubr.f32.gmra.mrb[0].mxu0 %v1861
      %v1935 = vpop.f32.mrb[0].mxu0
      %v1936 = vadd.f32 %v1841, %v1935
      %v1937 = vpop.f32.mrb[0].mxu0
      %1938 = vmatprep.mubr.f32.mxu0 0.0
      %1939 = vmatmul.mubr.f32.gmra.mrb[0].mxu0 %v1863
      %v1940 = vpop.f32.mrb[0].mxu0
      %v1941 = vadd.f32 %v1846, %v1940
      %v1942 = vpop.f32.mrb[0].mxu0
      %1943 = vdwg.mxu0
      %v1944 = vmul.f32 %v1936, 0.25
      %v1945 = vmul.f32 %v1941, 0.25
      %v1946 = vsel %vm300, %v1944, -inf
      %v1947 = vsel %vm301, %v1945, -inf
      %v1948 = vsel %vm306, %v1946, -inf
      %1949 = vmax.xlane.f32.xlu0 %v1948
      %v1950 = vpop.xlane.xlu0 %1949
      %v1951 = vsel %vm306, %v1947, -inf
      %1952 = vmax.xlane.f32.xlu0 %v1951
      %v1953 = vpop.xlane.xlu0 %1952
      %v1954 = vsub.f32 %v1946, %v1950
      %v1955 = vsub.f32 %v1947, %v1953
      %v1956 = vmul.f32 %v1954, 1.442695
      %v1957 = vpow.pop %v1956
      %v1958 = vmul.f32 %v1955, 1.442695
      %v1959 = vpow.pop %v1958
      %v1960 = vsel %vm306, %v1957, 0.0
      %1961 = vadd.xlane.f32.xlu0 %v1960
      %v1962 = vpop.xlane.xlu0 %1961
      %v1963 = vsel %vm306, %v1959, 0.0
      %1964 = vadd.xlane.f32.xlu0 %v1963
      %v1965 = vpop.xlane.xlu0 %1964
      %1968 = vrot.lane.b32.xlu0 %v1676, 80
      %v1969 = vpop.permute.xlu0 %1968
      %1970 = vrot.lane.b32.xlu0 %v1677, 80
      %v1971 = vpop.permute.xlu0 %1970
      %v1975 = vsel %vm306, %v1957, 0
      %v1978 = vsel %vm306, %v1959, 0
      %1980 = vmatprep.subr.mxu0 0.0
      %1981 = vmatpush1.msra.mxu0 %v1969
      %1982 = vmatprep.subr.mxu0 0.0
      %1983 = vmatpush1.msra.mxu0 %v1971
      %1984 = vmatprep.subr.mxu0 0.0
      %1985 = vmatpush1.msra.mxu0 0.0
      %1986 = vmatprep.subr.mxu0 0.0
      %1987 = vmatpush1.msra.mxu0 0.0
      %1988 = vmatprep.subr.mxu0 0.0
      %1989 = vmatpush1.msra.mxu0 0.0
      %1990 = vmatprep.subr.mxu0 0.0
      %1991 = vmatpush1.msra.mxu0 0.0
      %1992 = vmatprep.subr.mxu0 0.0
      %1993 = vmatpush1.msra.mxu0 0.0
      %1994 = vmatprep.subr.mxu0 0.0
      %1995 = vmatpush1.msra.mxu0 0.0
      %1996 = vmatprep.subr.mxu0 0.0
      %1997 = vmatpush1.msra.mxu0 0.0
      %1998 = vmatprep.subr.mxu0 0.0
      %1999 = vmatpush1.msra.mxu0 0.0
      %2000 = vmatprep.subr.mxu0 0.0
      %2001 = vmatpush1.msra.mxu0 0.0
      %2002 = vmatprep.subr.mxu0 0.0
      %2003 = vmatpush1.msra.mxu0 0.0
      %2004 = vmatprep.subr.mxu0 0.0
      %2005 = vmatpush1.msra.mxu0 0.0
      %2006 = vmatprep.subr.mxu0 0.0
      %2007 = vmatpush1.msra.mxu0 0.0
      %2008 = vmatprep.subr.mxu0 0.0
      %2009 = vmatpush1.msra.mxu0 0.0
      %2010 = vmatprep.subr.mxu0 0.0
      %2011 = vmatpush1.msra.mxu0 0.0
      %2012 = vmatprep.subr.mxu0 0.0
      %2013 = vmatpush1.msra.mxu0 0.0
      %2014 = vmatprep.subr.mxu0 0.0
      %2015 = vmatpush1.msra.mxu0 0.0
      %2016 = vmatprep.subr.mxu0 0.0
      %2017 = vmatpush1.msra.mxu0 0.0
      %2018 = vmatprep.subr.mxu0 0.0
      %2019 = vmatpush1.msra.mxu0 0.0
      %2020 = vmatprep.subr.mxu0 0.0
      %2021 = vmatpush1.msra.mxu0 0.0
      %2022 = vmatprep.subr.mxu0 0.0
      %2023 = vmatpush1.msra.mxu0 0.0
      %2024 = vmatprep.subr.mxu0 0.0
      %2025 = vmatpush1.msra.mxu0 0.0
      %2026 = vmatprep.subr.mxu0 0.0
      %2027 = vmatpush1.msra.mxu0 0.0
      %2028 = vmatprep.subr.mxu0 0.0
      %2029 = vmatpush1.msra.mxu0 0.0
      %2030 = vmatprep.subr.mxu0 0.0
      %2031 = vmatpush1.msra.mxu0 0.0
      %2032 = vmatprep.subr.mxu0 0.0
      %2033 = vmatpush1.msra.mxu0 0.0
      %2034 = vmatprep.subr.mxu0 0.0
      %2035 = vmatpush1.msra.mxu0 0.0
      %2036 = vmatprep.subr.mxu0 0.0
      %2037 = vmatpush1.msra.mxu0 0.0
      %2038 = vmatprep.subr.mxu0 0.0
      %2039 = vmatpush1.msra.mxu0 0.0
      %2040 = vmatprep.subr.mxu0 0.0
      %2041 = vmatpush1.msra.mxu0 0.0
      %2042 = vmatprep.subr.mxu0 0.0
      %2043 = vmatpush1.msra.mxu0 0.0
      %2044 = vmatprep.mubr.f32.mxu0 0.0
      %2045 = vmatmul.mubr.f32.gmra.mrb[0].mxu0 %v1975
      %v2046 = vpop.f32.mrb[0].mxu0
      %v2047 = vadd.f32 0.0, %v2046
      %v2048 = vpop.f32.mrb[0].mxu0
      %2049 = vmatprep.mubr.f32.mxu0 0.0
      %2050 = vmatmul.mubr.f32.gmra.mrb[0].mxu0 %v1978
      %v2051 = vpop.f32.mrb[0].mxu0
      %v2052 = vadd.f32 0.0, %v2051
      %v2053 = vpop.f32.mrb[0].mxu0
      %2054 = vdwg.mxu0
      %v2055 = vrcp.pop %v1962
      %v2056 = vmul.f32 %v2047, %v2055
      %v2057 = vrcp.pop %v1965
      %v2058 = vmul.f32 %v2052, %v2057
      %2061 = vrot.lane.b32.xlu0 %v2056, 48
      %v2062 = vpop.permute.xlu0 %2061
      %2063 = vrot.lane.b32.xlu0 %v2058, 48
      %v2064 = vpop.permute.xlu0 %2063
      %vm2067 = vcmask 523648
      %2068 = vst.msk [vmem:[%s280] sm:$0xff] %vm2067, %v2062
      %2069 = vst.msk [vmem:[%s280 + $0x8] sm:$0xff] %vm2067, %v2064
      %s2070 = smul.u32 2, %s20
      %p2071 = scmp.lt.s32.totalorder %s19, 1
      %s2072 = scalar_select %p2071, %s19, 1
      %p2073 = scmp.lt.s32.totalorder %s2070, 1
      %s2074 = scalar_select %p2073, %s2070, 1
      %s2075 = smul.addr %s2072, 2
      %s2076 = sadd.s32 %s2074, %s2075
      %s2077 = smul.addr %s2076, 8
      %s2078 = scalar_lea.vmem %s4, %s2077
      // Predicated region
      $region37: #{decoder_forward.9} parent=35 // pred_check
        %p2079 = pneg %p148
      $region38: #{decoder_forward.9} parent=35 // pred_check_branch
        %2081 = sbr.rel (%p2079) target = $region40
      $region39: #{decoder_forward.9} parent=35 // pred_region
        %s2082 = smul.u32 2, %s20
      $region40: #{decoder_forward.9} parent=35 // pred_fallthru
        _
    $region36: #{decoder_forward.9} parent=5 // pred_fallthru
      _
    %p2083 = scmp.le.s32.totalorder 2, %s10
    // Predicated region
    $region41: #{decoder_forward.9} parent=5 // pred_check
      %p2084 = pneg %p2083
    $region42: #{decoder_forward.9} parent=5 // pred_check_branch
      %2086 = sbr.rel (%p2084) target = $region44
    $region43: #{decoder_forward.9} parent=5 // pred_region
      %s2087 = ssub.s32 %s10, 2
      // Predicated region
      $region45: #{decoder_forward.9} parent=43 // pred_check
        %p2088 = pneg %p154
      $region46: #{decoder_forward.9} parent=43 // pred_check_branch
        %2090 = sbr.rel (%p2088) target = $region48
      $region47: #{decoder_forward.9} parent=43 // pred_region
        %s2091 = smul.u32 2, %s22
        %p2092 = scmp.lt.s32.totalorder %s21, 1
        %s2093 = scalar_select %p2092, %s21, 1
        %p2094 = scmp.lt.s32.totalorder %s2091, 1
        %s2095 = scalar_select %p2094, %s2091, 1
        %s2096 = smul.addr %s2093, 2
        %s2097 = sadd.s32 %s2095, %s2096
        %s2098 = smul.addr %s2097, 8
        %s2099 = scalar_lea.vmem %s4, %s2098
      $region48: #{decoder_forward.9} parent=43 // pred_fallthru
        _
    $region44: #{decoder_forward.9} parent=5 // pred_fallthru
      _
  $region6: #{decoder_forward.9} parent=0 // loop_footer
    %s14 = sadd.s32 1, %s10
  $region7: #{decoder_forward.9} parent=0 // loop_footer_branch
    %9 = sbr.rel target = $region3
  $region8: #{decoder_forward.9} parent=0 // loop_exit
    _

</llo_original>
